<compile_context>
chip_gen: v5e
topology: v5e:2x2
jax: 0.10.0
libtpu: 0.0.40
codegen_flags: <defaults>
</compile_context>

<pallas_src>
import functools
import math

import jax
import jax.numpy as jnp
from jax.experimental import pallas as pl
from jax.experimental.pallas import tpu as pltpu


# ----------------------------------------------------------------------------
# small helpers
# ----------------------------------------------------------------------------
def _pick_tile(n, cap=512):
    """Largest power-of-two tile (>=8) that divides n, else n itself."""
    t = cap
    while t >= 8:
        if t <= n and n % t == 0:
            return t
        t //= 2
    return n


# ----------------------------------------------------------------------------
# Pallas kernels
# ----------------------------------------------------------------------------
def _mha_block_kernel(xq_ref, xkv_ref, m_ref,
                      wq_ref, bq_ref, wkv_ref, bkv_ref, wo_ref, bo_ref,
                      g_ref, beta_ref, o_ref, *, num_heads, eps):
    """Fused: QKV proj + per-head attention + out proj + residual + LayerNorm."""
    f32, bf16 = jnp.float32, jnp.bfloat16

    xq = xq_ref[0]            # (Sq, D) f32
    xkv = xkv_ref[0]          # (Sk, D) f32
    mask = m_ref[0]           # (Sq, Sk) f32, 1.0 = keep, 0.0 = masked

    D = xq.shape[-1]
    dh = D // num_heads
    scale = 1.0 / math.sqrt(dh)

    # projections: bf16 operands, f32 accumulation (MXU fast path)
    q = jnp.dot(xq.astype(bf16), wq_ref[...].astype(bf16),
                preferred_element_type=f32) + bq_ref[...]
    kv = jnp.dot(xkv.astype(bf16), wkv_ref[...].astype(bf16),
                 preferred_element_type=f32) + bkv_ref[...]
    k = kv[:, :D]
    v = kv[:, D:]

    wo = wo_ref[...]          # (D, D), loaded once
    neg = jnp.float32(-1e9)

    # per-head attention (static unroll; output projection accumulated so the
    # head merge needs no concat/transpose)
    out = jnp.zeros(xq.shape, f32)
    for h in range(num_heads):
        sl = slice(h * dh, (h + 1) * dh)
        qh = q[:, sl]
        kh = k[:, sl]
        vh = v[:, sl]

        s = jnp.dot(qh.astype(bf16), kh.T.astype(bf16),
                    preferred_element_type=f32) * scale          # (Sq, Sk) f32
        s = jnp.where(mask > 0, s, neg)                          # masked_fill
        s = s - jnp.max(s, axis=-1, keepdims=True)
        p = jnp.exp(s)
        p = p * pl.reciprocal(jnp.sum(p, axis=-1, keepdims=True), approx=True)

        ctx = jnp.dot(p.astype(bf16), vh.astype(bf16),
                      preferred_element_type=f32)                # (Sq, dh)
        out = out + jnp.dot(ctx.astype(bf16), wo[sl, :].astype(bf16),
                            preferred_element_type=f32)
    out = out + bo_ref[...]

    # residual + LayerNorm (f32 statistics)
    x = out + xq
    mean = jnp.mean(x, axis=-1, keepdims=True)
    var = jnp.mean((x - mean) ** 2, axis=-1, keepdims=True)
    y = (x - mean) * jax.lax.rsqrt(var + eps)
    o_ref[0] = (y * g_ref[...] + beta_ref[...]).astype(o_ref.dtype)


def mha_block(x_q, x_kv, mask_b, attn, ln_g, ln_b, num_heads, eps=1e-5):
    """x_q: (B, Sq, D), x_kv: (B, Sk, D), mask_b: (B, Sq, Sk) f32."""
    B, Sq, D = x_q.shape
    Sk = x_kv.shape[1]
    kernel = functools.partial(_mha_block_kernel, num_heads=num_heads, eps=eps)
    return pl.pallas_call(
        kernel,
        out_shape=jax.ShapeDtypeStruct((B, Sq, D), jnp.float32),
        grid=(B,),
        in_specs=[
            pl.BlockSpec((1, Sq, D), lambda b: (b, 0, 0)),
            pl.BlockSpec((1, Sk, D), lambda b: (b, 0, 0)),
            pl.BlockSpec((1, Sq, Sk), lambda b: (b, 0, 0)),
            pl.BlockSpec((D, D), lambda b: (0, 0)),
            pl.BlockSpec((1, D), lambda b: (0, 0)),
            pl.BlockSpec((D, 2 * D), lambda b: (0, 0)),
            pl.BlockSpec((1, 2 * D), lambda b: (0, 0)),
            pl.BlockSpec((D, D), lambda b: (0, 0)),
            pl.BlockSpec((1, D), lambda b: (0, 0)),
            pl.BlockSpec((1, D), lambda b: (0, 0)),
            pl.BlockSpec((1, D), lambda b: (0, 0)),
        ],
        out_specs=pl.BlockSpec((1, Sq, D), lambda b: (b, 0, 0)),
        compiler_params=pltpu.CompilerParams(dimension_semantics=("parallel",)),
    )(x_q, x_kv, mask_b,
      attn["wq"], attn["bq"].reshape(1, D),
      attn["wkv"], attn["bkv"].reshape(1, 2 * D),
      attn["wo"], attn["bo"].reshape(1, D),
      ln_g.reshape(1, D), ln_b.reshape(1, D))


def _ffn_block_kernel(x_ref, w1_ref, b1_ref, w2_ref, b2_ref, g_ref, beta_ref,
                      o_ref, *, eps):
    """Fused: x@W1+b1 -> ReLU -> @W2+b2 -> residual -> LayerNorm."""
    f32, bf16 = jnp.float32, jnp.bfloat16
    x = x_ref[...]                                               # (tm, D) f32
    h = jnp.dot(x.astype(bf16), w1_ref[...].astype(bf16),
                preferred_element_type=f32) + b1_ref[...]
    h = jnp.maximum(h, 0.0)
    y = jnp.dot(h.astype(bf16), w2_ref[...].astype(bf16),
                preferred_element_type=f32) + b2_ref[...]
    z = y + x
    mean = jnp.mean(z, axis=-1, keepdims=True)
    var = jnp.mean((z - mean) ** 2, axis=-1, keepdims=True)
    out = (z - mean) * jax.lax.rsqrt(var + eps)
    o_ref[...] = (out * g_ref[...] + beta_ref[...]).astype(o_ref.dtype)


def ffn_block(x2d, w1, b1, w2, b2, ln_g, ln_b, eps=1e-5):
    M, D = x2d.shape
    F = w1.shape[1]
    tm = _pick_tile(M)
    kernel = functools.partial(_ffn_block_kernel, eps=eps)
    return pl.pallas_call(
        kernel,
        out_shape=jax.ShapeDtypeStruct((M, D), jnp.float32),
        grid=(M // tm,),
        in_specs=[
            pl.BlockSpec((tm, D), lambda i: (i, 0)),
            pl.BlockSpec((D, F), lambda i: (0, 0)),     # weight stays resident
            pl.BlockSpec((1, F), lambda i: (0, 0)),
            pl.BlockSpec((F, D), lambda i: (0, 0)),
            pl.BlockSpec((1, D), lambda i: (0, 0)),
            pl.BlockSpec((1, D), lambda i: (0, 0)),
            pl.BlockSpec((1, D), lambda i: (0, 0)),
        ],
        out_specs=pl.BlockSpec((tm, D), lambda i: (i, 0)),
        compiler_params=pltpu.CompilerParams(dimension_semantics=("parallel",)),
    )(x2d, w1, b1.reshape(1, F), w2, b2.reshape(1, D),
      ln_g.reshape(1, D), ln_b.reshape(1, D))


def _linear_kernel(x_ref, w_ref, b_ref, o_ref):
    acc = jnp.dot(x_ref[...].astype(jnp.bfloat16),
                  w_ref[...].astype(jnp.bfloat16),
                  preferred_element_type=jnp.float32)
    o_ref[...] = (acc + b_ref[...]).astype(o_ref.dtype)


def linear(x2d, w, b):
    """Tiled y = x @ W + b over (M, N)."""
    M, K = x2d.shape
    N = w.shape[1]
    tm = _pick_tile(M)
    tn = _pick_tile(N)
    return pl.pallas_call(
        _linear_kernel,
        out_shape=jax.ShapeDtypeStruct((M, N), jnp.float32),
        grid=(M // tm, N // tn),
        in_specs=[
            pl.BlockSpec((tm, K), lambda i, j: (i, 0)),
            pl.BlockSpec((K, tn), lambda i, j: (0, j)),
            pl.BlockSpec((1, tn), lambda i, j: (0, j)),
        ],
        out_specs=pl.BlockSpec((tm, tn), lambda i, j: (i, j)),
        compiler_params=pltpu.CompilerParams(
            dimension_semantics=("parallel", "parallel")),
    )(x2d, w, b.reshape(1, N))


# ----------------------------------------------------------------------------
# Model glue
# ----------------------------------------------------------------------------
def positional_encoding(max_len, d):
    pos = jnp.arange(max_len, dtype=jnp.float32)[:, None]
    div = jnp.exp(jnp.arange(0, d, 2, dtype=jnp.float32) * (-math.log(10000.0) / d))
    pe = jnp.zeros((max_len, d), jnp.float32)
    pe = pe.at[:, 0::2].set(jnp.sin(pos * div))
    pe = pe.at[:, 1::2].set(jnp.cos(pos * div))
    return pe


def build_masks(src, trgt):
    """Per-batch masks only (no per-head replication); matches the reference,
    including its quirk of building the target mask from `src` validity."""
    B, Ss = src.shape
    St = trgt.shape[1]
    src_valid = (src != 0).astype(jnp.float32)                      # (B, Ss)
    enc_self = jnp.broadcast_to(src_valid[:, None, :], (B, Ss, Ss))
    cross = jnp.broadcast_to(src_valid[:, None, :], (B, St, Ss))
    causal = 1.0 - jnp.triu(jnp.ones((St, St), jnp.float32), k=1)   # (St, St)
    dec_self = src_valid[:, :, None] * causal[None]                 # (B, St, St)
    return enc_self, dec_self, cross


def transformer_forward(params, cfg, src, trgt):
    B, Ss = src.shape
    St = trgt.shape[1]
    H = cfg["num_heads"]
    D = cfg["d"]

    enc_self_mask, dec_self_mask, cross_mask = build_masks(src, trgt)

    # TODO(synk): dropout layers are identity here (inference / eval mode).
    x = params["enc_emb"][src] + params["pe"][:Ss]
    y = params["dec_emb"][trgt] + params["pe"][:St]

    for layer in params["encoders"]:
        x = mha_block(x, x, enc_self_mask, layer["attn"],
                      layer["ln1_g"], layer["ln1_b"], H)
        x = ffn_block(x.reshape(B * Ss, D),
                      layer["ff_w1"], layer["ff_b1"],
                      layer["ff_w2"], layer["ff_b2"],
                      layer["ln2_g"], layer["ln2_b"]).reshape(B, Ss, D)
    enc_out = x

    for layer in params["decoders"]:
        y = mha_block(y, y, dec_self_mask, layer["self_attn"],
                      layer["ln1_g"], layer["ln1_b"], H)
        y = mha_block(y, enc_out, cross_mask, layer["cross_attn"],
                      layer["ln2_g"], layer["ln2_b"], H)
        y = ffn_block(y.reshape(B * St, D),
                      layer["ff_w1"], layer["ff_b1"],
                      layer["ff_w2"], layer["ff_b2"],
                      layer["ln3_g"], layer["ln3_b"]).reshape(B, St, D)

    logits = linear(y.reshape(B * St, D), params["fc_w"], params["fc_b"])
    return logits.reshape(B, St, -1)


# ----------------------------------------------------------------------------
# Deterministic parameter init
# ----------------------------------------------------------------------------
def init_linear_params(key, d_in, d_out, scale=0.02):
    w = jax.random.normal(key, (d_in, d_out), jnp.float32) * scale
    b = jnp.zeros((d_out,), jnp.float32)
    return w, b


def init_mha(key, d):
    ks = jax.random.split(key, 4)
    wq, bq = init_linear_params(ks[0], d, d)
    wk, bk = init_linear_params(ks[1], d, d)
    wv, bv = init_linear_params(ks[2], d, d)
    wo, bo = init_linear_params(ks[3], d, d)
    # fuse K and V projections into one [D, 2D] matmul
    return dict(wq=wq, bq=bq,
                wkv=jnp.concatenate([wk, wv], axis=1),
                bkv=jnp.concatenate([bk, bv], axis=0),
                wo=wo, bo=bo)


def init_encoder_block(key, d, d_ff):
    ks = jax.random.split(key, 3)
    w1, b1 = init_linear_params(ks[1], d, d_ff)
    w2, b2 = init_linear_params(ks[2], d_ff, d)
    return dict(
        attn=init_mha(ks[0], d),
        ff_w1=w1, ff_b1=b1, ff_w2=w2, ff_b2=b2,
        ln1_g=jnp.ones((d,), jnp.float32), ln1_b=jnp.zeros((d,), jnp.float32),
        ln2_g=jnp.ones((d,), jnp.float32), ln2_b=jnp.zeros((d,), jnp.float32),
    )


def init_decoder_block(key, d, d_ff):
    ks = jax.random.split(key, 4)
    w1, b1 = init_linear_params(ks[2], d, d_ff)
    w2, b2 = init_linear_params(ks[3], d_ff, d)
    return dict(
        self_attn=init_mha(ks[0], d),
        cross_attn=init_mha(ks[1], d),
        ff_w1=w1, ff_b1=b1, ff_w2=w2, ff_b2=b2,
        ln1_g=jnp.ones((d,), jnp.float32), ln1_b=jnp.zeros((d,), jnp.float32),
        ln2_g=jnp.ones((d,), jnp.float32), ln2_b=jnp.zeros((d,), jnp.float32),
        ln3_g=jnp.ones((d,), jnp.float32), ln3_b=jnp.zeros((d,), jnp.float32),
    )


def init_transformer(key, d, d_ff, num_heads, src_vocab, tgt_vocab, max_seq, n_layers):
    ks = jax.random.split(key, 3 + 2 * n_layers)
    params = dict(
        enc_emb=jax.random.normal(ks[0], (src_vocab, d), jnp.float32) * 0.02,
        dec_emb=jax.random.normal(ks[1], (tgt_vocab, d), jnp.float32) * 0.02,
        pe=positional_encoding(max_seq, d),
        encoders=[init_encoder_block(ks[3 + i], d, d_ff) for i in range(n_layers)],
        decoders=[init_decoder_block(ks[3 + n_layers + i], d, d_ff)
                  for i in range(n_layers)],
    )
    fc_w, fc_b = init_linear_params(ks[2], d, tgt_vocab)
    params["fc_w"], params["fc_b"] = fc_w, fc_b
    return params


# ----------------------------------------------------------------------------
if __name__ == "__main__":
    cfg = dict(d=32, d_ff=64, num_heads=4, src_vocab=120, tgt_vocab=128,
               max_seq=16, n_layers=2)
    B, S = 2, 8   # src and trgt share seq length (required by generate_mask)

    key = jax.random.PRNGKey(0)
    k_param, k_src, k_trgt = jax.random.split(key, 3)

    params = init_transformer(
        k_param, cfg["d"], cfg["d_ff"], cfg["num_heads"],
        cfg["src_vocab"], cfg["tgt_vocab"], cfg["max_seq"], cfg["n_layers"])

    src = jax.random.randint(k_src, (B, S), 1, cfg["src_vocab"], dtype=jnp.int32)
    trgt = jax.random.randint(k_trgt, (B, S), 1, cfg["tgt_vocab"], dtype=jnp.int32)
    # add a bit of padding to exercise the masks
    src = src.at[1, -2:].set(0)

    fwd = jax.jit(lambda p, s, t: transformer_forward(p, cfg, s, t))
    out = fwd(params, src, trgt)
    out = jax.block_until_ready(out)

    assert out.shape == (B, S, cfg["tgt_vocab"]), out.shape
    assert bool(jnp.all(jnp.isfinite(out)))
    print("KERNEL_OK")
</pallas_src>

<mosaic_0001>
module attributes {stable_mosaic.version = 11 : i64} {
  func.func @_mha_block_kernel(%arg0: i32, %arg1: memref<1x8x32xf32, #tpu.memory_space<vmem>>, %arg2: memref<1x8x32xf32, #tpu.memory_space<vmem>>, %arg3: memref<1x8x8xf32, #tpu.memory_space<vmem>>, %arg4: memref<32x32xf32, #tpu.memory_space<vmem>>, %arg5: memref<1x32xf32, #tpu.memory_space<vmem>>, %arg6: memref<32x64xf32, #tpu.memory_space<vmem>>, %arg7: memref<1x64xf32, #tpu.memory_space<vmem>>, %arg8: memref<32x32xf32, #tpu.memory_space<vmem>>, %arg9: memref<1x32xf32, #tpu.memory_space<vmem>>, %arg10: memref<1x32xf32, #tpu.memory_space<vmem>>, %arg11: memref<1x32xf32, #tpu.memory_space<vmem>>, %arg12: memref<1x8x32xf32, #tpu.memory_space<vmem>>) attributes {dimension_semantics = [#tpu.dimension_semantics<parallel>], iteration_bounds = array<i64: 2>, scalar_prefetch = 0 : i64, scratch_operands = 0 : i64, tpu.core_type = #tpu.core_type<tc>, window_params = [{transform_indices = @transform_0, window_bounds = array<i64: 1, 8, 32>}, {transform_indices = @transform_1, window_bounds = array<i64: 1, 8, 32>}, {transform_indices = @transform_2, window_bounds = array<i64: 1, 8, 8>}, {pipeline_mode = #tpu.pipeline_mode<synchronous>, transform_indices = @transform_3, window_bounds = array<i64: 32, 32>}, {pipeline_mode = #tpu.pipeline_mode<synchronous>, transform_indices = @transform_4, window_bounds = array<i64: 1, 32>}, {pipeline_mode = #tpu.pipeline_mode<synchronous>, transform_indices = @transform_5, window_bounds = array<i64: 32, 64>}, {pipeline_mode = #tpu.pipeline_mode<synchronous>, transform_indices = @transform_6, window_bounds = array<i64: 1, 64>}, {pipeline_mode = #tpu.pipeline_mode<synchronous>, transform_indices = @transform_7, window_bounds = array<i64: 32, 32>}, {pipeline_mode = #tpu.pipeline_mode<synchronous>, transform_indices = @transform_8, window_bounds = array<i64: 1, 32>}, {pipeline_mode = #tpu.pipeline_mode<synchronous>, transform_indices = @transform_9, window_bounds = array<i64: 1, 32>}, {pipeline_mode = #tpu.pipeline_mode<synchronous>, transform_indices = @transform_10, window_bounds = array<i64: 1, 32>}, {transform_indices = @transform_11, window_bounds = array<i64: 1, 8, 32>}]} {
    %c0 = arith.constant 0 : index
    %c0_0 = arith.constant 0 : index
    %c0_1 = arith.constant 0 : index
    %0 = vector.load %arg1[%c0, %c0_0, %c0_1] : memref<1x8x32xf32, #tpu.memory_space<vmem>>, vector<1x8x32xf32>
    %1 = vector.shape_cast %0 : vector<1x8x32xf32> to vector<8x32xf32>
    %c0_2 = arith.constant 0 : index
    %c0_3 = arith.constant 0 : index
    %c0_4 = arith.constant 0 : index
    %2 = vector.load %arg2[%c0_2, %c0_3, %c0_4] : memref<1x8x32xf32, #tpu.memory_space<vmem>>, vector<1x8x32xf32>
    %3 = vector.shape_cast %2 : vector<1x8x32xf32> to vector<8x32xf32>
    %c0_5 = arith.constant 0 : index
    %c0_6 = arith.constant 0 : index
    %c0_7 = arith.constant 0 : index
    %4 = vector.load %arg3[%c0_5, %c0_6, %c0_7] : memref<1x8x8xf32, #tpu.memory_space<vmem>>, vector<1x8x8xf32>
    %5 = vector.shape_cast %4 : vector<1x8x8xf32> to vector<8x8xf32>
    %6 = arith.truncf %1 : vector<8x32xf32> to vector<8x32xbf16>
    %c0_8 = arith.constant 0 : index
    %c0_9 = arith.constant 0 : index
    %7 = vector.load %arg4[%c0_8, %c0_9] : memref<32x32xf32, #tpu.memory_space<vmem>>, vector<32x32xf32>
    %8 = arith.truncf %7 : vector<32x32xf32> to vector<32x32xbf16>
    %cst = arith.constant dense<0.000000e+00> : vector<8x32xf32>
    %9 = tpu.matmul %6, %8, %cst {dimension_numbers = #tpu.dot_dimension_numbers<[1], [0], [0], [1], [0, 0, 1, 1], [], []>} : vector<8x32xbf16>, vector<32x32xbf16>, vector<8x32xf32> -> vector<8x32xf32>
    %c0_10 = arith.constant 0 : index
    %c0_11 = arith.constant 0 : index
    %10 = vector.load %arg5[%c0_10, %c0_11] : memref<1x32xf32, #tpu.memory_space<vmem>>, vector<1x32xf32>
    %11 = vector.broadcast %10 : vector<1x32xf32> to vector<8x32xf32>
    %12 = arith.addf %9, %11 : vector<8x32xf32>
    %13 = arith.truncf %3 : vector<8x32xf32> to vector<8x32xbf16>
    %c0_12 = arith.constant 0 : index
    %c0_13 = arith.constant 0 : index
    %14 = vector.load %arg6[%c0_12, %c0_13] : memref<32x64xf32, #tpu.memory_space<vmem>>, vector<32x64xf32>
    %15 = arith.truncf %14 : vector<32x64xf32> to vector<32x64xbf16>
    %cst_14 = arith.constant dense<0.000000e+00> : vector<8x64xf32>
    %16 = tpu.matmul %13, %15, %cst_14 {dimension_numbers = #tpu.dot_dimension_numbers<[1], [0], [0], [1], [0, 0, 1, 1], [], []>} : vector<8x32xbf16>, vector<32x64xbf16>, vector<8x64xf32> -> vector<8x64xf32>
    %c0_15 = arith.constant 0 : index
    %c0_16 = arith.constant 0 : index
    %17 = vector.load %arg7[%c0_15, %c0_16] : memref<1x64xf32, #tpu.memory_space<vmem>>, vector<1x64xf32>
    %18 = vector.broadcast %17 : vector<1x64xf32> to vector<8x64xf32>
    %19 = arith.addf %16, %18 : vector<8x64xf32>
    %20 = vector.extract_strided_slice %19 {offsets = [0, 0], sizes = [8, 32], strides = [1, 1]} : vector<8x64xf32> to vector<8x32xf32>
    %21 = vector.extract_strided_slice %19 {offsets = [0, 32], sizes = [8, 32], strides = [1, 1]} : vector<8x64xf32> to vector<8x32xf32>
    %c0_17 = arith.constant 0 : index
    %c0_18 = arith.constant 0 : index
    %22 = vector.load %arg8[%c0_17, %c0_18] : memref<32x32xf32, #tpu.memory_space<vmem>>, vector<32x32xf32>
    %cst_19 = arith.constant 0.000000e+00 : f32
    %23 = vector.broadcast %cst_19 : f32 to vector<8x32xf32>
    %24 = vector.extract_strided_slice %12 {offsets = [0, 0], sizes = [8, 8], strides = [1, 1]} : vector<8x32xf32> to vector<8x8xf32>
    %25 = vector.extract_strided_slice %20 {offsets = [0, 0], sizes = [8, 8], strides = [1, 1]} : vector<8x32xf32> to vector<8x8xf32>
    %26 = vector.extract_strided_slice %21 {offsets = [0, 0], sizes = [8, 8], strides = [1, 1]} : vector<8x32xf32> to vector<8x8xf32>
    %27 = arith.truncf %24 : vector<8x8xf32> to vector<8x8xbf16>
    %28 = tpu.transpose %25, [1, 0] : vector<8x8xf32> -> vector<8x8xf32>
    %29 = arith.truncf %28 : vector<8x8xf32> to vector<8x8xbf16>
    %cst_20 = arith.constant dense<0.000000e+00> : vector<8x8xf32>
    %30 = tpu.matmul %27, %29, %cst_20 {dimension_numbers = #tpu.dot_dimension_numbers<[1], [0], [0], [1], [0, 0, 1, 1], [], []>} : vector<8x8xbf16>, vector<8x8xbf16>, vector<8x8xf32> -> vector<8x8xf32>
    %cst_21 = arith.constant 0.353553385 : f32
    %31 = vector.broadcast %cst_21 : f32 to vector<8x8xf32>
    %32 = arith.mulf %30, %31 : vector<8x8xf32>
    %cst_22 = arith.constant 0.000000e+00 : f32
    %33 = vector.broadcast %cst_22 : f32 to vector<8x8xf32>
    %34 = arith.cmpf ogt, %5, %33 : vector<8x8xf32>
    %cst_23 = arith.constant -1.000000e+09 : f32
    %35 = vector.broadcast %cst_23 : f32 to vector<8x8xf32>
    %36 = arith.select %34, %32, %35 : vector<8x8xi1>, vector<8x8xf32>
    %cst_24 = arith.constant dense<0xFF800000> : vector<8xf32>
    %37 = vector.multi_reduction <maximumf>, %36, %cst_24 [1] : vector<8x8xf32> to vector<8xf32>
    %38 = vector.shape_cast %37 : vector<8xf32> to vector<8x1xf32>
    %39 = vector.broadcast %38 : vector<8x1xf32> to vector<8x8xf32>
    %40 = arith.subf %36, %39 : vector<8x8xf32>
    %41 = math.exp %40 : vector<8x8xf32>
    %cst_25 = arith.constant dense<0.000000e+00> : vector<8xf32>
    %42 = vector.multi_reduction <add>, %41, %cst_25 [1] : vector<8x8xf32> to vector<8xf32>
    %43 = vector.shape_cast %42 : vector<8xf32> to vector<8x1xf32>
    %44 = tpu.reciprocal %43 {approx = true} : vector<8x1xf32> -> vector<8x1xf32>
    %45 = vector.broadcast %44 : vector<8x1xf32> to vector<8x8xf32>
    %46 = arith.mulf %41, %45 : vector<8x8xf32>
    %47 = arith.truncf %46 : vector<8x8xf32> to vector<8x8xbf16>
    %48 = arith.truncf %26 : vector<8x8xf32> to vector<8x8xbf16>
    %cst_26 = arith.constant dense<0.000000e+00> : vector<8x8xf32>
    %49 = tpu.matmul %47, %48, %cst_26 {dimension_numbers = #tpu.dot_dimension_numbers<[1], [0], [0], [1], [0, 0, 1, 1], [], []>} : vector<8x8xbf16>, vector<8x8xbf16>, vector<8x8xf32> -> vector<8x8xf32>
    %50 = arith.truncf %49 : vector<8x8xf32> to vector<8x8xbf16>
    %51 = vector.extract_strided_slice %22 {offsets = [0, 0], sizes = [8, 32], strides = [1, 1]} : vector<32x32xf32> to vector<8x32xf32>
    %52 = arith.truncf %51 : vector<8x32xf32> to vector<8x32xbf16>
    %cst_27 = arith.constant dense<0.000000e+00> : vector<8x32xf32>
    %53 = tpu.matmul %50, %52, %cst_27 {dimension_numbers = #tpu.dot_dimension_numbers<[1], [0], [0], [1], [0, 0, 1, 1], [], []>} : vector<8x8xbf16>, vector<8x32xbf16>, vector<8x32xf32> -> vector<8x32xf32>
    %54 = arith.addf %23, %53 : vector<8x32xf32>
    %55 = vector.extract_strided_slice %12 {offsets = [0, 8], sizes = [8, 8], strides = [1, 1]} : vector<8x32xf32> to vector<8x8xf32>
    %56 = vector.extract_strided_slice %20 {offsets = [0, 8], sizes = [8, 8], strides = [1, 1]} : vector<8x32xf32> to vector<8x8xf32>
    %57 = vector.extract_strided_slice %21 {offsets = [0, 8], sizes = [8, 8], strides = [1, 1]} : vector<8x32xf32> to vector<8x8xf32>
    %58 = arith.truncf %55 : vector<8x8xf32> to vector<8x8xbf16>
    %59 = tpu.transpose %56, [1, 0] : vector<8x8xf32> -> vector<8x8xf32>
    %60 = arith.truncf %59 : vector<8x8xf32> to vector<8x8xbf16>
    %cst_28 = arith.constant dense<0.000000e+00> : vector<8x8xf32>
    %61 = tpu.matmul %58, %60, %cst_28 {dimension_numbers = #tpu.dot_dimension_numbers<[1], [0], [0], [1], [0, 0, 1, 1], [], []>} : vector<8x8xbf16>, vector<8x8xbf16>, vector<8x8xf32> -> vector<8x8xf32>
    %cst_29 = arith.constant 0.353553385 : f32
    %62 = vector.broadcast %cst_29 : f32 to vector<8x8xf32>
    %63 = arith.mulf %61, %62 : vector<8x8xf32>
    %cst_30 = arith.constant 0.000000e+00 : f32
    %64 = vector.broadcast %cst_30 : f32 to vector<8x8xf32>
    %65 = arith.cmpf ogt, %5, %64 : vector<8x8xf32>
    %cst_31 = arith.constant -1.000000e+09 : f32
    %66 = vector.broadcast %cst_31 : f32 to vector<8x8xf32>
    %67 = arith.select %65, %63, %66 : vector<8x8xi1>, vector<8x8xf32>
    %cst_32 = arith.constant dense<0xFF800000> : vector<8xf32>
    %68 = vector.multi_reduction <maximumf>, %67, %cst_32 [1] : vector<8x8xf32> to vector<8xf32>
    %69 = vector.shape_cast %68 : vector<8xf32> to vector<8x1xf32>
    %70 = vector.broadcast %69 : vector<8x1xf32> to vector<8x8xf32>
    %71 = arith.subf %67, %70 : vector<8x8xf32>
    %72 = math.exp %71 : vector<8x8xf32>
    %cst_33 = arith.constant dense<0.000000e+00> : vector<8xf32>
    %73 = vector.multi_reduction <add>, %72, %cst_33 [1] : vector<8x8xf32> to vector<8xf32>
    %74 = vector.shape_cast %73 : vector<8xf32> to vector<8x1xf32>
    %75 = tpu.reciprocal %74 {approx = true} : vector<8x1xf32> -> vector<8x1xf32>
    %76 = vector.broadcast %75 : vector<8x1xf32> to vector<8x8xf32>
    %77 = arith.mulf %72, %76 : vector<8x8xf32>
    %78 = arith.truncf %77 : vector<8x8xf32> to vector<8x8xbf16>
    %79 = arith.truncf %57 : vector<8x8xf32> to vector<8x8xbf16>
    %cst_34 = arith.constant dense<0.000000e+00> : vector<8x8xf32>
    %80 = tpu.matmul %78, %79, %cst_34 {dimension_numbers = #tpu.dot_dimension_numbers<[1], [0], [0], [1], [0, 0, 1, 1], [], []>} : vector<8x8xbf16>, vector<8x8xbf16>, vector<8x8xf32> -> vector<8x8xf32>
    %81 = arith.truncf %80 : vector<8x8xf32> to vector<8x8xbf16>
    %82 = vector.extract_strided_slice %22 {offsets = [8, 0], sizes = [8, 32], strides = [1, 1]} : vector<32x32xf32> to vector<8x32xf32>
    %83 = arith.truncf %82 : vector<8x32xf32> to vector<8x32xbf16>
    %cst_35 = arith.constant dense<0.000000e+00> : vector<8x32xf32>
    %84 = tpu.matmul %81, %83, %cst_35 {dimension_numbers = #tpu.dot_dimension_numbers<[1], [0], [0], [1], [0, 0, 1, 1], [], []>} : vector<8x8xbf16>, vector<8x32xbf16>, vector<8x32xf32> -> vector<8x32xf32>
    %85 = arith.addf %54, %84 : vector<8x32xf32>
    %86 = vector.extract_strided_slice %12 {offsets = [0, 16], sizes = [8, 8], strides = [1, 1]} : vector<8x32xf32> to vector<8x8xf32>
    %87 = vector.extract_strided_slice %20 {offsets = [0, 16], sizes = [8, 8], strides = [1, 1]} : vector<8x32xf32> to vector<8x8xf32>
    %88 = vector.extract_strided_slice %21 {offsets = [0, 16], sizes = [8, 8], strides = [1, 1]} : vector<8x32xf32> to vector<8x8xf32>
    %89 = arith.truncf %86 : vector<8x8xf32> to vector<8x8xbf16>
    %90 = tpu.transpose %87, [1, 0] : vector<8x8xf32> -> vector<8x8xf32>
    %91 = arith.truncf %90 : vector<8x8xf32> to vector<8x8xbf16>
    %cst_36 = arith.constant dense<0.000000e+00> : vector<8x8xf32>
    %92 = tpu.matmul %89, %91, %cst_36 {dimension_numbers = #tpu.dot_dimension_numbers<[1], [0], [0], [1], [0, 0, 1, 1], [], []>} : vector<8x8xbf16>, vector<8x8xbf16>, vector<8x8xf32> -> vector<8x8xf32>
    %cst_37 = arith.constant 0.353553385 : f32
    %93 = vector.broadcast %cst_37 : f32 to vector<8x8xf32>
    %94 = arith.mulf %92, %93 : vector<8x8xf32>
    %cst_38 = arith.constant 0.000000e+00 : f32
    %95 = vector.broadcast %cst_38 : f32 to vector<8x8xf32>
    %96 = arith.cmpf ogt, %5, %95 : vector<8x8xf32>
    %cst_39 = arith.constant -1.000000e+09 : f32
    %97 = vector.broadcast %cst_39 : f32 to vector<8x8xf32>
    %98 = arith.select %96, %94, %97 : vector<8x8xi1>, vector<8x8xf32>
    %cst_40 = arith.constant dense<0xFF800000> : vector<8xf32>
    %99 = vector.multi_reduction <maximumf>, %98, %cst_40 [1] : vector<8x8xf32> to vector<8xf32>
    %100 = vector.shape_cast %99 : vector<8xf32> to vector<8x1xf32>
    %101 = vector.broadcast %100 : vector<8x1xf32> to vector<8x8xf32>
    %102 = arith.subf %98, %101 : vector<8x8xf32>
    %103 = math.exp %102 : vector<8x8xf32>
    %cst_41 = arith.constant dense<0.000000e+00> : vector<8xf32>
    %104 = vector.multi_reduction <add>, %103, %cst_41 [1] : vector<8x8xf32> to vector<8xf32>
    %105 = vector.shape_cast %104 : vector<8xf32> to vector<8x1xf32>
    %106 = tpu.reciprocal %105 {approx = true} : vector<8x1xf32> -> vector<8x1xf32>
    %107 = vector.broadcast %106 : vector<8x1xf32> to vector<8x8xf32>
    %108 = arith.mulf %103, %107 : vector<8x8xf32>
    %109 = arith.truncf %108 : vector<8x8xf32> to vector<8x8xbf16>
    %110 = arith.truncf %88 : vector<8x8xf32> to vector<8x8xbf16>
    %cst_42 = arith.constant dense<0.000000e+00> : vector<8x8xf32>
    %111 = tpu.matmul %109, %110, %cst_42 {dimension_numbers = #tpu.dot_dimension_numbers<[1], [0], [0], [1], [0, 0, 1, 1], [], []>} : vector<8x8xbf16>, vector<8x8xbf16>, vector<8x8xf32> -> vector<8x8xf32>
    %112 = arith.truncf %111 : vector<8x8xf32> to vector<8x8xbf16>
    %113 = vector.extract_strided_slice %22 {offsets = [16, 0], sizes = [8, 32], strides = [1, 1]} : vector<32x32xf32> to vector<8x32xf32>
    %114 = arith.truncf %113 : vector<8x32xf32> to vector<8x32xbf16>
    %cst_43 = arith.constant dense<0.000000e+00> : vector<8x32xf32>
    %115 = tpu.matmul %112, %114, %cst_43 {dimension_numbers = #tpu.dot_dimension_numbers<[1], [0], [0], [1], [0, 0, 1, 1], [], []>} : vector<8x8xbf16>, vector<8x32xbf16>, vector<8x32xf32> -> vector<8x32xf32>
    %116 = arith.addf %85, %115 : vector<8x32xf32>
    %117 = vector.extract_strided_slice %12 {offsets = [0, 24], sizes = [8, 8], strides = [1, 1]} : vector<8x32xf32> to vector<8x8xf32>
    %118 = vector.extract_strided_slice %20 {offsets = [0, 24], sizes = [8, 8], strides = [1, 1]} : vector<8x32xf32> to vector<8x8xf32>
    %119 = vector.extract_strided_slice %21 {offsets = [0, 24], sizes = [8, 8], strides = [1, 1]} : vector<8x32xf32> to vector<8x8xf32>
    %120 = arith.truncf %117 : vector<8x8xf32> to vector<8x8xbf16>
    %121 = tpu.transpose %118, [1, 0] : vector<8x8xf32> -> vector<8x8xf32>
    %122 = arith.truncf %121 : vector<8x8xf32> to vector<8x8xbf16>
    %cst_44 = arith.constant dense<0.000000e+00> : vector<8x8xf32>
    %123 = tpu.matmul %120, %122, %cst_44 {dimension_numbers = #tpu.dot_dimension_numbers<[1], [0], [0], [1], [0, 0, 1, 1], [], []>} : vector<8x8xbf16>, vector<8x8xbf16>, vector<8x8xf32> -> vector<8x8xf32>
    %cst_45 = arith.constant 0.353553385 : f32
    %124 = vector.broadcast %cst_45 : f32 to vector<8x8xf32>
    %125 = arith.mulf %123, %124 : vector<8x8xf32>
    %cst_46 = arith.constant 0.000000e+00 : f32
    %126 = vector.broadcast %cst_46 : f32 to vector<8x8xf32>
    %127 = arith.cmpf ogt, %5, %126 : vector<8x8xf32>
    %cst_47 = arith.constant -1.000000e+09 : f32
    %128 = vector.broadcast %cst_47 : f32 to vector<8x8xf32>
    %129 = arith.select %127, %125, %128 : vector<8x8xi1>, vector<8x8xf32>
    %cst_48 = arith.constant dense<0xFF800000> : vector<8xf32>
    %130 = vector.multi_reduction <maximumf>, %129, %cst_48 [1] : vector<8x8xf32> to vector<8xf32>
    %131 = vector.shape_cast %130 : vector<8xf32> to vector<8x1xf32>
    %132 = vector.broadcast %131 : vector<8x1xf32> to vector<8x8xf32>
    %133 = arith.subf %129, %132 : vector<8x8xf32>
    %134 = math.exp %133 : vector<8x8xf32>
    %cst_49 = arith.constant dense<0.000000e+00> : vector<8xf32>
    %135 = vector.multi_reduction <add>, %134, %cst_49 [1] : vector<8x8xf32> to vector<8xf32>
    %136 = vector.shape_cast %135 : vector<8xf32> to vector<8x1xf32>
    %137 = tpu.reciprocal %136 {approx = true} : vector<8x1xf32> -> vector<8x1xf32>
    %138 = vector.broadcast %137 : vector<8x1xf32> to vector<8x8xf32>
    %139 = arith.mulf %134, %138 : vector<8x8xf32>
    %140 = arith.truncf %139 : vector<8x8xf32> to vector<8x8xbf16>
    %141 = arith.truncf %119 : vector<8x8xf32> to vector<8x8xbf16>
    %cst_50 = arith.constant dense<0.000000e+00> : vector<8x8xf32>
    %142 = tpu.matmul %140, %141, %cst_50 {dimension_numbers = #tpu.dot_dimension_numbers<[1], [0], [0], [1], [0, 0, 1, 1], [], []>} : vector<8x8xbf16>, vector<8x8xbf16>, vector<8x8xf32> -> vector<8x8xf32>
    %143 = arith.truncf %142 : vector<8x8xf32> to vector<8x8xbf16>
    %144 = vector.extract_strided_slice %22 {offsets = [24, 0], sizes = [8, 32], strides = [1, 1]} : vector<32x32xf32> to vector<8x32xf32>
    %145 = arith.truncf %144 : vector<8x32xf32> to vector<8x32xbf16>
    %cst_51 = arith.constant dense<0.000000e+00> : vector<8x32xf32>
    %146 = tpu.matmul %143, %145, %cst_51 {dimension_numbers = #tpu.dot_dimension_numbers<[1], [0], [0], [1], [0, 0, 1, 1], [], []>} : vector<8x8xbf16>, vector<8x32xbf16>, vector<8x32xf32> -> vector<8x32xf32>
    %147 = arith.addf %116, %146 : vector<8x32xf32>
    %c0_52 = arith.constant 0 : index
    %c0_53 = arith.constant 0 : index
    %148 = vector.load %arg9[%c0_52, %c0_53] : memref<1x32xf32, #tpu.memory_space<vmem>>, vector<1x32xf32>
    %149 = vector.broadcast %148 : vector<1x32xf32> to vector<8x32xf32>
    %150 = arith.addf %147, %149 : vector<8x32xf32>
    %151 = arith.addf %150, %1 : vector<8x32xf32>
    %cst_54 = arith.constant dense<0.000000e+00> : vector<8xf32>
    %152 = vector.multi_reduction <add>, %151, %cst_54 [1] : vector<8x32xf32> to vector<8xf32>
    %153 = vector.shape_cast %152 : vector<8xf32> to vector<8x1xf32>
    %cst_55 = arith.constant 3.200000e+01 : f32
    %154 = vector.broadcast %cst_55 : f32 to vector<8x1xf32>
    %155 = arith.divf %153, %154 : vector<8x1xf32>
    %156 = vector.broadcast %155 : vector<8x1xf32> to vector<8x32xf32>
    %157 = arith.subf %151, %156 : vector<8x32xf32>
    %158 = arith.mulf %157, %157 : vector<8x32xf32>
    %cst_56 = arith.constant dense<0.000000e+00> : vector<8xf32>
    %159 = vector.multi_reduction <add>, %158, %cst_56 [1] : vector<8x32xf32> to vector<8xf32>
    %160 = vector.shape_cast %159 : vector<8xf32> to vector<8x1xf32>
    %cst_57 = arith.constant 3.200000e+01 : f32
    %161 = vector.broadcast %cst_57 : f32 to vector<8x1xf32>
    %162 = arith.divf %160, %161 : vector<8x1xf32>
    %163 = vector.broadcast %155 : vector<8x1xf32> to vector<8x32xf32>
    %164 = arith.subf %151, %163 : vector<8x32xf32>
    %cst_58 = arith.constant 9.99999974E-6 : f32
    %165 = vector.broadcast %cst_58 : f32 to vector<8x1xf32>
    %166 = arith.addf %162, %165 : vector<8x1xf32>
    %167 = math.rsqrt %166 : vector<8x1xf32>
    %168 = vector.broadcast %167 : vector<8x1xf32> to vector<8x32xf32>
    %169 = arith.mulf %164, %168 : vector<8x32xf32>
    %c0_59 = arith.constant 0 : index
    %c0_60 = arith.constant 0 : index
    %170 = vector.load %arg10[%c0_59, %c0_60] : memref<1x32xf32, #tpu.memory_space<vmem>>, vector<1x32xf32>
    %171 = vector.broadcast %170 : vector<1x32xf32> to vector<8x32xf32>
    %172 = arith.mulf %169, %171 : vector<8x32xf32>
    %c0_61 = arith.constant 0 : index
    %c0_62 = arith.constant 0 : index
    %173 = vector.load %arg11[%c0_61, %c0_62] : memref<1x32xf32, #tpu.memory_space<vmem>>, vector<1x32xf32>
    %174 = vector.broadcast %173 : vector<1x32xf32> to vector<8x32xf32>
    %175 = arith.addf %172, %174 : vector<8x32xf32>
    %c0_63 = arith.constant 0 : index
    %c0_64 = arith.constant 0 : index
    %c0_65 = arith.constant 0 : index
    %176 = vector.load %arg12[%c0_63, %c0_64, %c0_65] : memref<1x8x32xf32, #tpu.memory_space<vmem>>, vector<1x8x32xf32>
    %177 = vector.shape_cast %176 : vector<1x8x32xf32> to vector<8x32xf32>
    %178 = vector.shape_cast %175 : vector<8x32xf32> to vector<1x8x32xf32>
    tpu.vector_store %arg12[%c0_63, %c0_64, %c0_65], %178 {strides = array<i32>} : memref<1x8x32xf32, #tpu.memory_space<vmem>>, vector<1x8x32xf32>,
    return
  }
  func.func @transform_0(%arg0: i32) -> (i32, i32, i32) {
    %c0_i32 = arith.constant 0 : i32
    %c0_i32_0 = arith.constant 0 : i32
    %c0_i32_1 = arith.constant 0 : i32
    return %arg0, %c0_i32, %c0_i32_0 : i32, i32, i32
  }
  func.func @transform_1(%arg0: i32) -> (i32, i32, i32) {
    %c0_i32 = arith.constant 0 : i32
    %c0_i32_0 = arith.constant 0 : i32
    %c0_i32_1 = arith.constant 0 : i32
    return %arg0, %c0_i32, %c0_i32_0 : i32, i32, i32
  }
  func.func @transform_2(%arg0: i32) -> (i32, i32, i32) {
    %c0_i32 = arith.constant 0 : i32
    %c0_i32_0 = arith.constant 0 : i32
    %c0_i32_1 = arith.constant 0 : i32
    return %arg0, %c0_i32, %c0_i32_0 : i32, i32, i32
  }
  func.func @transform_3(%arg0: i32) -> (i32, i32) {
    %c0_i32 = arith.constant 0 : i32
    %c0_i32_0 = arith.constant 0 : i32
    %c0_i32_1 = arith.constant 0 : i32
    return %c0_i32, %c0_i32_0 : i32, i32
  }
  func.func @transform_4(%arg0: i32) -> (i32, i32) {
    %c0_i32 = arith.constant 0 : i32
    %c0_i32_0 = arith.constant 0 : i32
    %c0_i32_1 = arith.constant 0 : i32
    return %c0_i32, %c0_i32_0 : i32, i32
  }
  func.func @transform_5(%arg0: i32) -> (i32, i32) {
    %c0_i32 = arith.constant 0 : i32
    %c0_i32_0 = arith.constant 0 : i32
    %c0_i32_1 = arith.constant 0 : i32
    return %c0_i32, %c0_i32_0 : i32, i32
  }
  func.func @transform_6(%arg0: i32) -> (i32, i32) {
    %c0_i32 = arith.constant 0 : i32
    %c0_i32_0 = arith.constant 0 : i32
    %c0_i32_1 = arith.constant 0 : i32
    return %c0_i32, %c0_i32_0 : i32, i32
  }
  func.func @transform_7(%arg0: i32) -> (i32, i32) {
    %c0_i32 = arith.constant 0 : i32
    %c0_i32_0 = arith.constant 0 : i32
    %c0_i32_1 = arith.constant 0 : i32
    return %c0_i32, %c0_i32_0 : i32, i32
  }
  func.func @transform_8(%arg0: i32) -> (i32, i32) {
    %c0_i32 = arith.constant 0 : i32
    %c0_i32_0 = arith.constant 0 : i32
    %c0_i32_1 = arith.constant 0 : i32
    return %c0_i32, %c0_i32_0 : i32, i32
  }
  func.func @transform_9(%arg0: i32) -> (i32, i32) {
    %c0_i32 = arith.constant 0 : i32
    %c0_i32_0 = arith.constant 0 : i32
    %c0_i32_1 = arith.constant 0 : i32
    return %c0_i32, %c0_i32_0 : i32, i32
  }
  func.func @transform_10(%arg0: i32) -> (i32, i32) {
    %c0_i32 = arith.constant 0 : i32
    %c0_i32_0 = arith.constant 0 : i32
    %c0_i32_1 = arith.constant 0 : i32
    return %c0_i32, %c0_i32_0 : i32, i32
  }
  func.func @transform_11(%arg0: i32) -> (i32, i32, i32) {
    %c0_i32 = arith.constant 0 : i32
    %c0_i32_0 = arith.constant 0 : i32
    %c0_i32_1 = arith.constant 0 : i32
    return %arg0, %c0_i32, %c0_i32_0 : i32, i32, i32
  }
}

module attributes {stable_mosaic.version = 11 : i64} {
  func.func @_ffn_block_kernel(%arg0: i32, %arg1: memref<16x32xf32, #tpu.memory_space<vmem>>, %arg2: memref<32x64xf32, #tpu.memory_space<vmem>>, %arg3: memref<1x64xf32, #tpu.memory_space<vmem>>, %arg4: memref<64x32xf32, #tpu.memory_space<vmem>>, %arg5: memref<1x32xf32, #tpu.memory_space<vmem>>, %arg6: memref<1x32xf32, #tpu.memory_space<vmem>>, %arg7: memref<1x32xf32, #tpu.memory_space<vmem>>, %arg8: memref<16x32xf32, #tpu.memory_space<vmem>>) attributes {dimension_semantics = [#tpu.dimension_semantics<parallel>], iteration_bounds = array<i64: 1>, scalar_prefetch = 0 : i64, scratch_operands = 0 : i64, tpu.core_type = #tpu.core_type<tc>, window_params = [{transform_indices = @transform_0, window_bounds = array<i64: 16, 32>}, {pipeline_mode = #tpu.pipeline_mode<synchronous>, transform_indices = @transform_1, window_bounds = array<i64: 32, 64>}, {pipeline_mode = #tpu.pipeline_mode<synchronous>, transform_indices = @transform_2, window_bounds = array<i64: 1, 64>}, {pipeline_mode = #tpu.pipeline_mode<synchronous>, transform_indices = @transform_3, window_bounds = array<i64: 64, 32>}, {pipeline_mode = #tpu.pipeline_mode<synchronous>, transform_indices = @transform_4, window_bounds = array<i64: 1, 32>}, {pipeline_mode = #tpu.pipeline_mode<synchronous>, transform_indices = @transform_5, window_bounds = array<i64: 1, 32>}, {pipeline_mode = #tpu.pipeline_mode<synchronous>, transform_indices = @transform_6, window_bounds = array<i64: 1, 32>}, {transform_indices = @transform_7, window_bounds = array<i64: 16, 32>}]} {
    %c0 = arith.constant 0 : index
    %c0_0 = arith.constant 0 : index
    %0 = vector.load %arg1[%c0, %c0_0] : memref<16x32xf32, #tpu.memory_space<vmem>>, vector<16x32xf32>
    %1 = arith.truncf %0 : vector<16x32xf32> to vector<16x32xbf16>
    %c0_1 = arith.constant 0 : index
    %c0_2 = arith.constant 0 : index
    %2 = vector.load %arg2[%c0_1, %c0_2] : memref<32x64xf32, #tpu.memory_space<vmem>>, vector<32x64xf32>
    %3 = arith.truncf %2 : vector<32x64xf32> to vector<32x64xbf16>
    %cst = arith.constant dense<0.000000e+00> : vector<16x64xf32>
    %4 = tpu.matmul %1, %3, %cst {dimension_numbers = #tpu.dot_dimension_numbers<[1], [0], [0], [1], [0, 0, 1, 1], [], []>} : vector<16x32xbf16>, vector<32x64xbf16>, vector<16x64xf32> -> vector<16x64xf32>
    %c0_3 = arith.constant 0 : index
    %c0_4 = arith.constant 0 : index
    %5 = vector.load %arg3[%c0_3, %c0_4] : memref<1x64xf32, #tpu.memory_space<vmem>>, vector<1x64xf32>
    %6 = vector.broadcast %5 : vector<1x64xf32> to vector<16x64xf32>
    %7 = arith.addf %4, %6 : vector<16x64xf32>
    %cst_5 = arith.constant 0.000000e+00 : f32
    %8 = vector.broadcast %cst_5 : f32 to vector<16x64xf32>
    %9 = arith.maximumf %7, %8 : vector<16x64xf32>
    %10 = arith.truncf %9 : vector<16x64xf32> to vector<16x64xbf16>
    %c0_6 = arith.constant 0 : index
    %c0_7 = arith.constant 0 : index
    %11 = vector.load %arg4[%c0_6, %c0_7] : memref<64x32xf32, #tpu.memory_space<vmem>>, vector<64x32xf32>
    %12 = arith.truncf %11 : vector<64x32xf32> to vector<64x32xbf16>
    %cst_8 = arith.constant dense<0.000000e+00> : vector<16x32xf32>
    %13 = tpu.matmul %10, %12, %cst_8 {dimension_numbers = #tpu.dot_dimension_numbers<[1], [0], [0], [1], [0, 0, 1, 1], [], []>} : vector<16x64xbf16>, vector<64x32xbf16>, vector<16x32xf32> -> vector<16x32xf32>
    %c0_9 = arith.constant 0 : index
    %c0_10 = arith.constant 0 : index
    %14 = vector.load %arg5[%c0_9, %c0_10] : memref<1x32xf32, #tpu.memory_space<vmem>>, vector<1x32xf32>
    %15 = vector.broadcast %14 : vector<1x32xf32> to vector<16x32xf32>
    %16 = arith.addf %13, %15 : vector<16x32xf32>
    %17 = arith.addf %16, %0 : vector<16x32xf32>
    %cst_11 = arith.constant dense<0.000000e+00> : vector<16xf32>
    %18 = vector.multi_reduction <add>, %17, %cst_11 [1] : vector<16x32xf32> to vector<16xf32>
    %19 = vector.shape_cast %18 : vector<16xf32> to vector<16x1xf32>
    %cst_12 = arith.constant 3.200000e+01 : f32
    %20 = vector.broadcast %cst_12 : f32 to vector<16x1xf32>
    %21 = arith.divf %19, %20 : vector<16x1xf32>
    %22 = vector.broadcast %21 : vector<16x1xf32> to vector<16x32xf32>
    %23 = arith.subf %17, %22 : vector<16x32xf32>
    %24 = arith.mulf %23, %23 : vector<16x32xf32>
    %cst_13 = arith.constant dense<0.000000e+00> : vector<16xf32>
    %25 = vector.multi_reduction <add>, %24, %cst_13 [1] : vector<16x32xf32> to vector<16xf32>
    %26 = vector.shape_cast %25 : vector<16xf32> to vector<16x1xf32>
    %cst_14 = arith.constant 3.200000e+01 : f32
    %27 = vector.broadcast %cst_14 : f32 to vector<16x1xf32>
    %28 = arith.divf %26, %27 : vector<16x1xf32>
    %29 = vector.broadcast %21 : vector<16x1xf32> to vector<16x32xf32>
    %30 = arith.subf %17, %29 : vector<16x32xf32>
    %cst_15 = arith.constant 9.99999974E-6 : f32
    %31 = vector.broadcast %cst_15 : f32 to vector<16x1xf32>
    %32 = arith.addf %28, %31 : vector<16x1xf32>
    %33 = math.rsqrt %32 : vector<16x1xf32>
    %34 = vector.broadcast %33 : vector<16x1xf32> to vector<16x32xf32>
    %35 = arith.mulf %30, %34 : vector<16x32xf32>
    %c0_16 = arith.constant 0 : index
    %c0_17 = arith.constant 0 : index
    %36 = vector.load %arg6[%c0_16, %c0_17] : memref<1x32xf32, #tpu.memory_space<vmem>>, vector<1x32xf32>
    %37 = vector.broadcast %36 : vector<1x32xf32> to vector<16x32xf32>
    %38 = arith.mulf %35, %37 : vector<16x32xf32>
    %c0_18 = arith.constant 0 : index
    %c0_19 = arith.constant 0 : index
    %39 = vector.load %arg7[%c0_18, %c0_19] : memref<1x32xf32, #tpu.memory_space<vmem>>, vector<1x32xf32>
    %40 = vector.broadcast %39 : vector<1x32xf32> to vector<16x32xf32>
    %41 = arith.addf %38, %40 : vector<16x32xf32>
    %c0_20 = arith.constant 0 : index
    %c0_21 = arith.constant 0 : index
    %42 = vector.load %arg8[%c0_20, %c0_21] : memref<16x32xf32, #tpu.memory_space<vmem>>, vector<16x32xf32>
    tpu.vector_store %arg8[%c0_20, %c0_21], %41 {strides = array<i32>} : memref<16x32xf32, #tpu.memory_space<vmem>>, vector<16x32xf32>,
    return
  }
  func.func @transform_0(%arg0: i32) -> (i32, i32) {
    %c0_i32 = arith.constant 0 : i32
    %c0_i32_0 = arith.constant 0 : i32
    return %arg0, %c0_i32 : i32, i32
  }
  func.func @transform_1(%arg0: i32) -> (i32, i32) {
    %c0_i32 = arith.constant 0 : i32
    %c0_i32_0 = arith.constant 0 : i32
    %c0_i32_1 = arith.constant 0 : i32
    return %c0_i32, %c0_i32_0 : i32, i32
  }
  func.func @transform_2(%arg0: i32) -> (i32, i32) {
    %c0_i32 = arith.constant 0 : i32
    %c0_i32_0 = arith.constant 0 : i32
    %c0_i32_1 = arith.constant 0 : i32
    return %c0_i32, %c0_i32_0 : i32, i32
  }
  func.func @transform_3(%arg0: i32) -> (i32, i32) {
    %c0_i32 = arith.constant 0 : i32
    %c0_i32_0 = arith.constant 0 : i32
    %c0_i32_1 = arith.constant 0 : i32
    return %c0_i32, %c0_i32_0 : i32, i32
  }
  func.func @transform_4(%arg0: i32) -> (i32, i32) {
    %c0_i32 = arith.constant 0 : i32
    %c0_i32_0 = arith.constant 0 : i32
    %c0_i32_1 = arith.constant 0 : i32
    return %c0_i32, %c0_i32_0 : i32, i32
  }
  func.func @transform_5(%arg0: i32) -> (i32, i32) {
    %c0_i32 = arith.constant 0 : i32
    %c0_i32_0 = arith.constant 0 : i32
    %c0_i32_1 = arith.constant 0 : i32
    return %c0_i32, %c0_i32_0 : i32, i32
  }
  func.func @transform_6(%arg0: i32) -> (i32, i32) {
    %c0_i32 = arith.constant 0 : i32
    %c0_i32_0 = arith.constant 0 : i32
    %c0_i32_1 = arith.constant 0 : i32
    return %c0_i32, %c0_i32_0 : i32, i32
  }
  func.func @transform_7(%arg0: i32) -> (i32, i32) {
    %c0_i32 = arith.constant 0 : i32
    %c0_i32_0 = arith.constant 0 : i32
    return %arg0, %c0_i32 : i32, i32
  }
}

module attributes {stable_mosaic.version = 11 : i64} {
  func.func @_mha_block_kernel(%arg0: i32, %arg1: memref<1x8x32xf32, #tpu.memory_space<vmem>>, %arg2: memref<1x8x32xf32, #tpu.memory_space<vmem>>, %arg3: memref<1x8x8xf32, #tpu.memory_space<vmem>>, %arg4: memref<32x32xf32, #tpu.memory_space<vmem>>, %arg5: memref<1x32xf32, #tpu.memory_space<vmem>>, %arg6: memref<32x64xf32, #tpu.memory_space<vmem>>, %arg7: memref<1x64xf32, #tpu.memory_space<vmem>>, %arg8: memref<32x32xf32, #tpu.memory_space<vmem>>, %arg9: memref<1x32xf32, #tpu.memory_space<vmem>>, %arg10: memref<1x32xf32, #tpu.memory_space<vmem>>, %arg11: memref<1x32xf32, #tpu.memory_space<vmem>>, %arg12: memref<1x8x32xf32, #tpu.memory_space<vmem>>) attributes {dimension_semantics = [#tpu.dimension_semantics<parallel>], iteration_bounds = array<i64: 2>, scalar_prefetch = 0 : i64, scratch_operands = 0 : i64, tpu.core_type = #tpu.core_type<tc>, window_params = [{transform_indices = @transform_0, window_bounds = array<i64: 1, 8, 32>}, {transform_indices = @transform_1, window_bounds = array<i64: 1, 8, 32>}, {transform_indices = @transform_2, window_bounds = array<i64: 1, 8, 8>}, {pipeline_mode = #tpu.pipeline_mode<synchronous>, transform_indices = @transform_3, window_bounds = array<i64: 32, 32>}, {pipeline_mode = #tpu.pipeline_mode<synchronous>, transform_indices = @transform_4, window_bounds = array<i64: 1, 32>}, {pipeline_mode = #tpu.pipeline_mode<synchronous>, transform_indices = @transform_5, window_bounds = array<i64: 32, 64>}, {pipeline_mode = #tpu.pipeline_mode<synchronous>, transform_indices = @transform_6, window_bounds = array<i64: 1, 64>}, {pipeline_mode = #tpu.pipeline_mode<synchronous>, transform_indices = @transform_7, window_bounds = array<i64: 32, 32>}, {pipeline_mode = #tpu.pipeline_mode<synchronous>, transform_indices = @transform_8, window_bounds = array<i64: 1, 32>}, {pipeline_mode = #tpu.pipeline_mode<synchronous>, transform_indices = @transform_9, window_bounds = array<i64: 1, 32>}, {pipeline_mode = #tpu.pipeline_mode<synchronous>, transform_indices = @transform_10, window_bounds = array<i64: 1, 32>}, {transform_indices = @transform_11, window_bounds = array<i64: 1, 8, 32>}]} {
    %c0 = arith.constant 0 : index
    %c0_0 = arith.constant 0 : index
    %c0_1 = arith.constant 0 : index
    %0 = vector.load %arg1[%c0, %c0_0, %c0_1] : memref<1x8x32xf32, #tpu.memory_space<vmem>>, vector<1x8x32xf32>
    %1 = vector.shape_cast %0 : vector<1x8x32xf32> to vector<8x32xf32>
    %c0_2 = arith.constant 0 : index
    %c0_3 = arith.constant 0 : index
    %c0_4 = arith.constant 0 : index
    %2 = vector.load %arg2[%c0_2, %c0_3, %c0_4] : memref<1x8x32xf32, #tpu.memory_space<vmem>>, vector<1x8x32xf32>
    %3 = vector.shape_cast %2 : vector<1x8x32xf32> to vector<8x32xf32>
    %c0_5 = arith.constant 0 : index
    %c0_6 = arith.constant 0 : index
    %c0_7 = arith.constant 0 : index
    %4 = vector.load %arg3[%c0_5, %c0_6, %c0_7] : memref<1x8x8xf32, #tpu.memory_space<vmem>>, vector<1x8x8xf32>
    %5 = vector.shape_cast %4 : vector<1x8x8xf32> to vector<8x8xf32>
    %6 = arith.truncf %1 : vector<8x32xf32> to vector<8x32xbf16>
    %c0_8 = arith.constant 0 : index
    %c0_9 = arith.constant 0 : index
    %7 = vector.load %arg4[%c0_8, %c0_9] : memref<32x32xf32, #tpu.memory_space<vmem>>, vector<32x32xf32>
    %8 = arith.truncf %7 : vector<32x32xf32> to vector<32x32xbf16>
    %cst = arith.constant dense<0.000000e+00> : vector<8x32xf32>
    %9 = tpu.matmul %6, %8, %cst {dimension_numbers = #tpu.dot_dimension_numbers<[1], [0], [0], [1], [0, 0, 1, 1], [], []>} : vector<8x32xbf16>, vector<32x32xbf16>, vector<8x32xf32> -> vector<8x32xf32>
    %c0_10 = arith.constant 0 : index
    %c0_11 = arith.constant 0 : index
    %10 = vector.load %arg5[%c0_10, %c0_11] : memref<1x32xf32, #tpu.memory_space<vmem>>, vector<1x32xf32>
    %11 = vector.broadcast %10 : vector<1x32xf32> to vector<8x32xf32>
    %12 = arith.addf %9, %11 : vector<8x32xf32>
    %13 = arith.truncf %3 : vector<8x32xf32> to vector<8x32xbf16>
    %c0_12 = arith.constant 0 : index
    %c0_13 = arith.constant 0 : index
    %14 = vector.load %arg6[%c0_12, %c0_13] : memref<32x64xf32, #tpu.memory_space<vmem>>, vector<32x64xf32>
    %15 = arith.truncf %14 : vector<32x64xf32> to vector<32x64xbf16>
    %cst_14 = arith.constant dense<0.000000e+00> : vector<8x64xf32>
    %16 = tpu.matmul %13, %15, %cst_14 {dimension_numbers = #tpu.dot_dimension_numbers<[1], [0], [0], [1], [0, 0, 1, 1], [], []>} : vector<8x32xbf16>, vector<32x64xbf16>, vector<8x64xf32> -> vector<8x64xf32>
    %c0_15 = arith.constant 0 : index
    %c0_16 = arith.constant 0 : index
    %17 = vector.load %arg7[%c0_15, %c0_16] : memref<1x64xf32, #tpu.memory_space<vmem>>, vector<1x64xf32>
    %18 = vector.broadcast %17 : vector<1x64xf32> to vector<8x64xf32>
    %19 = arith.addf %16, %18 : vector<8x64xf32>
    %20 = vector.extract_strided_slice %19 {offsets = [0, 0], sizes = [8, 32], strides = [1, 1]} : vector<8x64xf32> to vector<8x32xf32>
    %21 = vector.extract_strided_slice %19 {offsets = [0, 32], sizes = [8, 32], strides = [1, 1]} : vector<8x64xf32> to vector<8x32xf32>
    %c0_17 = arith.constant 0 : index
    %c0_18 = arith.constant 0 : index
    %22 = vector.load %arg8[%c0_17, %c0_18] : memref<32x32xf32, #tpu.memory_space<vmem>>, vector<32x32xf32>
    %cst_19 = arith.constant 0.000000e+00 : f32
    %23 = vector.broadcast %cst_19 : f32 to vector<8x32xf32>
    %24 = vector.extract_strided_slice %12 {offsets = [0, 0], sizes = [8, 8], strides = [1, 1]} : vector<8x32xf32> to vector<8x8xf32>
    %25 = vector.extract_strided_slice %20 {offsets = [0, 0], sizes = [8, 8], strides = [1, 1]} : vector<8x32xf32> to vector<8x8xf32>
    %26 = vector.extract_strided_slice %21 {offsets = [0, 0], sizes = [8, 8], strides = [1, 1]} : vector<8x32xf32> to vector<8x8xf32>
    %27 = arith.truncf %24 : vector<8x8xf32> to vector<8x8xbf16>
    %28 = tpu.transpose %25, [1, 0] : vector<8x8xf32> -> vector<8x8xf32>
    %29 = arith.truncf %28 : vector<8x8xf32> to vector<8x8xbf16>
    %cst_20 = arith.constant dense<0.000000e+00> : vector<8x8xf32>
    %30 = tpu.matmul %27, %29, %cst_20 {dimension_numbers = #tpu.dot_dimension_numbers<[1], [0], [0], [1], [0, 0, 1, 1], [], []>} : vector<8x8xbf16>, vector<8x8xbf16>, vector<8x8xf32> -> vector<8x8xf32>
    %cst_21 = arith.constant 0.353553385 : f32
    %31 = vector.broadcast %cst_21 : f32 to vector<8x8xf32>
    %32 = arith.mulf %30, %31 : vector<8x8xf32>
    %cst_22 = arith.constant 0.000000e+00 : f32
    %33 = vector.broadcast %cst_22 : f32 to vector<8x8xf32>
    %34 = arith.cmpf ogt, %5, %33 : vector<8x8xf32>
    %cst_23 = arith.constant -1.000000e+09 : f32
    %35 = vector.broadcast %cst_23 : f32 to vector<8x8xf32>
    %36 = arith.select %34, %32, %35 : vector<8x8xi1>, vector<8x8xf32>
    %cst_24 = arith.constant dense<0xFF800000> : vector<8xf32>
    %37 = vector.multi_reduction <maximumf>, %36, %cst_24 [1] : vector<8x8xf32> to vector<8xf32>
    %38 = vector.shape_cast %37 : vector<8xf32> to vector<8x1xf32>
    %39 = vector.broadcast %38 : vector<8x1xf32> to vector<8x8xf32>
    %40 = arith.subf %36, %39 : vector<8x8xf32>
    %41 = math.exp %40 : vector<8x8xf32>
    %cst_25 = arith.constant dense<0.000000e+00> : vector<8xf32>
    %42 = vector.multi_reduction <add>, %41, %cst_25 [1] : vector<8x8xf32> to vector<8xf32>
    %43 = vector.shape_cast %42 : vector<8xf32> to vector<8x1xf32>
    %44 = tpu.reciprocal %43 {approx = true} : vector<8x1xf32> -> vector<8x1xf32>
    %45 = vector.broadcast %44 : vector<8x1xf32> to vector<8x8xf32>
    %46 = arith.mulf %41, %45 : vector<8x8xf32>
    %47 = arith.truncf %46 : vector<8x8xf32> to vector<8x8xbf16>
    %48 = arith.truncf %26 : vector<8x8xf32> to vector<8x8xbf16>
    %cst_26 = arith.constant dense<0.000000e+00> : vector<8x8xf32>
    %49 = tpu.matmul %47, %48, %cst_26 {dimension_numbers = #tpu.dot_dimension_numbers<[1], [0], [0], [1], [0, 0, 1, 1], [], []>} : vector<8x8xbf16>, vector<8x8xbf16>, vector<8x8xf32> -> vector<8x8xf32>
    %50 = arith.truncf %49 : vector<8x8xf32> to vector<8x8xbf16>
    %51 = vector.extract_strided_slice %22 {offsets = [0, 0], sizes = [8, 32], strides = [1, 1]} : vector<32x32xf32> to vector<8x32xf32>
    %52 = arith.truncf %51 : vector<8x32xf32> to vector<8x32xbf16>
    %cst_27 = arith.constant dense<0.000000e+00> : vector<8x32xf32>
    %53 = tpu.matmul %50, %52, %cst_27 {dimension_numbers = #tpu.dot_dimension_numbers<[1], [0], [0], [1], [0, 0, 1, 1], [], []>} : vector<8x8xbf16>, vector<8x32xbf16>, vector<8x32xf32> -> vector<8x32xf32>
    %54 = arith.addf %23, %53 : vector<8x32xf32>
    %55 = vector.extract_strided_slice %12 {offsets = [0, 8], sizes = [8, 8], strides = [1, 1]} : vector<8x32xf32> to vector<8x8xf32>
    %56 = vector.extract_strided_slice %20 {offsets = [0, 8], sizes = [8, 8], strides = [1, 1]} : vector<8x32xf32> to vector<8x8xf32>
    %57 = vector.extract_strided_slice %21 {offsets = [0, 8], sizes = [8, 8], strides = [1, 1]} : vector<8x32xf32> to vector<8x8xf32>
    %58 = arith.truncf %55 : vector<8x8xf32> to vector<8x8xbf16>
    %59 = tpu.transpose %56, [1, 0] : vector<8x8xf32> -> vector<8x8xf32>
    %60 = arith.truncf %59 : vector<8x8xf32> to vector<8x8xbf16>
    %cst_28 = arith.constant dense<0.000000e+00> : vector<8x8xf32>
    %61 = tpu.matmul %58, %60, %cst_28 {dimension_numbers = #tpu.dot_dimension_numbers<[1], [0], [0], [1], [0, 0, 1, 1], [], []>} : vector<8x8xbf16>, vector<8x8xbf16>, vector<8x8xf32> -> vector<8x8xf32>
    %cst_29 = arith.constant 0.353553385 : f32
    %62 = vector.broadcast %cst_29 : f32 to vector<8x8xf32>
    %63 = arith.mulf %61, %62 : vector<8x8xf32>
    %cst_30 = arith.constant 0.000000e+00 : f32
    %64 = vector.broadcast %cst_30 : f32 to vector<8x8xf32>
    %65 = arith.cmpf ogt, %5, %64 : vector<8x8xf32>
    %cst_31 = arith.constant -1.000000e+09 : f32
    %66 = vector.broadcast %cst_31 : f32 to vector<8x8xf32>
    %67 = arith.select %65, %63, %66 : vector<8x8xi1>, vector<8x8xf32>
    %cst_32 = arith.constant dense<0xFF800000> : vector<8xf32>
    %68 = vector.multi_reduction <maximumf>, %67, %cst_32 [1] : vector<8x8xf32> to vector<8xf32>
    %69 = vector.shape_cast %68 : vector<8xf32> to vector<8x1xf32>
    %70 = vector.broadcast %69 : vector<8x1xf32> to vector<8x8xf32>
    %71 = arith.subf %67, %70 : vector<8x8xf32>
    %72 = math.exp %71 : vector<8x8xf32>
    %cst_33 = arith.constant dense<0.000000e+00> : vector<8xf32>
    %73 = vector.multi_reduction <add>, %72, %cst_33 [1] : vector<8x8xf32> to vector<8xf32>
    %74 = vector.shape_cast %73 : vector<8xf32> to vector<8x1xf32>
    %75 = tpu.reciprocal %74 {approx = true} : vector<8x1xf32> -> vector<8x1xf32>
    %76 = vector.broadcast %75 : vector<8x1xf32> to vector<8x8xf32>
    %77 = arith.mulf %72, %76 : vector<8x8xf32>
    %78 = arith.truncf %77 : vector<8x8xf32> to vector<8x8xbf16>
    %79 = arith.truncf %57 : vector<8x8xf32> to vector<8x8xbf16>
    %cst_34 = arith.constant dense<0.000000e+00> : vector<8x8xf32>
    %80 = tpu.matmul %78, %79, %cst_34 {dimension_numbers = #tpu.dot_dimension_numbers<[1], [0], [0], [1], [0, 0, 1, 1], [], []>} : vector<8x8xbf16>, vector<8x8xbf16>, vector<8x8xf32> -> vector<8x8xf32>
    %81 = arith.truncf %80 : vector<8x8xf32> to vector<8x8xbf16>
    %82 = vector.extract_strided_slice %22 {offsets = [8, 0], sizes = [8, 32], strides = [1, 1]} : vector<32x32xf32> to vector<8x32xf32>
    %83 = arith.truncf %82 : vector<8x32xf32> to vector<8x32xbf16>
    %cst_35 = arith.constant dense<0.000000e+00> : vector<8x32xf32>
    %84 = tpu.matmul %81, %83, %cst_35 {dimension_numbers = #tpu.dot_dimension_numbers<[1], [0], [0], [1], [0, 0, 1, 1], [], []>} : vector<8x8xbf16>, vector<8x32xbf16>, vector<8x32xf32> -> vector<8x32xf32>
    %85 = arith.addf %54, %84 : vector<8x32xf32>
    %86 = vector.extract_strided_slice %12 {offsets = [0, 16], sizes = [8, 8], strides = [1, 1]} : vector<8x32xf32> to vector<8x8xf32>
    %87 = vector.extract_strided_slice %20 {offsets = [0, 16], sizes = [8, 8], strides = [1, 1]} : vector<8x32xf32> to vector<8x8xf32>
    %88 = vector.extract_strided_slice %21 {offsets = [0, 16], sizes = [8, 8], strides = [1, 1]} : vector<8x32xf32> to vector<8x8xf32>
    %89 = arith.truncf %86 : vector<8x8xf32> to vector<8x8xbf16>
    %90 = tpu.transpose %87, [1, 0] : vector<8x8xf32> -> vector<8x8xf32>
    %91 = arith.truncf %90 : vector<8x8xf32> to vector<8x8xbf16>
    %cst_36 = arith.constant dense<0.000000e+00> : vector<8x8xf32>
    %92 = tpu.matmul %89, %91, %cst_36 {dimension_numbers = #tpu.dot_dimension_numbers<[1], [0], [0], [1], [0, 0, 1, 1], [], []>} : vector<8x8xbf16>, vector<8x8xbf16>, vector<8x8xf32> -> vector<8x8xf32>
    %cst_37 = arith.constant 0.353553385 : f32
    %93 = vector.broadcast %cst_37 : f32 to vector<8x8xf32>
    %94 = arith.mulf %92, %93 : vector<8x8xf32>
    %cst_38 = arith.constant 0.000000e+00 : f32
    %95 = vector.broadcast %cst_38 : f32 to vector<8x8xf32>
    %96 = arith.cmpf ogt, %5, %95 : vector<8x8xf32>
    %cst_39 = arith.constant -1.000000e+09 : f32
    %97 = vector.broadcast %cst_39 : f32 to vector<8x8xf32>
    %98 = arith.select %96, %94, %97 : vector<8x8xi1>, vector<8x8xf32>
    %cst_40 = arith.constant dense<0xFF800000> : vector<8xf32>
    %99 = vector.multi_reduction <maximumf>, %98, %cst_40 [1] : vector<8x8xf32> to vector<8xf32>
    %100 = vector.shape_cast %99 : vector<8xf32> to vector<8x1xf32>
    %101 = vector.broadcast %100 : vector<8x1xf32> to vector<8x8xf32>
    %102 = arith.subf %98, %101 : vector<8x8xf32>
    %103 = math.exp %102 : vector<8x8xf32>
    %cst_41 = arith.constant dense<0.000000e+00> : vector<8xf32>
    %104 = vector.multi_reduction <add>, %103, %cst_41 [1] : vector<8x8xf32> to vector<8xf32>
    %105 = vector.shape_cast %104 : vector<8xf32> to vector<8x1xf32>
    %106 = tpu.reciprocal %105 {approx = true} : vector<8x1xf32> -> vector<8x1xf32>
    %107 = vector.broadcast %106 : vector<8x1xf32> to vector<8x8xf32>
    %108 = arith.mulf %103, %107 : vector<8x8xf32>
    %109 = arith.truncf %108 : vector<8x8xf32> to vector<8x8xbf16>
    %110 = arith.truncf %88 : vector<8x8xf32> to vector<8x8xbf16>
    %cst_42 = arith.constant dense<0.000000e+00> : vector<8x8xf32>
    %111 = tpu.matmul %109, %110, %cst_42 {dimension_numbers = #tpu.dot_dimension_numbers<[1], [0], [0], [1], [0, 0, 1, 1], [], []>} : vector<8x8xbf16>, vector<8x8xbf16>, vector<8x8xf32> -> vector<8x8xf32>
    %112 = arith.truncf %111 : vector<8x8xf32> to vector<8x8xbf16>
    %113 = vector.extract_strided_slice %22 {offsets = [16, 0], sizes = [8, 32], strides = [1, 1]} : vector<32x32xf32> to vector<8x32xf32>
    %114 = arith.truncf %113 : vector<8x32xf32> to vector<8x32xbf16>
    %cst_43 = arith.constant dense<0.000000e+00> : vector<8x32xf32>
    %115 = tpu.matmul %112, %114, %cst_43 {dimension_numbers = #tpu.dot_dimension_numbers<[1], [0], [0], [1], [0, 0, 1, 1], [], []>} : vector<8x8xbf16>, vector<8x32xbf16>, vector<8x32xf32> -> vector<8x32xf32>
    %116 = arith.addf %85, %115 : vector<8x32xf32>
    %117 = vector.extract_strided_slice %12 {offsets = [0, 24], sizes = [8, 8], strides = [1, 1]} : vector<8x32xf32> to vector<8x8xf32>
    %118 = vector.extract_strided_slice %20 {offsets = [0, 24], sizes = [8, 8], strides = [1, 1]} : vector<8x32xf32> to vector<8x8xf32>
    %119 = vector.extract_strided_slice %21 {offsets = [0, 24], sizes = [8, 8], strides = [1, 1]} : vector<8x32xf32> to vector<8x8xf32>
    %120 = arith.truncf %117 : vector<8x8xf32> to vector<8x8xbf16>
    %121 = tpu.transpose %118, [1, 0] : vector<8x8xf32> -> vector<8x8xf32>
    %122 = arith.truncf %121 : vector<8x8xf32> to vector<8x8xbf16>
    %cst_44 = arith.constant dense<0.000000e+00> : vector<8x8xf32>
    %123 = tpu.matmul %120, %122, %cst_44 {dimension_numbers = #tpu.dot_dimension_numbers<[1], [0], [0], [1], [0, 0, 1, 1], [], []>} : vector<8x8xbf16>, vector<8x8xbf16>, vector<8x8xf32> -> vector<8x8xf32>
    %cst_45 = arith.constant 0.353553385 : f32
    %124 = vector.broadcast %cst_45 : f32 to vector<8x8xf32>
    %125 = arith.mulf %123, %124 : vector<8x8xf32>
    %cst_46 = arith.constant 0.000000e+00 : f32
    %126 = vector.broadcast %cst_46 : f32 to vector<8x8xf32>
    %127 = arith.cmpf ogt, %5, %126 : vector<8x8xf32>
    %cst_47 = arith.constant -1.000000e+09 : f32
    %128 = vector.broadcast %cst_47 : f32 to vector<8x8xf32>
    %129 = arith.select %127, %125, %128 : vector<8x8xi1>, vector<8x8xf32>
    %cst_48 = arith.constant dense<0xFF800000> : vector<8xf32>
    %130 = vector.multi_reduction <maximumf>, %129, %cst_48 [1] : vector<8x8xf32> to vector<8xf32>
    %131 = vector.shape_cast %130 : vector<8xf32> to vector<8x1xf32>
    %132 = vector.broadcast %131 : vector<8x1xf32> to vector<8x8xf32>
    %133 = arith.subf %129, %132 : vector<8x8xf32>
    %134 = math.exp %133 : vector<8x8xf32>
    %cst_49 = arith.constant dense<0.000000e+00> : vector<8xf32>
    %135 = vector.multi_reduction <add>, %134, %cst_49 [1] : vector<8x8xf32> to vector<8xf32>
    %136 = vector.shape_cast %135 : vector<8xf32> to vector<8x1xf32>
    %137 = tpu.reciprocal %136 {approx = true} : vector<8x1xf32> -> vector<8x1xf32>
    %138 = vector.broadcast %137 : vector<8x1xf32> to vector<8x8xf32>
    %139 = arith.mulf %134, %138 : vector<8x8xf32>
    %140 = arith.truncf %139 : vector<8x8xf32> to vector<8x8xbf16>
    %141 = arith.truncf %119 : vector<8x8xf32> to vector<8x8xbf16>
    %cst_50 = arith.constant dense<0.000000e+00> : vector<8x8xf32>
    %142 = tpu.matmul %140, %141, %cst_50 {dimension_numbers = #tpu.dot_dimension_numbers<[1], [0], [0], [1], [0, 0, 1, 1], [], []>} : vector<8x8xbf16>, vector<8x8xbf16>, vector<8x8xf32> -> vector<8x8xf32>
    %143 = arith.truncf %142 : vector<8x8xf32> to vector<8x8xbf16>
    %144 = vector.extract_strided_slice %22 {offsets = [24, 0], sizes = [8, 32], strides = [1, 1]} : vector<32x32xf32> to vector<8x32xf32>
    %145 = arith.truncf %144 : vector<8x32xf32> to vector<8x32xbf16>
    %cst_51 = arith.constant dense<0.000000e+00> : vector<8x32xf32>
    %146 = tpu.matmul %143, %145, %cst_51 {dimension_numbers = #tpu.dot_dimension_numbers<[1], [0], [0], [1], [0, 0, 1, 1], [], []>} : vector<8x8xbf16>, vector<8x32xbf16>, vector<8x32xf32> -> vector<8x32xf32>
    %147 = arith.addf %116, %146 : vector<8x32xf32>
    %c0_52 = arith.constant 0 : index
    %c0_53 = arith.constant 0 : index
    %148 = vector.load %arg9[%c0_52, %c0_53] : memref<1x32xf32, #tpu.memory_space<vmem>>, vector<1x32xf32>
    %149 = vector.broadcast %148 : vector<1x32xf32> to vector<8x32xf32>
    %150 = arith.addf %147, %149 : vector<8x32xf32>
    %151 = arith.addf %150, %1 : vector<8x32xf32>
    %cst_54 = arith.constant dense<0.000000e+00> : vector<8xf32>
    %152 = vector.multi_reduction <add>, %151, %cst_54 [1] : vector<8x32xf32> to vector<8xf32>
    %153 = vector.shape_cast %152 : vector<8xf32> to vector<8x1xf32>
    %cst_55 = arith.constant 3.200000e+01 : f32
    %154 = vector.broadcast %cst_55 : f32 to vector<8x1xf32>
    %155 = arith.divf %153, %154 : vector<8x1xf32>
    %156 = vector.broadcast %155 : vector<8x1xf32> to vector<8x32xf32>
    %157 = arith.subf %151, %156 : vector<8x32xf32>
    %158 = arith.mulf %157, %157 : vector<8x32xf32>
    %cst_56 = arith.constant dense<0.000000e+00> : vector<8xf32>
    %159 = vector.multi_reduction <add>, %158, %cst_56 [1] : vector<8x32xf32> to vector<8xf32>
    %160 = vector.shape_cast %159 : vector<8xf32> to vector<8x1xf32>
    %cst_57 = arith.constant 3.200000e+01 : f32
    %161 = vector.broadcast %cst_57 : f32 to vector<8x1xf32>
    %162 = arith.divf %160, %161 : vector<8x1xf32>
    %163 = vector.broadcast %155 : vector<8x1xf32> to vector<8x32xf32>
    %164 = arith.subf %151, %163 : vector<8x32xf32>
    %cst_58 = arith.constant 9.99999974E-6 : f32
    %165 = vector.broadcast %cst_58 : f32 to vector<8x1xf32>
    %166 = arith.addf %162, %165 : vector<8x1xf32>
    %167 = math.rsqrt %166 : vector<8x1xf32>
    %168 = vector.broadcast %167 : vector<8x1xf32> to vector<8x32xf32>
    %169 = arith.mulf %164, %168 : vector<8x32xf32>
    %c0_59 = arith.constant 0 : index
    %c0_60 = arith.constant 0 : index
    %170 = vector.load %arg10[%c0_59, %c0_60] : memref<1x32xf32, #tpu.memory_space<vmem>>, vector<1x32xf32>
    %171 = vector.broadcast %170 : vector<1x32xf32> to vector<8x32xf32>
    %172 = arith.mulf %169, %171 : vector<8x32xf32>
    %c0_61 = arith.constant 0 : index
    %c0_62 = arith.constant 0 : index
    %173 = vector.load %arg11[%c0_61, %c0_62] : memref<1x32xf32, #tpu.memory_space<vmem>>, vector<1x32xf32>
    %174 = vector.broadcast %173 : vector<1x32xf32> to vector<8x32xf32>
    %175 = arith.addf %172, %174 : vector<8x32xf32>
    %c0_63 = arith.constant 0 : index
    %c0_64 = arith.constant 0 : index
    %c0_65 = arith.constant 0 : index
    %176 = vector.load %arg12[%c0_63, %c0_64, %c0_65] : memref<1x8x32xf32, #tpu.memory_space<vmem>>, vector<1x8x32xf32>
    %177 = vector.shape_cast %176 : vector<1x8x32xf32> to vector<8x32xf32>
    %178 = vector.shape_cast %175 : vector<8x32xf32> to vector<1x8x32xf32>
    tpu.vector_store %arg12[%c0_63, %c0_64, %c0_65], %178 {strides = array<i32>} : memref<1x8x32xf32, #tpu.memory_space<vmem>>, vector<1x8x32xf32>,
    return
  }
  func.func @transform_0(%arg0: i32) -> (i32, i32, i32) {
    %c0_i32 = arith.constant 0 : i32
    %c0_i32_0 = arith.constant 0 : i32
    %c0_i32_1 = arith.constant 0 : i32
    return %arg0, %c0_i32, %c0_i32_0 : i32, i32, i32
  }
  func.func @transform_1(%arg0: i32) -> (i32, i32, i32) {
    %c0_i32 = arith.constant 0 : i32
    %c0_i32_0 = arith.constant 0 : i32
    %c0_i32_1 = arith.constant 0 : i32
    return %arg0, %c0_i32, %c0_i32_0 : i32, i32, i32
  }
  func.func @transform_2(%arg0: i32) -> (i32, i32, i32) {
    %c0_i32 = arith.constant 0 : i32
    %c0_i32_0 = arith.constant 0 : i32
    %c0_i32_1 = arith.constant 0 : i32
    return %arg0, %c0_i32, %c0_i32_0 : i32, i32, i32
  }
  func.func @transform_3(%arg0: i32) -> (i32, i32) {
    %c0_i32 = arith.constant 0 : i32
    %c0_i32_0 = arith.constant 0 : i32
    %c0_i32_1 = arith.constant 0 : i32
    return %c0_i32, %c0_i32_0 : i32, i32
  }
  func.func @transform_4(%arg0: i32) -> (i32, i32) {
    %c0_i32 = arith.constant 0 : i32
    %c0_i32_0 = arith.constant 0 : i32
    %c0_i32_1 = arith.constant 0 : i32
    return %c0_i32, %c0_i32_0 : i32, i32
  }
  func.func @transform_5(%arg0: i32) -> (i32, i32) {
    %c0_i32 = arith.constant 0 : i32
    %c0_i32_0 = arith.constant 0 : i32
    %c0_i32_1 = arith.constant 0 : i32
    return %c0_i32, %c0_i32_0 : i32, i32
  }
  func.func @transform_6(%arg0: i32) -> (i32, i32) {
    %c0_i32 = arith.constant 0 : i32
    %c0_i32_0 = arith.constant 0 : i32
    %c0_i32_1 = arith.constant 0 : i32
    return %c0_i32, %c0_i32_0 : i32, i32
  }
  func.func @transform_7(%arg0: i32) -> (i32, i32) {
    %c0_i32 = arith.constant 0 : i32
    %c0_i32_0 = arith.constant 0 : i32
    %c0_i32_1 = arith.constant 0 : i32
    return %c0_i32, %c0_i32_0 : i32, i32
  }
  func.func @transform_8(%arg0: i32) -> (i32, i32) {
    %c0_i32 = arith.constant 0 : i32
    %c0_i32_0 = arith.constant 0 : i32
    %c0_i32_1 = arith.constant 0 : i32
    return %c0_i32, %c0_i32_0 : i32, i32
  }
  func.func @transform_9(%arg0: i32) -> (i32, i32) {
    %c0_i32 = arith.constant 0 : i32
    %c0_i32_0 = arith.constant 0 : i32
    %c0_i32_1 = arith.constant 0 : i32
    return %c0_i32, %c0_i32_0 : i32, i32
  }
  func.func @transform_10(%arg0: i32) -> (i32, i32) {
    %c0_i32 = arith.constant 0 : i32
    %c0_i32_0 = arith.constant 0 : i32
    %c0_i32_1 = arith.constant 0 : i32
    return %c0_i32, %c0_i32_0 : i32, i32
  }
  func.func @transform_11(%arg0: i32) -> (i32, i32, i32) {
    %c0_i32 = arith.constant 0 : i32
    %c0_i32_0 = arith.constant 0 : i32
    %c0_i32_1 = arith.constant 0 : i32
    return %arg0, %c0_i32, %c0_i32_0 : i32, i32, i32
  }
}

module attributes {stable_mosaic.version = 11 : i64} {
  func.func @_linear_kernel(%arg0: i32, %arg1: i32, %arg2: memref<16x32xf32, #tpu.memory_space<vmem>>, %arg3: memref<32x128xf32, #tpu.memory_space<vmem>>, %arg4: memref<1x128xf32, #tpu.memory_space<vmem>>, %arg5: memref<16x128xf32, #tpu.memory_space<vmem>>) attributes {dimension_semantics = [#tpu.dimension_semantics<parallel>, #tpu.dimension_semantics<parallel>], iteration_bounds = array<i64: 1, 1>, scalar_prefetch = 0 : i64, scratch_operands = 0 : i64, tpu.core_type = #tpu.core_type<tc>, window_params = [{transform_indices = @transform_0, window_bounds = array<i64: 16, 32>}, {transform_indices = @transform_1, window_bounds = array<i64: 32, 128>}, {transform_indices = @transform_2, window_bounds = array<i64: 1, 128>}, {transform_indices = @transform_3, window_bounds = array<i64: 16, 128>}]} {
    %c0 = arith.constant 0 : index
    %c0_0 = arith.constant 0 : index
    %0 = vector.load %arg2[%c0, %c0_0] : memref<16x32xf32, #tpu.memory_space<vmem>>, vector<16x32xf32>
    %1 = arith.truncf %0 : vector<16x32xf32> to vector<16x32xbf16>
    %c0_1 = arith.constant 0 : index
    %c0_2 = arith.constant 0 : index
    %2 = vector.load %arg3[%c0_1, %c0_2] : memref<32x128xf32, #tpu.memory_space<vmem>>, vector<32x128xf32>
    %3 = arith.truncf %2 : vector<32x128xf32> to vector<32x128xbf16>
    %cst = arith.constant dense<0.000000e+00> : vector<16x128xf32>
    %4 = tpu.matmul %1, %3, %cst {dimension_numbers = #tpu.dot_dimension_numbers<[1], [0], [0], [1], [0, 0, 1, 1], [], []>} : vector<16x32xbf16>, vector<32x128xbf16>, vector<16x128xf32> -> vector<16x128xf32>
    %c0_3 = arith.constant 0 : index
    %c0_4 = arith.constant 0 : index
    %5 = vector.load %arg4[%c0_3, %c0_4] : memref<1x128xf32, #tpu.memory_space<vmem>>, vector<1x128xf32>
    %6 = vector.broadcast %5 : vector<1x128xf32> to vector<16x128xf32>
    %7 = arith.addf %4, %6 : vector<16x128xf32>
    %c0_5 = arith.constant 0 : index
    %c0_6 = arith.constant 0 : index
    %8 = vector.load %arg5[%c0_5, %c0_6] : memref<16x128xf32, #tpu.memory_space<vmem>>, vector<16x128xf32>
    tpu.vector_store %arg5[%c0_5, %c0_6], %7 {strides = array<i32>} : memref<16x128xf32, #tpu.memory_space<vmem>>, vector<16x128xf32>,
    return
  }
  func.func @transform_0(%arg0: i32, %arg1: i32) -> (i32, i32) {
    %c0_i32 = arith.constant 0 : i32
    %c0_i32_0 = arith.constant 0 : i32
    return %arg0, %c0_i32 : i32, i32
  }
  func.func @transform_1(%arg0: i32, %arg1: i32) -> (i32, i32) {
    %c0_i32 = arith.constant 0 : i32
    %c0_i32_0 = arith.constant 0 : i32
    return %c0_i32, %arg1 : i32, i32
  }
  func.func @transform_2(%arg0: i32, %arg1: i32) -> (i32, i32) {
    %c0_i32 = arith.constant 0 : i32
    %c0_i32_0 = arith.constant 0 : i32
    return %c0_i32, %arg1 : i32, i32
  }
  func.func @transform_3(%arg0: i32, %arg1: i32) -> (i32, i32) {
    %c0_i32 = arith.constant 0 : i32
    return %arg0, %arg1 : i32, i32
  }
}

</mosaic_0001>

<llo_original>
// kernel: _lambda_.12
$region0: #{_lambda_.12}
  #allocation0 [shape = 'u32[]', space=smem, size = 0x4, offset = 0x4, fixed_abs, tag = 'smem constant byte address 0x4 - core index']
  #allocation1 [shape = 'u32[72,128]{1,0:T(1,128)}', space=vmem, size = 0x9000, scoped, tag = 'internal scratch']
  %s0 = inlined_call_operand.vmem [shape: f32[16,32], index: 0, kind: input, shape index: {}]
  %s1 = inlined_call_operand.vmem [shape: f32[32,64], index: 1, kind: input, shape index: {}]
  %s2 = inlined_call_operand.vmem [shape: f32[1,64], index: 2, kind: input, shape index: {}]
  %s3 = inlined_call_operand.vmem [shape: f32[64,32], index: 3, kind: input, shape index: {}]
  %s4 = inlined_call_operand.vmem [shape: f32[1,32], index: 4, kind: input, shape index: {}]
  %s5 = inlined_call_operand.vmem [shape: f32[1,32], index: 5, kind: input, shape index: {}]
  %s6 = inlined_call_operand.vmem [shape: f32[1,32], index: 6, kind: input, shape index: {}]
  %s7 = inlined_call_operand.vmem [shape: f32[16,32], index: 7, kind: output, shape index: {}]
  %s8 = sld [smem:[#allocation0]]
  $region38: #{_lambda_.12} parent=0
    _
  %s10 = ssub.s32 1, %s8
  %s11 = scalar_select 0, %s10, %s8
  // Predicated region
  $region2: #{_lambda_.12} parent=0 // pred_check
    _
  $region3: #{_lambda_.12} parent=0 // pred_check_branch
    %13 = sbr.rel (0) target = $region5
  $region4: #{_lambda_.12} parent=0 // pred_region
    _
  $region5: #{_lambda_.12} parent=0 // pred_fallthru
    _
  // Predicated region
  $region6: #{_lambda_.12} parent=0 // pred_check
    _
  $region7: #{_lambda_.12} parent=0 // pred_check_branch
    %15 = sbr.rel (0) target = $region9
  $region8: #{_lambda_.12} parent=0 // pred_region
    _
  $region9: #{_lambda_.12} parent=0 // pred_fallthru
    _
  // Predicated region
  $region10: #{_lambda_.12} parent=0 // pred_check
    _
  $region11: #{_lambda_.12} parent=0 // pred_check_branch
    %17 = sbr.rel (0) target = $region13
  $region12: #{_lambda_.12} parent=0 // pred_region
    _
  $region13: #{_lambda_.12} parent=0 // pred_fallthru
    _
  // Predicated region
  $region14: #{_lambda_.12} parent=0 // pred_check
    _
  $region15: #{_lambda_.12} parent=0 // pred_check_branch
    %19 = sbr.rel (0) target = $region17
  $region16: #{_lambda_.12} parent=0 // pred_region
    _
  $region17: #{_lambda_.12} parent=0 // pred_fallthru
    _
  // Predicated region
  $region18: #{_lambda_.12} parent=0 // pred_check
    _
  $region19: #{_lambda_.12} parent=0 // pred_check_branch
    %21 = sbr.rel (0) target = $region21
  $region20: #{_lambda_.12} parent=0 // pred_region
    _
  $region21: #{_lambda_.12} parent=0 // pred_fallthru
    _
  // Predicated region
  $region22: #{_lambda_.12} parent=0 // pred_check
    _
  $region23: #{_lambda_.12} parent=0 // pred_check_branch
    %23 = sbr.rel (0) target = $region25
  $region24: #{_lambda_.12} parent=0 // pred_region
    _
  $region25: #{_lambda_.12} parent=0 // pred_fallthru
    _
  // Predicated region
  $region26: #{_lambda_.12} parent=0 // pred_check
    _
  $region27: #{_lambda_.12} parent=0 // pred_check_branch
    %25 = sbr.rel (0) target = $region29
  $region28: #{_lambda_.12} parent=0 // pred_region
    _
  $region29: #{_lambda_.12} parent=0 // pred_fallthru
    _
  %v27 = vld [vmem:[%s0] sm:$0xff]
  %v28 = vld [vmem:[%s0 + $0x8] sm:$0xff]
  %v29 = vpack.c.bf16 %v28, %v27
  %v30 = vld [vmem:[%s1] sm:$0xff]
  %v31 = vld [vmem:[%s1 + $0x8] sm:$0xff]
  %v32 = vld [vmem:[%s1 + $0x10] sm:$0xff]
  %v33 = vld [vmem:[%s1 + $0x18] sm:$0xff]
  %v34 = vpack.c.bf16 %v31, %v30
  %v35 = vpack.c.bf16 %v33, %v32
  %v36 = vld [vmem:[%s2] sm:$0x1]
  %v38 = vperm.slane %v36, 0
  %vm40 = vcmask 261120
  %v42 = vsel %vm40, %v29, 0
  %44 = vmatpush.bf16.msra.mxu0 0
  %45 = vmatpush.bf16.msra.mxu0 0
  %46 = vmatpush.bf16.msra.mxu0 0
  %47 = vmatpush.bf16.msra.mxu0 0
  %48 = vmatpush.bf16.msra.mxu0 0
  %49 = vmatpush.bf16.msra.mxu0 0
  %50 = vmatpush.bf16.msra.mxu0 %v35
  %51 = vmatpush.bf16.msra.mxu0 %v34
  %52 = vmatmul.bf16.gmra.mxu0 %v42
  %v53 = vpop.f32.mrf.mxu0
  %v54 = vadd.f32 %v38, %v53
  %v55 = vpop.f32.mrf.mxu0
  %v56 = vadd.f32 %v38, %v55
  %57 = vdwg.mxu0
  %v58 = vmax.f32 %v54, 0.0
  %v59 = vmax.f32 %v56, 0.0
  %v60 = vpack.c.bf16 %v59, %v58
  %v61 = vld [vmem:[%s3] sm:$0xff]
  %v62 = vld [vmem:[%s3 + $0x8] sm:$0xff]
  %v63 = vld [vmem:[%s3 + $0x10] sm:$0xff]
  %v64 = vld [vmem:[%s3 + $0x18] sm:$0xff]
  %v65 = vld [vmem:[%s3 + $0x20] sm:$0xff]
  %v66 = vld [vmem:[%s3 + $0x28] sm:$0xff]
  %v67 = vld [vmem:[%s3 + $0x30] sm:$0xff]
  %v68 = vld [vmem:[%s3 + $0x38] sm:$0xff]
  %v69 = vpack.c.bf16 %v62, %v61
  %v70 = vpack.c.bf16 %v64, %v63
  %v71 = vpack.c.bf16 %v66, %v65
  %v72 = vpack.c.bf16 %v68, %v67
  %v73 = vld [vmem:[%s4] sm:$0x1]
  %v75 = vperm.slane %v73, 0
  %vm77 = vcmask 523264
  %v79 = vsel %vm77, %v60, 0
  %81 = vmatpush.bf16.msra.mxu0 0
  %82 = vmatpush.bf16.msra.mxu0 0
  %83 = vmatpush.bf16.msra.mxu0 0
  %84 = vmatpush.bf16.msra.mxu0 0
  %85 = vmatpush.bf16.msra.mxu0 %v72
  %86 = vmatpush.bf16.msra.mxu0 %v71
  %87 = vmatpush.bf16.msra.mxu0 %v70
  %88 = vmatpush.bf16.msra.mxu0 %v69
  %89 = vmatmul.bf16.gmra.mxu0 %v79
  %v90 = vpop.f32.mrf.mxu0
  %v91 = vadd.f32 %v75, %v90
  %v92 = vpop.f32.mrf.mxu0
  %v93 = vadd.f32 %v75, %v92
  %94 = vdwg.mxu0
  %v95 = vadd.f32 %v91, %v27
  %v96 = vadd.f32 %v93, %v28
  %v97 = vsel %vm40, %v95, 0.0
  %98 = vadd.xlane.f32.xlu0 %v97
  %v99 = vpop.xlane.xlu0 %98
  %v100 = vsel %vm40, %v96, 0.0
  %101 = vadd.xlane.f32.xlu0 %v100
  %v102 = vpop.xlane.xlu0 %101
  %v103 = vrcp.pop 32.0
  %v104 = vmul.f32 32.0, %v103
  %v105 = vsub.f32 1.0, %v104
  %v106 = vmul.f32 %v103, %v105
  %v107 = vadd.f32 %v103, %v106
  %vm108 = vweird.f32 %v103
  %v109 = vsel %vm108, %v103, %v107
  %v110 = vmul.f32 %v99, %v109
  %v111 = vmul.f32 %v102, %v109
  %v112 = vsub.f32 %v95, %v110
  %v113 = vsub.f32 %v96, %v111
  %v114 = vmul.f32 %v112, %v112
  %v115 = vmul.f32 %v113, %v113
  %v116 = vsel %vm40, %v114, 0.0
  %117 = vadd.xlane.f32.xlu0 %v116
  %v118 = vpop.xlane.xlu0 %117
  %v119 = vsel %vm40, %v115, 0.0
  %120 = vadd.xlane.f32.xlu0 %v119
  %v121 = vpop.xlane.xlu0 %120
  %v122 = vmul.f32 %v118, %v109
  %v123 = vmul.f32 %v121, %v109
  %v124 = vadd.f32 %v122, 1e-05
  %v125 = vadd.f32 %v123, 1e-05
  %v126 = vrsqrt.pop %v124
  %v127 = vmul.f32 %v126, %v124
  %v128 = vmul.f32 %v127, %v126
  %v129 = vmul.f32 0.5, %v128
  %v130 = vsub.f32 1.5, %v129
  %v131 = vmul.f32 %v126, %v130
  %vm132 = vweird.f32 %v124
  %vm133 = vweird.f32 %v126
  %vm134 = vmor %vm132, %vm133
  %v135 = vsel %vm134, %v126, %v131
  %v136 = vrsqrt.pop %v125
  %v137 = vmul.f32 %v136, %v125
  %v138 = vmul.f32 %v137, %v136
  %v139 = vmul.f32 0.5, %v138
  %v140 = vsub.f32 1.5, %v139
  %v141 = vmul.f32 %v136, %v140
  %vm142 = vweird.f32 %v125
  %vm143 = vweird.f32 %v136
  %vm144 = vmor %vm142, %vm143
  %v145 = vsel %vm144, %v136, %v141
  %v146 = vmul.f32 %v112, %v135
  %v147 = vmul.f32 %v113, %v145
  %v148 = vld [vmem:[%s5] sm:$0x1]
  %v150 = vperm.slane %v148, 0
  %v152 = vmul.f32 %v146, %v150
  %v153 = vmul.f32 %v147, %v150
  %v154 = vld [vmem:[%s6] sm:$0x1]
  %v156 = vperm.slane %v154, 0
  %v158 = vadd.f32 %v152, %v156
  %v159 = vadd.f32 %v153, %v156
  %160 = vst.msk [vmem:[%s7] sm:$0xff] %vm40, %v158
  %161 = vst.msk [vmem:[%s7 + $0x8] sm:$0xff] %vm40, %v159
  // Predicated region
  $region30: #{_lambda_.12} parent=0 // pred_check
    _
  $region31: #{_lambda_.12} parent=0 // pred_check_branch
    %163 = sbr.rel (0) target = $region33
  $region32: #{_lambda_.12} parent=0 // pred_region
    _
  $region33: #{_lambda_.12} parent=0 // pred_fallthru
    _
  // Predicated region
  $region34: #{_lambda_.12} parent=0 // pred_check
    _
  $region35: #{_lambda_.12} parent=0 // pred_check_branch
    %165 = sbr.rel (0) target = $region37
  $region36: #{_lambda_.12} parent=0 // pred_region
    _
  $region37: #{_lambda_.12} parent=0 // pred_fallthru
    _

// kernel: _lambda_.21
$region0: #{_lambda_.21}
  #allocation0 [shape = 'u32[]', space=smem, size = 0x4, offset = 0x4, fixed_abs, tag = 'smem constant byte address 0x4 - core index']
  #allocation1 [shape = 'u32[72,128]{1,0:T(1,128)}', space=vmem, size = 0x9000, scoped, tag = 'internal scratch']
  %s0 = inlined_call_operand.vmem [shape: f32[16,32], index: 0, kind: input, shape index: {}]
  %s1 = inlined_call_operand.vmem [shape: f32[32,128], index: 1, kind: input, shape index: {}]
  %s2 = inlined_call_operand.vmem [shape: f32[1,128], index: 2, kind: input, shape index: {}]
  %s3 = inlined_call_operand.hbm [shape: f32[16,128], index: 3, kind: output, shape index: {}]
  %s4 = sld [smem:[#allocation0]]
  $region22: #{_lambda_.21} parent=0
    _
  %s6 = ssub.s32 1, %s4
  %s7 = scalar_select 0, %s6, %s4
  $region1: #{_lambda_.21} parent=0
    #allocation2 [shape = 'u8[8192]{0}', space=vmem, size = 0x2000, scoped, tag = 'output window, operand 0, single buffered']
    #allocation3 [shape = 's32[1]{0}', space=sflag, size = 0x4, scoped, tag = 'scoped memory for _lambda_.21']
    %8 = vsyncpa [#allocation3], 0
    // Predicated region
    $region2: #{_lambda_.21} parent=1 // pred_check
      _
    $region3: #{_lambda_.21} parent=1 // pred_check_branch
      %10 = sbr.rel (0) target = $region5
    $region4: #{_lambda_.21} parent=1 // pred_region
      _
    $region5: #{_lambda_.21} parent=1 // pred_fallthru
      _
    // Predicated region
    $region6: #{_lambda_.21} parent=1 // pred_check
      _
    $region7: #{_lambda_.21} parent=1 // pred_check_branch
      %12 = sbr.rel (0) target = $region9
    $region8: #{_lambda_.21} parent=1 // pred_region
      _
    $region9: #{_lambda_.21} parent=1 // pred_fallthru
      _
    // Predicated region
    $region10: #{_lambda_.21} parent=1 // pred_check
      _
    $region11: #{_lambda_.21} parent=1 // pred_check_branch
      %14 = sbr.rel (0) target = $region13
    $region12: #{_lambda_.21} parent=1 // pred_region
      _
    $region13: #{_lambda_.21} parent=1 // pred_fallthru
      _
    %v16 = vld [vmem:[%s0] sm:$0xff]
    %v17 = vld [vmem:[%s0 + $0x8] sm:$0xff]
    %v18 = vpack.c.bf16 %v17, %v16
    %v19 = vld [vmem:[%s1] sm:$0xff]
    %v20 = vld [vmem:[%s1 + $0x8] sm:$0xff]
    %v21 = vld [vmem:[%s1 + $0x10] sm:$0xff]
    %v22 = vld [vmem:[%s1 + $0x18] sm:$0xff]
    %v23 = vpack.c.bf16 %v20, %v19
    %v24 = vpack.c.bf16 %v22, %v21
    %v25 = vld [vmem:[%s2] sm:$0x1]
    %v27 = vperm.slane %v25, 0
    %vm29 = vcmask 261120
    %v31 = vsel %vm29, %v18, 0
    %33 = vmatpush.bf16.msra.mxu0 0
    %34 = vmatpush.bf16.msra.mxu0 0
    %35 = vmatpush.bf16.msra.mxu0 0
    %36 = vmatpush.bf16.msra.mxu0 0
    %37 = vmatpush.bf16.msra.mxu0 0
    %38 = vmatpush.bf16.msra.mxu0 0
    %39 = vmatpush.bf16.msra.mxu0 %v24
    %40 = vmatpush.bf16.msra.mxu0 %v23
    %41 = vmatmul.bf16.gmra.mxu0 %v31
    %v42 = vpop.f32.mrf.mxu0
    %v43 = vadd.f32 %v27, %v42
    %v44 = vpop.f32.mrf.mxu0
    %v45 = vadd.f32 %v27, %v44
    %46 = vdwg.mxu0
    %47 = vst [vmem:[#allocation2] sm:$0xff] %v43
    %48 = vst [vmem:[#allocation2 + $0x8] sm:$0xff] %v45
    // Predicated region
    $region14: #{_lambda_.21} parent=1 // pred_check
      _
    $region15: #{_lambda_.21} parent=1 // pred_check_branch
      %50 = sbr.rel (0) target = $region17
    $region16: #{_lambda_.21} parent=1 // pred_region
      %52 = vsyncadd [#allocation3], 0
      %s53 = sshll.u32 [#allocation2], 4
      %s54 = int_to_ptr.vmem [resolvable:$true] %s53
      %s55 = sshll.u32 %s3, 4
      %s56 = int_to_ptr.hbm [resolvable:$true] %s55
      %61 = dma.vmem_to_hbm [thread:$0]  %s54, 256, %s56, [#allocation3], 128, 128, 8
    $region17: #{_lambda_.21} parent=1 // pred_fallthru
      _
    // Predicated region
    $region18: #{_lambda_.21} parent=1 // pred_check
      _
    $region19: #{_lambda_.21} parent=1 // pred_check_branch
      %63 = sbr.rel (0) target = $region21
    $region20: #{_lambda_.21} parent=1 // pred_region
      %65 = dma.done [#allocation3], 256
    $region21: #{_lambda_.21} parent=1 // pred_fallthru
      _
    %66 = vsyncpa [#allocation3], 1

// kernel: _lambda_.13
$region0: #{_lambda_.13}
  #allocation0 [shape = 'u32[]', space=smem, size = 0x4, offset = 0x4, fixed_abs, tag = 'smem constant byte address 0x4 - core index']
  #allocation1 [shape = 'u32[72,128]{1,0:T(1,128)}', space=vmem, size = 0x9000, scoped, tag = 'internal scratch']
  %s0 = inlined_call_operand.vmem [shape: f32[2,8,32], index: 0, kind: input, shape index: {}, may-alias: {0,1}]
  %s1 = inlined_call_operand.vmem [shape: f32[2,8,32], index: 1, kind: input, shape index: {}, may-alias: {0,1}]
  %s2 = inlined_call_operand.vmem [shape: f32[2,8,8], index: 2, kind: input, shape index: {}]
  %s3 = inlined_call_operand.vmem [shape: f32[32,32], index: 3, kind: input, shape index: {}]
  %s4 = inlined_call_operand.vmem [shape: f32[1,32], index: 4, kind: input, shape index: {}]
  %s5 = inlined_call_operand.vmem [shape: f32[32,64], index: 5, kind: input, shape index: {}]
  %s6 = inlined_call_operand.vmem [shape: f32[1,64], index: 6, kind: input, shape index: {}]
  %s7 = inlined_call_operand.vmem [shape: f32[32,32], index: 7, kind: input, shape index: {}]
  %s8 = inlined_call_operand.vmem [shape: f32[1,32], index: 8, kind: input, shape index: {}]
  %s9 = inlined_call_operand.vmem [shape: f32[1,32], index: 9, kind: input, shape index: {}]
  %s10 = inlined_call_operand.hbm [shape: f32[1,32], index: 10, kind: input, shape index: {}]
  %s11 = inlined_call_operand.vmem [shape: f32[2,8,32], index: 11, kind: output, shape index: {}]
  %s12 = sld [smem:[#allocation0]]
  $region81: #{_lambda_.13} parent=0
    _
  %s14 = ssub.s32 1, %s12
  %s15 = scalar_select 0, %s14, %s12
  $region1: #{_lambda_.13} parent=0
    #allocation2 [shape = 'u8[512]{0}', space=vmem, size = 0x400, scoped, tag = 'input window, operand 10, single buffered']
    #allocation3 [shape = 's32[2]{0}', space=sflag, size = 0x8, scoped, tag = 'scoped memory for _lambda_.13']
    %16 = vsyncpa [#allocation3], 0
    loop: start=0, step=1, limit=4
    $region2: #{_lambda_.13} parent=1 // loop_pre_header
      _
    $region3: #{_lambda_.13} parent=1 // loop_header
      %s18 = sphi 0, %s22
      %p19 = scmp.ge.s32.totalorder %s18, 4
      %s28 = sphi 0, %s30
      %s31 = sphi 0, %s28
      %s32 = sphi 0, %s31
      %s48 = sphi 0, %s32
      %s54 = sphi 0, %s56
      %s57 = sphi 0, %s54
      %s58 = sphi 0, %s57
      %s74 = sphi 0, %s58
      %s80 = sphi 0, %s82
      %s83 = sphi 0, %s80
      %s84 = sphi 0, %s83
      %s100 = sphi 0, %s84
      %s104 = sphi 0, %s104
      %s106 = sphi 0, %s104
      %s107 = sphi 0, %s106
      %s121 = sphi 0, %s107
      %s125 = sphi 0, %s125
      %s127 = sphi 0, %s125
      %s128 = sphi 0, %s127
      %s142 = sphi 0, %s128
      %s146 = sphi 0, %s146
      %s148 = sphi 0, %s146
      %s149 = sphi 0, %s148
      %s163 = sphi 0, %s149
      %s167 = sphi 0, %s167
      %s169 = sphi 0, %s167
      %s170 = sphi 0, %s169
      %s184 = sphi 0, %s170
      %s188 = sphi 0, %s188
      %s190 = sphi 0, %s188
      %s191 = sphi 0, %s190
      %s205 = sphi 0, %s191
      %s209 = sphi 0, %s209
      %s211 = sphi 0, %s209
      %s212 = sphi 0, %s211
      %s226 = sphi 0, %s212
      %s230 = sphi 0, %s230
      %s232 = sphi 0, %s230
      %s233 = sphi 0, %s232
      %s247 = sphi 0, %s233
      %s251 = sphi 0, %s251
      %s253 = sphi 0, %s251
      %s254 = sphi 0, %s253
      %s268 = sphi 0, %s254
      %s274 = sphi 0, %s276
      %s277 = sphi 0, %s274
      %s278 = sphi 0, %s277
      %s294 = sphi 0, %s278
    $region4: #{_lambda_.13} parent=1 // loop_header_branch
      %21 = sbr.rel (%p19) target = $region8
    $region5: #{_lambda_.13} parent=1 // loop_body
      %s23 = ssub.s32 %s18, 1
      %s24 = ssub.s32 %s18, 2
      %s25 = sadd.s32 %s18, 1
      %s26 = ssub.s32 %s18, %s25
      %p27 = scmp.eq.s32.totalorder %s26, 0
      %s29 = sadd.s32 %s28, 1
      %s30 = scalar_select %p27, %s28, %s29
      %p33 = pneg %p27
      %p34 = scmp.eq.s32.totalorder %s18, 1
      %p35 = por %p33, %p34
      %p36 = scmp.ne.s32.totalorder %s28, %s31
      %p37 = scmp.eq.s32.totalorder %s18, 0
      %p38 = por %p36, %p37
      %p39 = scmp.ne.s32.totalorder %s28, %s31
      %p40 = scmp.eq.s32.totalorder %s23, 1
      %p41 = por %p39, %p40
      %p42 = scmp.ne.s32.totalorder %s31, %s32
      %p43 = scmp.eq.s32.totalorder %s23, 0
      %p44 = por %p42, %p43
      %p45 = scmp.ne.s32.totalorder %s31, %s32
      %p46 = scmp.eq.s32.totalorder %s24, 1
      %p47 = por %p45, %p46
      %p49 = scmp.ne.s32.totalorder %s32, %s48
      %p50 = scmp.eq.s32.totalorder %s24, 0
      %p51 = por %p49, %p50
      %s52 = ssub.s32 %s18, %s25
      %p53 = scmp.eq.s32.totalorder %s52, 0
      %s55 = sadd.s32 %s54, 1
      %s56 = scalar_select %p53, %s54, %s55
      %p59 = pneg %p53
      %p60 = scmp.eq.s32.totalorder %s18, 1
      %p61 = por %p59, %p60
      %p62 = scmp.ne.s32.totalorder %s54, %s57
      %p63 = scmp.eq.s32.totalorder %s18, 0
      %p64 = por %p62, %p63
      %p65 = scmp.ne.s32.totalorder %s54, %s57
      %p66 = scmp.eq.s32.totalorder %s23, 1
      %p67 = por %p65, %p66
      %p68 = scmp.ne.s32.totalorder %s57, %s58
      %p69 = scmp.eq.s32.totalorder %s23, 0
      %p70 = por %p68, %p69
      %p71 = scmp.ne.s32.totalorder %s57, %s58
      %p72 = scmp.eq.s32.totalorder %s24, 1
      %p73 = por %p71, %p72
      %p75 = scmp.ne.s32.totalorder %s58, %s74
      %p76 = scmp.eq.s32.totalorder %s24, 0
      %p77 = por %p75, %p76
      %s78 = ssub.s32 %s18, %s25
      %p79 = scmp.eq.s32.totalorder %s78, 0
      %s81 = sadd.s32 %s80, 1
      %s82 = scalar_select %p79, %s80, %s81
      %p85 = pneg %p79
      %p86 = scmp.eq.s32.totalorder %s18, 1
      %p87 = por %p85, %p86
      %p88 = scmp.ne.s32.totalorder %s80, %s83
      %p89 = scmp.eq.s32.totalorder %s18, 0
      %p90 = por %p88, %p89
      %p91 = scmp.ne.s32.totalorder %s80, %s83
      %p92 = scmp.eq.s32.totalorder %s23, 1
      %p93 = por %p91, %p92
      %p94 = scmp.ne.s32.totalorder %s83, %s84
      %p95 = scmp.eq.s32.totalorder %s23, 0
      %p96 = por %p94, %p95
      %p97 = scmp.ne.s32.totalorder %s83, %s84
      %p98 = scmp.eq.s32.totalorder %s24, 1
      %p99 = por %p97, %p98
      %p101 = scmp.ne.s32.totalorder %s84, %s100
      %p102 = scmp.eq.s32.totalorder %s24, 0
      %p103 = por %p101, %p102
      %s105 = sadd.s32 %s104, 1
      %p108 = scmp.eq.s32.totalorder %s18, 1
      %p109 = scmp.ne.s32.totalorder %s104, %s106
      %p110 = scmp.eq.s32.totalorder %s18, 0
      %p111 = por %p109, %p110
      %p112 = scmp.ne.s32.totalorder %s104, %s106
      %p113 = scmp.eq.s32.totalorder %s23, 1
      %p114 = por %p112, %p113
      %p115 = scmp.ne.s32.totalorder %s106, %s107
      %p116 = scmp.eq.s32.totalorder %s23, 0
      %p117 = por %p115, %p116
      %p118 = scmp.ne.s32.totalorder %s106, %s107
      %p119 = scmp.eq.s32.totalorder %s24, 1
      %p120 = por %p118, %p119
      %p122 = scmp.ne.s32.totalorder %s107, %s121
      %p123 = scmp.eq.s32.totalorder %s24, 0
      %p124 = por %p122, %p123
      %s126 = sadd.s32 %s125, 1
      %p129 = scmp.eq.s32.totalorder %s18, 1
      %p130 = scmp.ne.s32.totalorder %s125, %s127
      %p131 = scmp.eq.s32.totalorder %s18, 0
      %p132 = por %p130, %p131
      %p133 = scmp.ne.s32.totalorder %s125, %s127
      %p134 = scmp.eq.s32.totalorder %s23, 1
      %p135 = por %p133, %p134
      %p136 = scmp.ne.s32.totalorder %s127, %s128
      %p137 = scmp.eq.s32.totalorder %s23, 0
      %p138 = por %p136, %p137
      %p139 = scmp.ne.s32.totalorder %s127, %s128
      %p140 = scmp.eq.s32.totalorder %s24, 1
      %p141 = por %p139, %p140
      %p143 = scmp.ne.s32.totalorder %s128, %s142
      %p144 = scmp.eq.s32.totalorder %s24, 0
      %p145 = por %p143, %p144
      %s147 = sadd.s32 %s146, 1
      %p150 = scmp.eq.s32.totalorder %s18, 1
      %p151 = scmp.ne.s32.totalorder %s146, %s148
      %p152 = scmp.eq.s32.totalorder %s18, 0
      %p153 = por %p151, %p152
      %p154 = scmp.ne.s32.totalorder %s146, %s148
      %p155 = scmp.eq.s32.totalorder %s23, 1
      %p156 = por %p154, %p155
      %p157 = scmp.ne.s32.totalorder %s148, %s149
      %p158 = scmp.eq.s32.totalorder %s23, 0
      %p159 = por %p157, %p158
      %p160 = scmp.ne.s32.totalorder %s148, %s149
      %p161 = scmp.eq.s32.totalorder %s24, 1
      %p162 = por %p160, %p161
      %p164 = scmp.ne.s32.totalorder %s149, %s163
      %p165 = scmp.eq.s32.totalorder %s24, 0
      %p166 = por %p164, %p165
      %s168 = sadd.s32 %s167, 1
      %p171 = scmp.eq.s32.totalorder %s18, 1
      %p172 = scmp.ne.s32.totalorder %s167, %s169
      %p173 = scmp.eq.s32.totalorder %s18, 0
      %p174 = por %p172, %p173
      %p175 = scmp.ne.s32.totalorder %s167, %s169
      %p176 = scmp.eq.s32.totalorder %s23, 1
      %p177 = por %p175, %p176
      %p178 = scmp.ne.s32.totalorder %s169, %s170
      %p179 = scmp.eq.s32.totalorder %s23, 0
      %p180 = por %p178, %p179
      %p181 = scmp.ne.s32.totalorder %s169, %s170
      %p182 = scmp.eq.s32.totalorder %s24, 1
      %p183 = por %p181, %p182
      %p185 = scmp.ne.s32.totalorder %s170, %s184
      %p186 = scmp.eq.s32.totalorder %s24, 0
      %p187 = por %p185, %p186
      %s189 = sadd.s32 %s188, 1
      %p192 = scmp.eq.s32.totalorder %s18, 1
      %p193 = scmp.ne.s32.totalorder %s188, %s190
      %p194 = scmp.eq.s32.totalorder %s18, 0
      %p195 = por %p193, %p194
      %p196 = scmp.ne.s32.totalorder %s188, %s190
      %p197 = scmp.eq.s32.totalorder %s23, 1
      %p198 = por %p196, %p197
      %p199 = scmp.ne.s32.totalorder %s190, %s191
      %p200 = scmp.eq.s32.totalorder %s23, 0
      %p201 = por %p199, %p200
      %p202 = scmp.ne.s32.totalorder %s190, %s191
      %p203 = scmp.eq.s32.totalorder %s24, 1
      %p204 = por %p202, %p203
      %p206 = scmp.ne.s32.totalorder %s191, %s205
      %p207 = scmp.eq.s32.totalorder %s24, 0
      %p208 = por %p206, %p207
      %s210 = sadd.s32 %s209, 1
      %p213 = scmp.eq.s32.totalorder %s18, 1
      %p214 = scmp.ne.s32.totalorder %s209, %s211
      %p215 = scmp.eq.s32.totalorder %s18, 0
      %p216 = por %p214, %p215
      %p217 = scmp.ne.s32.totalorder %s209, %s211
      %p218 = scmp.eq.s32.totalorder %s23, 1
      %p219 = por %p217, %p218
      %p220 = scmp.ne.s32.totalorder %s211, %s212
      %p221 = scmp.eq.s32.totalorder %s23, 0
      %p222 = por %p220, %p221
      %p223 = scmp.ne.s32.totalorder %s211, %s212
      %p224 = scmp.eq.s32.totalorder %s24, 1
      %p225 = por %p223, %p224
      %p227 = scmp.ne.s32.totalorder %s212, %s226
      %p228 = scmp.eq.s32.totalorder %s24, 0
      %p229 = por %p227, %p228
      %s231 = sadd.s32 %s230, 1
      %p234 = scmp.eq.s32.totalorder %s18, 1
      %p235 = scmp.ne.s32.totalorder %s230, %s232
      %p236 = scmp.eq.s32.totalorder %s18, 0
      %p237 = por %p235, %p236
      %p238 = scmp.ne.s32.totalorder %s230, %s232
      %p239 = scmp.eq.s32.totalorder %s23, 1
      %p240 = por %p238, %p239
      %p241 = scmp.ne.s32.totalorder %s232, %s233
      %p242 = scmp.eq.s32.totalorder %s23, 0
      %p243 = por %p241, %p242
      %p244 = scmp.ne.s32.totalorder %s232, %s233
      %p245 = scmp.eq.s32.totalorder %s24, 1
      %p246 = por %p244, %p245
      %p248 = scmp.ne.s32.totalorder %s233, %s247
      %p249 = scmp.eq.s32.totalorder %s24, 0
      %p250 = por %p248, %p249
      %s252 = sadd.s32 %s251, 1
      %p255 = scmp.eq.s32.totalorder %s18, 1
      %p256 = scmp.ne.s32.totalorder %s251, %s253
      %p257 = scmp.eq.s32.totalorder %s18, 0
      %p258 = por %p256, %p257
      %p259 = scmp.ne.s32.totalorder %s251, %s253
      %p260 = scmp.eq.s32.totalorder %s23, 1
      %p261 = por %p259, %p260
      %p262 = scmp.ne.s32.totalorder %s253, %s254
      %p263 = scmp.eq.s32.totalorder %s23, 0
      %p264 = por %p262, %p263
      %p265 = scmp.ne.s32.totalorder %s253, %s254
      %p266 = scmp.eq.s32.totalorder %s24, 1
      %p267 = por %p265, %p266
      %p269 = scmp.ne.s32.totalorder %s254, %s268
      %p270 = scmp.eq.s32.totalorder %s24, 0
      %p271 = por %p269, %p270
      %s272 = ssub.s32 %s18, %s25
      %p273 = scmp.eq.s32.totalorder %s272, 0
      %s275 = sadd.s32 %s274, 1
      %s276 = scalar_select %p273, %s274, %s275
      %p279 = pneg %p273
      %p280 = scmp.eq.s32.totalorder %s18, 1
      %p281 = por %p279, %p280
      %p282 = scmp.ne.s32.totalorder %s274, %s277
      %p283 = scmp.eq.s32.totalorder %s18, 0
      %p284 = por %p282, %p283
      %p285 = scmp.ne.s32.totalorder %s274, %s277
      %p286 = scmp.eq.s32.totalorder %s23, 1
      %p287 = por %p285, %p286
      %p288 = scmp.ne.s32.totalorder %s277, %s278
      %p289 = scmp.eq.s32.totalorder %s23, 0
      %p290 = por %p288, %p289
      %p291 = scmp.ne.s32.totalorder %s277, %s278
      %p292 = scmp.eq.s32.totalorder %s24, 1
      %p293 = por %p291, %p292
      %p295 = scmp.ne.s32.totalorder %s278, %s294
      %p296 = scmp.eq.s32.totalorder %s24, 0
      %p297 = por %p295, %p296
      %p298 = scmp.le.s32.totalorder 1, %s18
      %p299 = scmp.lt.s32.totalorder %s18, 3
      %p300 = pnand %p298, %p299
      %p301 = pneg %p300
      // Predicated region
      $region9: #{_lambda_.13} parent=5 // pred_check
        _
      $region10: #{_lambda_.13} parent=5 // pred_check_branch
        %303 = sbr.rel (%p300) target = $region12
      $region11: #{_lambda_.13} parent=5 // pred_region
        %s304 = ssub.s32 %s18, 1
        // Predicated region
        $region13: #{_lambda_.13} parent=11 // pred_check
          %p305 = pneg %p117
        $region14: #{_lambda_.13} parent=11 // pred_check_branch
          %307 = sbr.rel (%p305) target = $region16
        $region15: #{_lambda_.13} parent=11 // pred_region
          _
        $region16: #{_lambda_.13} parent=11 // pred_fallthru
          _
        // Predicated region
        $region17: #{_lambda_.13} parent=11 // pred_check
          %p308 = pneg %p138
        $region18: #{_lambda_.13} parent=11 // pred_check_branch
          %310 = sbr.rel (%p308) target = $region20
        $region19: #{_lambda_.13} parent=11 // pred_region
          _
        $region20: #{_lambda_.13} parent=11 // pred_fallthru
          _
        // Predicated region
        $region21: #{_lambda_.13} parent=11 // pred_check
          %p311 = pneg %p159
        $region22: #{_lambda_.13} parent=11 // pred_check_branch
          %313 = sbr.rel (%p311) target = $region24
        $region23: #{_lambda_.13} parent=11 // pred_region
          _
        $region24: #{_lambda_.13} parent=11 // pred_fallthru
          _
        // Predicated region
        $region25: #{_lambda_.13} parent=11 // pred_check
          %p314 = pneg %p180
        $region26: #{_lambda_.13} parent=11 // pred_check_branch
          %316 = sbr.rel (%p314) target = $region28
        $region27: #{_lambda_.13} parent=11 // pred_region
          _
        $region28: #{_lambda_.13} parent=11 // pred_fallthru
          _
        // Predicated region
        $region29: #{_lambda_.13} parent=11 // pred_check
          %p317 = pneg %p201
        $region30: #{_lambda_.13} parent=11 // pred_check_branch
          %319 = sbr.rel (%p317) target = $region32
        $region31: #{_lambda_.13} parent=11 // pred_region
          _
        $region32: #{_lambda_.13} parent=11 // pred_fallthru
          _
        // Predicated region
        $region33: #{_lambda_.13} parent=11 // pred_check
          %p320 = pneg %p222
        $region34: #{_lambda_.13} parent=11 // pred_check_branch
          %322 = sbr.rel (%p320) target = $region36
        $region35: #{_lambda_.13} parent=11 // pred_region
          _
        $region36: #{_lambda_.13} parent=11 // pred_fallthru
          _
        // Predicated region
        $region37: #{_lambda_.13} parent=11 // pred_check
          %p323 = pneg %p243
        $region38: #{_lambda_.13} parent=11 // pred_check_branch
          %325 = sbr.rel (%p323) target = $region40
        $region39: #{_lambda_.13} parent=11 // pred_region
          _
        $region40: #{_lambda_.13} parent=11 // pred_fallthru
          _
        // Predicated region
        $region41: #{_lambda_.13} parent=11 // pred_check
          %p326 = pneg %p264
        $region42: #{_lambda_.13} parent=11 // pred_check_branch
          %328 = sbr.rel (%p326) target = $region44
        $region43: #{_lambda_.13} parent=11 // pred_region
          %330 = vsyncadd [#allocation3], 0
          %s332 = sshll.u32 %s10, 4
          %s333 = int_to_ptr.hbm [resolvable:$true] %s332
          %s334 = sshll.u32 [#allocation2], 4
          %s335 = int_to_ptr.vmem [resolvable:$true] %s334
          %337 = dma.hbm_to_vmem [thread:$0]  %s333, 16, %s335, [#allocation3]
        $region44: #{_lambda_.13} parent=11 // pred_fallthru
          _
      $region12: #{_lambda_.13} parent=5 // pred_fallthru
        _
      %p338 = scmp.lt.s32.totalorder %s18, 2
      // Predicated region
      $region45: #{_lambda_.13} parent=5 // pred_check
        %p339 = pneg %p338
      $region46: #{_lambda_.13} parent=5 // pred_check_branch
        %341 = sbr.rel (%p339) target = $region48
      $region47: #{_lambda_.13} parent=5 // pred_region
        // Predicated region
        $region49: #{_lambda_.13} parent=47 // pred_check
          %p342 = pneg %p38
        $region50: #{_lambda_.13} parent=47 // pred_check_branch
          %344 = sbr.rel (%p342) target = $region52
        $region51: #{_lambda_.13} parent=47 // pred_region
          %p345 = scmp.lt.s32.totalorder %s18, 1
          %s346 = scalar_select %p345, %s18, 1
          %s347 = smul.addr %s346, 8
          %s348 = scalar_lea.vmem %s0, %s347
        $region52: #{_lambda_.13} parent=47 // pred_fallthru
          _
        // Predicated region
        $region53: #{_lambda_.13} parent=47 // pred_check
          %p349 = pneg %p64
        $region54: #{_lambda_.13} parent=47 // pred_check_branch
          %351 = sbr.rel (%p349) target = $region56
        $region55: #{_lambda_.13} parent=47 // pred_region
          %p352 = scmp.lt.s32.totalorder %s18, 1
          %s353 = scalar_select %p352, %s18, 1
          %s354 = smul.addr %s353, 8
          %s355 = scalar_lea.vmem %s1, %s354
        $region56: #{_lambda_.13} parent=47 // pred_fallthru
          _
        // Predicated region
        $region57: #{_lambda_.13} parent=47 // pred_check
          %p356 = pneg %p90
        $region58: #{_lambda_.13} parent=47 // pred_check_branch
          %358 = sbr.rel (%p356) target = $region60
        $region59: #{_lambda_.13} parent=47 // pred_region
          %p359 = scmp.lt.s32.totalorder %s18, 1
          %s360 = scalar_select %p359, %s18, 1
          %s361 = smul.addr %s360, 8
          %s362 = scalar_lea.vmem %s2, %s361
        $region60: #{_lambda_.13} parent=47 // pred_fallthru
          _
      $region48: #{_lambda_.13} parent=5 // pred_fallthru
        _
      %p363 = scmp.le.s32.totalorder 1, %s18
      %p364 = scmp.lt.s32.totalorder %s18, 3
      %p365 = pnand %p363, %p364
      %p366 = pneg %p365
      // Predicated region
      $region61: #{_lambda_.13} parent=5 // pred_check
        _
      $region62: #{_lambda_.13} parent=5 // pred_check_branch
        %368 = sbr.rel (%p365) target = $region64
      $region63: #{_lambda_.13} parent=5 // pred_region
        %s369 = ssub.s32 %s18, 1
        // Predicated region
        $region65: #{_lambda_.13} parent=63 // pred_check
          %p370 = pneg %p264
        $region66: #{_lambda_.13} parent=63 // pred_check_branch
          %372 = sbr.rel (%p370) target = $region68
        $region67: #{_lambda_.13} parent=63 // pred_region
          %374 = dma.done [#allocation3], 16
        $region68: #{_lambda_.13} parent=63 // pred_fallthru
          _
        %p375 = scmp.lt.s32.totalorder %s23, 1
        %s376 = scalar_select %p375, %s23, 1
        %s377 = smul.addr %s376, 8
        %s378 = scalar_lea.vmem %s0, %s377
        %p379 = pneg %p44
        %p380 = pneg %p41
        %p381 = scmp.lt.s32.totalorder %s23, 1
        %s382 = scalar_select %p381, %s23, 1
        %s383 = smul.addr %s382, 8
        %s384 = scalar_lea.vmem %s1, %s383
        %p385 = pneg %p70
        %p386 = pneg %p67
        %p387 = scmp.lt.s32.totalorder %s23, 1
        %s388 = scalar_select %p387, %s23, 1
        %s389 = smul.addr %s388, 8
        %s390 = scalar_lea.vmem %s2, %s389
        %p391 = pneg %p96
        %p392 = pneg %p93
        %p393 = pneg %p117
        %p394 = pneg %p114
        %p395 = pneg %p138
        %p396 = pneg %p135
        %p397 = pneg %p159
        %p398 = pneg %p156
        %p399 = pneg %p180
        %p400 = pneg %p177
        %p401 = pneg %p201
        %p402 = pneg %p198
        %p403 = pneg %p222
        %p404 = pneg %p219
        %p405 = pneg %p243
        %p406 = pneg %p240
        %p407 = pneg %p264
        %p408 = pneg %p261
        %p409 = pneg %p290
        %p410 = pneg %p287
        %p411 = scmp.lt.s32.totalorder %s23, 1
        %s412 = scalar_select %p411, %s23, 1
        %s413 = smul.addr %s412, 8
        %s414 = scalar_lea.vmem %s11, %s413
        %p415 = scmp.lt.s32.totalorder %s23, 1
        %s416 = scalar_select %p415, %s23, 1
        %s417 = smul.addr %s416, 8
        %s418 = scalar_lea.vmem %s0, %s417
        %p419 = scmp.lt.s32.totalorder %s23, 1
        %s420 = scalar_select %p419, %s23, 1
        %s421 = smul.addr %s420, 8
        %s422 = scalar_lea.vmem %s1, %s421
        %p423 = scmp.lt.s32.totalorder %s23, 1
        %s424 = scalar_select %p423, %s23, 1
        %s425 = smul.addr %s424, 8
        %s426 = scalar_lea.vmem %s2, %s425
        %p427 = scmp.lt.s32.totalorder %s23, 1
        %s428 = scalar_select %p427, %s23, 1
        %s429 = smul.addr %s428, 8
        %s430 = scalar_lea.vmem %s11, %s429
        %v432 = vld [vmem:[%s418] sm:$0xff]
        %v433 = vld [vmem:[%s422] sm:$0xff]
        %v434 = vld [vmem:[%s426] sm:$0xff]
        %v435 = vpack.c.bf16 %v432, %v432
        %v436 = vld [vmem:[%s3] sm:$0xff]
        %v437 = vld [vmem:[%s3 + $0x8] sm:$0xff]
        %v438 = vld [vmem:[%s3 + $0x10] sm:$0xff]
        %v439 = vld [vmem:[%s3 + $0x18] sm:$0xff]
        %v440 = vpack.c.bf16 %v437, %v436
        %v441 = vpack.c.bf16 %v439, %v438
        %v442 = vld [vmem:[%s4] sm:$0x1]
        %v444 = vperm.slane %v442, 0
        %vm446 = vcmask 261120
        %v448 = vsel %vm446, %v435, 0
        %450 = vmatpush.bf16.msra.mxu0 0
        %451 = vmatpush.bf16.msra.mxu0 0
        %452 = vmatpush.bf16.msra.mxu0 0
        %453 = vmatpush.bf16.msra.mxu0 0
        %454 = vmatpush.bf16.msra.mxu0 0
        %455 = vmatpush.bf16.msra.mxu0 0
        %456 = vmatpush.bf16.msra.mxu0 %v441
        %457 = vmatpush.bf16.msra.mxu0 %v440
        %458 = vmatmul.bf16.gmra.mxu0 %v448
        %v459 = vpop.f32.mrf.mxu0
        %v460 = vadd.f32 %v444, %v459
        %v461 = vpop.f32.mrf.mxu0
        %462 = vdwg.mxu0
        %v463 = vpack.c.bf16 %v433, %v433
        %v464 = vld [vmem:[%s5] sm:$0xff]
        %v465 = vld [vmem:[%s5 + $0x8] sm:$0xff]
        %v466 = vld [vmem:[%s5 + $0x10] sm:$0xff]
        %v467 = vld [vmem:[%s5 + $0x18] sm:$0xff]
        %v468 = vpack.c.bf16 %v465, %v464
        %v469 = vpack.c.bf16 %v467, %v466
        %v470 = vld [vmem:[%s6] sm:$0x1]
        %v472 = vperm.slane %v470, 0
        %v475 = vsel %vm446, %v463, 0
        %477 = vmatpush.bf16.msra.mxu0 0
        %478 = vmatpush.bf16.msra.mxu0 0
        %479 = vmatpush.bf16.msra.mxu0 0
        %480 = vmatpush.bf16.msra.mxu0 0
        %481 = vmatpush.bf16.msra.mxu0 0
        %482 = vmatpush.bf16.msra.mxu0 0
        %483 = vmatpush.bf16.msra.mxu0 %v469
        %484 = vmatpush.bf16.msra.mxu0 %v468
        %485 = vmatmul.bf16.gmra.mxu0 %v475
        %v486 = vpop.f32.mrf.mxu0
        %v487 = vadd.f32 %v472, %v486
        %v488 = vpop.f32.mrf.mxu0
        %489 = vdwg.mxu0
        %v490 = vld [vmem:[%s7] sm:$0xff]
        %v491 = vld [vmem:[%s7 + $0x8] sm:$0xff]
        %v492 = vld [vmem:[%s7 + $0x10] sm:$0xff]
        %v493 = vld [vmem:[%s7 + $0x18] sm:$0xff]
        %v494 = vpack.c.bf16 %v460, %v460
        %495 = vxpose.xlu0.b32.start [1/16] %v487, 128
        %496 = vxpose.xlu0.b32.cont [2/16] 0.0, 128
        %497 = vxpose.xlu0.b32.cont [3/16] 0.0, 128
        %498 = vxpose.xlu0.b32.cont [4/16] 0.0, 128
        %499 = vxpose.xlu0.b32.cont [5/16] 0.0, 128
        %500 = vxpose.xlu0.b32.cont [6/16] 0.0, 128
        %501 = vxpose.xlu0.b32.cont [7/16] 0.0, 128
        %502 = vxpose.xlu0.b32.cont [8/16] 0.0, 128
        %503 = vxpose.xlu0.b32.cont [9/16] 0.0, 128
        %504 = vxpose.xlu0.b32.cont [10/16] 0.0, 128
        %505 = vxpose.xlu0.b32.cont [11/16] 0.0, 128
        %506 = vxpose.xlu0.b32.cont [12/16] 0.0, 128
        %507 = vxpose.xlu0.b32.cont [13/16] 0.0, 128
        %508 = vxpose.xlu0.b32.cont [14/16] 0.0, 128
        %509 = vxpose.xlu0.b32.cont [15/16] 0.0, 128
        %510 = vxpose.xlu0.b32.end [16/16] 0.0, 128
        %v511 = vpop.trf.xlu0
        %v512 = vpop.trf.xlu0
        %v513 = vpop.trf.xlu0
        %v514 = vpop.trf.xlu0
        %v515 = vpop.trf.xlu0
        %v516 = vpop.trf.xlu0
        %v517 = vpop.trf.xlu0
        %v518 = vpop.trf.xlu0
        %v519 = vpop.trf.xlu0
        %v520 = vpop.trf.xlu0
        %v521 = vpop.trf.xlu0
        %v522 = vpop.trf.xlu0
        %v523 = vpop.trf.xlu0
        %v524 = vpop.trf.xlu0
        %v525 = vpop.trf.xlu0
        %v526 = vpop.trf.xlu0
        %v527 = vpack.c.bf16 %v511, %v511
        %vm528 = vcmask 64512
        %v530 = vsel %vm528, %v494, 0
        %vm532 = vcmask 1043456
        %v534 = vsel %vm532, %v527, 0
        %536 = vmatpush.bf16.msra.mxu0 0
        %537 = vmatpush.bf16.msra.mxu0 0
        %538 = vmatpush.bf16.msra.mxu0 0
        %539 = vmatpush.bf16.msra.mxu0 0
        %540 = vmatpush.bf16.msra.mxu0 0
        %541 = vmatpush.bf16.msra.mxu0 0
        %542 = vmatpush.bf16.msra.mxu0 0
        %543 = vmatpush.bf16.msra.mxu0 %v534
        %544 = vmatmul.bf16.gmra.mxu0 %v530
        %v545 = vpop.f32.mrf.mxu0
        %v546 = vadd.f32 0.0, %v545
        %v547 = vpop.f32.mrf.mxu0
        %548 = vdwg.mxu0
        %v549 = vmul.f32 %v546, 0.35355338
        %vm550 = vcmp.gt.f32.partialorder %v434, 0.0
        %v551 = vsel %vm550, %v549, -1e+09
        %v552 = vsel %vm528, %v551, -inf
        %553 = vmax.xlane.f32.xlu0 %v552
        %v554 = vpop.xlane.xlu0 %553
        %v555 = vsub.f32 %v551, %v554
        %v556 = vmul.f32 %v555, 1.442695
        %v557 = vpow.pop %v556
        %v558 = vsel %vm528, %v557, 0.0
        %559 = vadd.xlane.f32.xlu0 %v558
        %v560 = vpop.xlane.xlu0 %559
        %v561 = vrcp.pop %v560
        %v562 = vmul.f32 %v557, %v561
        %v563 = vpack.c.bf16 %v562, %v562
        %v564 = vpack.c.bf16 %v487, %v487
        %566 = vrot.lane.b32.xlu0 %v564, 96
        %v567 = vpop.permute.xlu0 %566
        %v569 = vsel %vm528, %v563, 0
        %v572 = vsel %vm532, %v567, 0
        %574 = vmatpush.bf16.msra.mxu0 0
        %575 = vmatpush.bf16.msra.mxu0 0
        %576 = vmatpush.bf16.msra.mxu0 0
        %577 = vmatpush.bf16.msra.mxu0 0
        %578 = vmatpush.bf16.msra.mxu0 0
        %579 = vmatpush.bf16.msra.mxu0 0
        %580 = vmatpush.bf16.msra.mxu0 0
        %581 = vmatpush.bf16.msra.mxu0 %v572
        %582 = vmatmul.bf16.gmra.mxu0 %v569
        %v583 = vpop.f32.mrf.mxu0
        %v584 = vadd.f32 0.0, %v583
        %v585 = vpop.f32.mrf.mxu0
        %586 = vdwg.mxu0
        %v587 = vpack.c.bf16 %v584, %v584
        %v588 = vpack.c.bf16 %v490, %v490
        %590 = vrot.lane.b32.xlu0 %v487, 120
        %v591 = vpop.permute.xlu0 %590
        %593 = vxpose.xlu0.b32.start [1/16] %v591, 128
        %594 = vxpose.xlu0.b32.cont [2/16] 0.0, 128
        %595 = vxpose.xlu0.b32.cont [3/16] 0.0, 128
        %596 = vxpose.xlu0.b32.cont [4/16] 0.0, 128
        %597 = vxpose.xlu0.b32.cont [5/16] 0.0, 128
        %598 = vxpose.xlu0.b32.cont [6/16] 0.0, 128
        %599 = vxpose.xlu0.b32.cont [7/16] 0.0, 128
        %600 = vxpose.xlu0.b32.cont [8/16] 0.0, 128
        %601 = vxpose.xlu0.b32.cont [9/16] 0.0, 128
        %602 = vxpose.xlu0.b32.cont [10/16] 0.0, 128
        %603 = vxpose.xlu0.b32.cont [11/16] 0.0, 128
        %604 = vxpose.xlu0.b32.cont [12/16] 0.0, 128
        %605 = vxpose.xlu0.b32.cont [13/16] 0.0, 128
        %606 = vxpose.xlu0.b32.cont [14/16] 0.0, 128
        %607 = vxpose.xlu0.b32.cont [15/16] 0.0, 128
        %608 = vxpose.xlu0.b32.end [16/16] 0.0, 128
        %v609 = vpop.trf.xlu0
        %v610 = vpop.trf.xlu0
        %v611 = vpop.trf.xlu0
        %v612 = vpop.trf.xlu0
        %v613 = vpop.trf.xlu0
        %v614 = vpop.trf.xlu0
        %v615 = vpop.trf.xlu0
        %v616 = vpop.trf.xlu0
        %v617 = vpop.trf.xlu0
        %v618 = vpop.trf.xlu0
        %v619 = vpop.trf.xlu0
        %v620 = vpop.trf.xlu0
        %v621 = vpop.trf.xlu0
        %v622 = vpop.trf.xlu0
        %v623 = vpop.trf.xlu0
        %v624 = vpop.trf.xlu0
        %v625 = vpack.c.bf16 %v609, %v609
        %627 = vrot.lane.b32.xlu0 %v494, 120
        %v628 = vpop.permute.xlu0 %627
        %v630 = vsel %vm528, %v628, 0
        %v633 = vsel %vm532, %v625, 0
        %635 = vmatpush.bf16.msra.mxu0 0
        %636 = vmatpush.bf16.msra.mxu0 0
        %637 = vmatpush.bf16.msra.mxu0 0
        %638 = vmatpush.bf16.msra.mxu0 0
        %639 = vmatpush.bf16.msra.mxu0 0
        %640 = vmatpush.bf16.msra.mxu0 0
        %641 = vmatpush.bf16.msra.mxu0 0
        %642 = vmatpush.bf16.msra.mxu0 %v633
        %643 = vmatmul.bf16.gmra.mxu0 %v630
        %v644 = vpop.f32.mrf.mxu0
        %v645 = vadd.f32 0.0, %v644
        %v646 = vpop.f32.mrf.mxu0
        %647 = vdwg.mxu0
        %v648 = vmul.f32 %v645, 0.35355338
        %v649 = vsel %vm550, %v648, -1e+09
        %v650 = vsel %vm528, %v649, -inf
        %651 = vmax.xlane.f32.xlu0 %v650
        %v652 = vpop.xlane.xlu0 %651
        %v653 = vsub.f32 %v649, %v652
        %v654 = vmul.f32 %v653, 1.442695
        %v655 = vpow.pop %v654
        %v656 = vsel %vm528, %v655, 0.0
        %657 = vadd.xlane.f32.xlu0 %v656
        %v658 = vpop.xlane.xlu0 %657
        %v659 = vrcp.pop %v658
        %v660 = vmul.f32 %v655, %v659
        %v661 = vpack.c.bf16 %v660, %v660
        %662 = vrot.lane.b32.xlu0 %v564, 88
        %v663 = vpop.permute.xlu0 %662
        %v665 = vsel %vm528, %v661, 0
        %v668 = vsel %vm532, %v663, 0
        %670 = vmatpush.bf16.msra.mxu0 0
        %671 = vmatpush.bf16.msra.mxu0 0
        %672 = vmatpush.bf16.msra.mxu0 0
        %673 = vmatpush.bf16.msra.mxu0 0
        %674 = vmatpush.bf16.msra.mxu0 0
        %675 = vmatpush.bf16.msra.mxu0 0
        %676 = vmatpush.bf16.msra.mxu0 0
        %677 = vmatpush.bf16.msra.mxu0 %v668
        %678 = vmatmul.bf16.gmra.mxu0 %v665
        %v679 = vpop.f32.mrf.mxu0
        %v680 = vadd.f32 0.0, %v679
        %v681 = vpop.f32.mrf.mxu0
        %682 = vdwg.mxu0
        %v683 = vpack.c.bf16 %v680, %v680
        %v684 = vpack.c.bf16 %v491, %v491
        %v686 = vsel %vm528, %v683, 0
        %v689 = vsel %vm532, %v684, 0
        %691 = vmatpush.bf16.msra.mxu0 0
        %692 = vmatpush.bf16.msra.mxu0 0
        %693 = vmatpush.bf16.msra.mxu0 0
        %694 = vmatpush.bf16.msra.mxu0 0
        %695 = vmatpush.bf16.msra.mxu0 0
        %696 = vmatpush.bf16.msra.mxu0 0
        %697 = vmatpush.bf16.msra.mxu0 0
        %698 = vmatpush.bf16.msra.mxu0 %v689
        %699 = vmatmul.bf16.gmra.mxu0 %v686
        %v700 = vpop.f32.mrf.mxu0
        %v701 = vadd.f32 0.0, %v700
        %v702 = vpop.f32.mrf.mxu0
        %703 = vdwg.mxu0
        %v705 = vsel %vm528, %v587, 0
        %v708 = vsel %vm532, %v588, 0
        %710 = vmatpush.bf16.msra.mxu0 0
        %711 = vmatpush.bf16.msra.mxu0 0
        %712 = vmatpush.bf16.msra.mxu0 0
        %713 = vmatpush.bf16.msra.mxu0 0
        %714 = vmatpush.bf16.msra.mxu0 0
        %715 = vmatpush.bf16.msra.mxu0 0
        %716 = vmatpush.bf16.msra.mxu0 0
        %717 = vmatpush.bf16.msra.mxu0 %v708
        %718 = vmatmul.bf16.gmra.mxu0 %v705
        %v719 = vpop.f32.mrf.mxu0
        %v720 = vadd.f32 %v701, %v719
        %v721 = vpop.f32.mrf.mxu0
        %722 = vdwg.mxu0
        %723 = vrot.lane.b32.xlu0 %v487, 112
        %v724 = vpop.permute.xlu0 %723
        %726 = vxpose.xlu0.b32.start [1/16] %v724, 128
        %727 = vxpose.xlu0.b32.cont [2/16] 0.0, 128
        %728 = vxpose.xlu0.b32.cont [3/16] 0.0, 128
        %729 = vxpose.xlu0.b32.cont [4/16] 0.0, 128
        %730 = vxpose.xlu0.b32.cont [5/16] 0.0, 128
        %731 = vxpose.xlu0.b32.cont [6/16] 0.0, 128
        %732 = vxpose.xlu0.b32.cont [7/16] 0.0, 128
        %733 = vxpose.xlu0.b32.cont [8/16] 0.0, 128
        %734 = vxpose.xlu0.b32.cont [9/16] 0.0, 128
        %735 = vxpose.xlu0.b32.cont [10/16] 0.0, 128
        %736 = vxpose.xlu0.b32.cont [11/16] 0.0, 128
        %737 = vxpose.xlu0.b32.cont [12/16] 0.0, 128
        %738 = vxpose.xlu0.b32.cont [13/16] 0.0, 128
        %739 = vxpose.xlu0.b32.cont [14/16] 0.0, 128
        %740 = vxpose.xlu0.b32.cont [15/16] 0.0, 128
        %741 = vxpose.xlu0.b32.end [16/16] 0.0, 128
        %v742 = vpop.trf.xlu0
        %v743 = vpop.trf.xlu0
        %v744 = vpop.trf.xlu0
        %v745 = vpop.trf.xlu0
        %v746 = vpop.trf.xlu0
        %v747 = vpop.trf.xlu0
        %v748 = vpop.trf.xlu0
        %v749 = vpop.trf.xlu0
        %v750 = vpop.trf.xlu0
        %v751 = vpop.trf.xlu0
        %v752 = vpop.trf.xlu0
        %v753 = vpop.trf.xlu0
        %v754 = vpop.trf.xlu0
        %v755 = vpop.trf.xlu0
        %v756 = vpop.trf.xlu0
        %v757 = vpop.trf.xlu0
        %v758 = vpack.c.bf16 %v742, %v742
        %759 = vrot.lane.b32.xlu0 %v494, 112
        %v760 = vpop.permute.xlu0 %759
        %v762 = vsel %vm528, %v760, 0
        %v765 = vsel %vm532, %v758, 0
        %767 = vmatpush.bf16.msra.mxu0 0
        %768 = vmatpush.bf16.msra.mxu0 0
        %769 = vmatpush.bf16.msra.mxu0 0
        %770 = vmatpush.bf16.msra.mxu0 0
        %771 = vmatpush.bf16.msra.mxu0 0
        %772 = vmatpush.bf16.msra.mxu0 0
        %773 = vmatpush.bf16.msra.mxu0 0
        %774 = vmatpush.bf16.msra.mxu0 %v765
        %775 = vmatmul.bf16.gmra.mxu0 %v762
        %v776 = vpop.f32.mrf.mxu0
        %v777 = vadd.f32 0.0, %v776
        %v778 = vpop.f32.mrf.mxu0
        %779 = vdwg.mxu0
        %v780 = vmul.f32 %v777, 0.35355338
        %v781 = vsel %vm550, %v780, -1e+09
        %v782 = vsel %vm528, %v781, -inf
        %783 = vmax.xlane.f32.xlu0 %v782
        %v784 = vpop.xlane.xlu0 %783
        %v785 = vsub.f32 %v781, %v784
        %v786 = vmul.f32 %v785, 1.442695
        %v787 = vpow.pop %v786
        %v788 = vsel %vm528, %v787, 0.0
        %789 = vadd.xlane.f32.xlu0 %v788
        %v790 = vpop.xlane.xlu0 %789
        %v791 = vrcp.pop %v790
        %v792 = vmul.f32 %v787, %v791
        %v793 = vpack.c.bf16 %v792, %v792
        %794 = vrot.lane.b32.xlu0 %v564, 80
        %v795 = vpop.permute.xlu0 %794
        %v797 = vsel %vm528, %v793, 0
        %v800 = vsel %vm532, %v795, 0
        %802 = vmatpush.bf16.msra.mxu0 0
        %803 = vmatpush.bf16.msra.mxu0 0
        %804 = vmatpush.bf16.msra.mxu0 0
        %805 = vmatpush.bf16.msra.mxu0 0
        %806 = vmatpush.bf16.msra.mxu0 0
        %807 = vmatpush.bf16.msra.mxu0 0
        %808 = vmatpush.bf16.msra.mxu0 0
        %809 = vmatpush.bf16.msra.mxu0 %v800
        %810 = vmatmul.bf16.gmra.mxu0 %v797
        %v811 = vpop.f32.mrf.mxu0
        %v812 = vadd.f32 0.0, %v811
        %v813 = vpop.f32.mrf.mxu0
        %814 = vdwg.mxu0
        %v815 = vpack.c.bf16 %v812, %v812
        %v816 = vpack.c.bf16 %v492, %v492
        %v818 = vsel %vm528, %v815, 0
        %v821 = vsel %vm532, %v816, 0
        %823 = vmatpush.bf16.msra.mxu0 0
        %824 = vmatpush.bf16.msra.mxu0 0
        %825 = vmatpush.bf16.msra.mxu0 0
        %826 = vmatpush.bf16.msra.mxu0 0
        %827 = vmatpush.bf16.msra.mxu0 0
        %828 = vmatpush.bf16.msra.mxu0 0
        %829 = vmatpush.bf16.msra.mxu0 0
        %830 = vmatpush.bf16.msra.mxu0 %v821
        %831 = vmatmul.bf16.gmra.mxu0 %v818
        %v832 = vpop.f32.mrf.mxu0
        %v833 = vadd.f32 0.0, %v832
        %v834 = vpop.f32.mrf.mxu0
        %835 = vdwg.mxu0
        %v836 = vadd.f32 %v720, %v833
        %837 = vrot.lane.b32.xlu0 %v487, 104
        %v838 = vpop.permute.xlu0 %837
        %840 = vxpose.xlu0.b32.start [1/16] %v838, 128
        %841 = vxpose.xlu0.b32.cont [2/16] 0.0, 128
        %842 = vxpose.xlu0.b32.cont [3/16] 0.0, 128
        %843 = vxpose.xlu0.b32.cont [4/16] 0.0, 128
        %844 = vxpose.xlu0.b32.cont [5/16] 0.0, 128
        %845 = vxpose.xlu0.b32.cont [6/16] 0.0, 128
        %846 = vxpose.xlu0.b32.cont [7/16] 0.0, 128
        %847 = vxpose.xlu0.b32.cont [8/16] 0.0, 128
        %848 = vxpose.xlu0.b32.cont [9/16] 0.0, 128
        %849 = vxpose.xlu0.b32.cont [10/16] 0.0, 128
        %850 = vxpose.xlu0.b32.cont [11/16] 0.0, 128
        %851 = vxpose.xlu0.b32.cont [12/16] 0.0, 128
        %852 = vxpose.xlu0.b32.cont [13/16] 0.0, 128
        %853 = vxpose.xlu0.b32.cont [14/16] 0.0, 128
        %854 = vxpose.xlu0.b32.cont [15/16] 0.0, 128
        %855 = vxpose.xlu0.b32.end [16/16] 0.0, 128
        %v856 = vpop.trf.xlu0
        %v857 = vpop.trf.xlu0
        %v858 = vpop.trf.xlu0
        %v859 = vpop.trf.xlu0
        %v860 = vpop.trf.xlu0
        %v861 = vpop.trf.xlu0
        %v862 = vpop.trf.xlu0
        %v863 = vpop.trf.xlu0
        %v864 = vpop.trf.xlu0
        %v865 = vpop.trf.xlu0
        %v866 = vpop.trf.xlu0
        %v867 = vpop.trf.xlu0
        %v868 = vpop.trf.xlu0
        %v869 = vpop.trf.xlu0
        %v870 = vpop.trf.xlu0
        %v871 = vpop.trf.xlu0
        %v872 = vpack.c.bf16 %v856, %v856
        %873 = vrot.lane.b32.xlu0 %v494, 104
        %v874 = vpop.permute.xlu0 %873
        %v876 = vsel %vm528, %v874, 0
        %v879 = vsel %vm532, %v872, 0
        %881 = vmatpush.bf16.msra.mxu0 0
        %882 = vmatpush.bf16.msra.mxu0 0
        %883 = vmatpush.bf16.msra.mxu0 0
        %884 = vmatpush.bf16.msra.mxu0 0
        %885 = vmatpush.bf16.msra.mxu0 0
        %886 = vmatpush.bf16.msra.mxu0 0
        %887 = vmatpush.bf16.msra.mxu0 0
        %888 = vmatpush.bf16.msra.mxu0 %v879
        %889 = vmatmul.bf16.gmra.mxu0 %v876
        %v890 = vpop.f32.mrf.mxu0
        %v891 = vadd.f32 0.0, %v890
        %v892 = vpop.f32.mrf.mxu0
        %893 = vdwg.mxu0
        %v894 = vmul.f32 %v891, 0.35355338
        %v895 = vsel %vm550, %v894, -1e+09
        %v896 = vsel %vm528, %v895, -inf
        %897 = vmax.xlane.f32.xlu0 %v896
        %v898 = vpop.xlane.xlu0 %897
        %v899 = vsub.f32 %v895, %v898
        %v900 = vmul.f32 %v899, 1.442695
        %v901 = vpow.pop %v900
        %v902 = vsel %vm528, %v901, 0.0
        %903 = vadd.xlane.f32.xlu0 %v902
        %v904 = vpop.xlane.xlu0 %903
        %v905 = vrcp.pop %v904
        %v906 = vmul.f32 %v901, %v905
        %v907 = vpack.c.bf16 %v906, %v906
        %908 = vrot.lane.b32.xlu0 %v564, 72
        %v909 = vpop.permute.xlu0 %908
        %v911 = vsel %vm528, %v907, 0
        %v914 = vsel %vm532, %v909, 0
        %916 = vmatpush.bf16.msra.mxu0 0
        %917 = vmatpush.bf16.msra.mxu0 0
        %918 = vmatpush.bf16.msra.mxu0 0
        %919 = vmatpush.bf16.msra.mxu0 0
        %920 = vmatpush.bf16.msra.mxu0 0
        %921 = vmatpush.bf16.msra.mxu0 0
        %922 = vmatpush.bf16.msra.mxu0 0
        %923 = vmatpush.bf16.msra.mxu0 %v914
        %924 = vmatmul.bf16.gmra.mxu0 %v911
        %v925 = vpop.f32.mrf.mxu0
        %v926 = vadd.f32 0.0, %v925
        %v927 = vpop.f32.mrf.mxu0
        %928 = vdwg.mxu0
        %v929 = vpack.c.bf16 %v926, %v926
        %v930 = vpack.c.bf16 %v493, %v493
        %v932 = vsel %vm528, %v929, 0
        %v935 = vsel %vm532, %v930, 0
        %937 = vmatpush.bf16.msra.mxu0 0
        %938 = vmatpush.bf16.msra.mxu0 0
        %939 = vmatpush.bf16.msra.mxu0 0
        %940 = vmatpush.bf16.msra.mxu0 0
        %941 = vmatpush.bf16.msra.mxu0 0
        %942 = vmatpush.bf16.msra.mxu0 0
        %943 = vmatpush.bf16.msra.mxu0 0
        %944 = vmatpush.bf16.msra.mxu0 %v935
        %945 = vmatmul.bf16.gmra.mxu0 %v932
        %v946 = vpop.f32.mrf.mxu0
        %v947 = vadd.f32 0.0, %v946
        %v948 = vpop.f32.mrf.mxu0
        %949 = vdwg.mxu0
        %v950 = vadd.f32 %v836, %v947
        %v951 = vld [vmem:[%s8] sm:$0x1]
        %v953 = vperm.slane %v951, 0
        %v955 = vadd.f32 %v950, %v953
        %v956 = vadd.f32 %v955, %v432
        %v957 = vsel %vm446, %v956, 0.0
        %958 = vadd.xlane.f32.xlu0 %v957
        %v959 = vpop.xlane.xlu0 %958
        %v960 = vrcp.pop 32.0
        %v961 = vmul.f32 32.0, %v960
        %v962 = vsub.f32 1.0, %v961
        %v963 = vmul.f32 %v960, %v962
        %v964 = vadd.f32 %v960, %v963
        %vm965 = vweird.f32 %v960
        %v966 = vsel %vm965, %v960, %v964
        %v967 = vmul.f32 %v959, %v966
        %v968 = vsub.f32 %v956, %v967
        %v969 = vmul.f32 %v968, %v968
        %v970 = vsel %vm446, %v969, 0.0
        %971 = vadd.xlane.f32.xlu0 %v970
        %v972 = vpop.xlane.xlu0 %971
        %v973 = vmul.f32 %v972, %v966
        %v974 = vadd.f32 %v973, 1e-05
        %v975 = vrsqrt.pop %v974
        %v976 = vmul.f32 %v975, %v974
        %v977 = vmul.f32 %v976, %v975
        %v978 = vmul.f32 0.5, %v977
        %v979 = vsub.f32 1.5, %v978
        %v980 = vmul.f32 %v975, %v979
        %vm981 = vweird.f32 %v974
        %vm982 = vweird.f32 %v975
        %vm983 = vmor %vm981, %vm982
        %v984 = vsel %vm983, %v975, %v980
        %v985 = vmul.f32 %v968, %v984
        %v986 = vld [vmem:[%s9] sm:$0x1]
        %v988 = vperm.slane %v986, 0
        %v990 = vmul.f32 %v985, %v988
        %v991 = vld [vmem:[#allocation2] sm:$0x1]
        %v993 = vperm.slane %v991, 0
        %v995 = vadd.f32 %v990, %v993
        %996 = vst.msk [vmem:[%s430] sm:$0xff] %vm446, %v995
        %p997 = scmp.lt.s32.totalorder %s23, 1
        %s998 = scalar_select %p997, %s23, 1
        %s999 = smul.addr %s998, 8
        %s1000 = scalar_lea.vmem %s11, %s999
        // Predicated region
        $region69: #{_lambda_.13} parent=63 // pred_check
          %p1001 = pneg %p287
        $region70: #{_lambda_.13} parent=63 // pred_check_branch
          %1003 = sbr.rel (%p1001) target = $region72
        $region71: #{_lambda_.13} parent=63 // pred_region
          _
        $region72: #{_lambda_.13} parent=63 // pred_fallthru
          _
      $region64: #{_lambda_.13} parent=5 // pred_fallthru
        _
      %p1004 = scmp.le.s32.totalorder 2, %s18
      // Predicated region
      $region73: #{_lambda_.13} parent=5 // pred_check
        %p1005 = pneg %p1004
      $region74: #{_lambda_.13} parent=5 // pred_check_branch
        %1007 = sbr.rel (%p1005) target = $region76
      $region75: #{_lambda_.13} parent=5 // pred_region
        %s1008 = ssub.s32 %s18, 2
        // Predicated region
        $region77: #{_lambda_.13} parent=75 // pred_check
          %p1009 = pneg %p293
        $region78: #{_lambda_.13} parent=75 // pred_check_branch
          %1011 = sbr.rel (%p1009) target = $region80
        $region79: #{_lambda_.13} parent=75 // pred_region
          %p1012 = scmp.lt.s32.totalorder %s24, 1
          %s1013 = scalar_select %p1012, %s24, 1
          %s1014 = smul.addr %s1013, 8
          %s1015 = scalar_lea.vmem %s11, %s1014
        $region80: #{_lambda_.13} parent=75 // pred_fallthru
          _
      $region76: #{_lambda_.13} parent=5 // pred_fallthru
        _
    $region6: #{_lambda_.13} parent=1 // loop_footer
      %s22 = sadd.s32 1, %s18
    $region7: #{_lambda_.13} parent=1 // loop_footer_branch
      %17 = sbr.rel target = $region3
    $region8: #{_lambda_.13} parent=1 // loop_exit
      _
    %1016 = vsyncpa [#allocation3], 1
    %s1017 = scalar_lea.sflag [#allocation3], 1
    %1018 = vsyncpa %s1017, 1

// kernel: _lambda_.15
$region0: #{_lambda_.15}
  #allocation0 [shape = 'u32[]', space=smem, size = 0x4, offset = 0x4, fixed_abs, tag = 'smem constant byte address 0x4 - core index']
  #allocation1 [shape = 'u32[72,128]{1,0:T(1,128)}', space=vmem, size = 0x9000, scoped, tag = 'internal scratch']
  %s0 = inlined_call_operand.vmem [shape: f32[2,8,32], index: 0, kind: input, shape index: {}, may-alias: {0,1}]
  %s1 = inlined_call_operand.vmem [shape: f32[2,8,32], index: 1, kind: input, shape index: {}, may-alias: {0,1}]
  %s2 = inlined_call_operand.vmem [shape: f32[2,8,8], index: 2, kind: input, shape index: {}]
  %s3 = inlined_call_operand.vmem [shape: f32[32,32], index: 3, kind: input, shape index: {}]
  %s4 = inlined_call_operand.vmem [shape: f32[1,32], index: 4, kind: input, shape index: {}]
  %s5 = inlined_call_operand.vmem [shape: f32[32,64], index: 5, kind: input, shape index: {}]
  %s6 = inlined_call_operand.vmem [shape: f32[1,64], index: 6, kind: input, shape index: {}]
  %s7 = inlined_call_operand.vmem [shape: f32[32,32], index: 7, kind: input, shape index: {}]
  %s8 = inlined_call_operand.vmem [shape: f32[1,32], index: 8, kind: input, shape index: {}]
  %s9 = inlined_call_operand.vmem [shape: f32[1,32], index: 9, kind: input, shape index: {}]
  %s10 = inlined_call_operand.vmem [shape: f32[1,32], index: 10, kind: input, shape index: {}]
  %s11 = inlined_call_operand.vmem [shape: f32[2,8,32], index: 11, kind: output, shape index: {}]
  %s12 = sld [smem:[#allocation0]]
  $region77: #{_lambda_.15} parent=0
    _
  %s14 = ssub.s32 1, %s12
  %s15 = scalar_select 0, %s14, %s12
  loop: start=0, step=1, limit=4
  $region2: #{_lambda_.15} parent=0 // loop_pre_header
    _
  $region3: #{_lambda_.15} parent=0 // loop_header
    %s17 = sphi 0, %s21
    %p18 = scmp.ge.s32.totalorder %s17, 4
    %s27 = sphi 0, %s29
    %s30 = sphi 0, %s27
    %s31 = sphi 0, %s30
    %s47 = sphi 0, %s31
    %s53 = sphi 0, %s55
    %s56 = sphi 0, %s53
    %s57 = sphi 0, %s56
    %s73 = sphi 0, %s57
    %s79 = sphi 0, %s81
    %s82 = sphi 0, %s79
    %s83 = sphi 0, %s82
    %s99 = sphi 0, %s83
    %s103 = sphi 0, %s103
    %s105 = sphi 0, %s103
    %s106 = sphi 0, %s105
    %s120 = sphi 0, %s106
    %s124 = sphi 0, %s124
    %s126 = sphi 0, %s124
    %s127 = sphi 0, %s126
    %s141 = sphi 0, %s127
    %s145 = sphi 0, %s145
    %s147 = sphi 0, %s145
    %s148 = sphi 0, %s147
    %s162 = sphi 0, %s148
    %s166 = sphi 0, %s166
    %s168 = sphi 0, %s166
    %s169 = sphi 0, %s168
    %s183 = sphi 0, %s169
    %s187 = sphi 0, %s187
    %s189 = sphi 0, %s187
    %s190 = sphi 0, %s189
    %s204 = sphi 0, %s190
    %s208 = sphi 0, %s208
    %s210 = sphi 0, %s208
    %s211 = sphi 0, %s210
    %s225 = sphi 0, %s211
    %s229 = sphi 0, %s229
    %s231 = sphi 0, %s229
    %s232 = sphi 0, %s231
    %s246 = sphi 0, %s232
    %s250 = sphi 0, %s250
    %s252 = sphi 0, %s250
    %s253 = sphi 0, %s252
    %s267 = sphi 0, %s253
    %s273 = sphi 0, %s275
    %s276 = sphi 0, %s273
    %s277 = sphi 0, %s276
    %s293 = sphi 0, %s277
  $region4: #{_lambda_.15} parent=0 // loop_header_branch
    %20 = sbr.rel (%p18) target = $region8
  $region5: #{_lambda_.15} parent=0 // loop_body
    %s22 = ssub.s32 %s17, 1
    %s23 = ssub.s32 %s17, 2
    %s24 = sadd.s32 %s17, 1
    %s25 = ssub.s32 %s17, %s24
    %p26 = scmp.eq.s32.totalorder %s25, 0
    %s28 = sadd.s32 %s27, 1
    %s29 = scalar_select %p26, %s27, %s28
    %p32 = pneg %p26
    %p33 = scmp.eq.s32.totalorder %s17, 1
    %p34 = por %p32, %p33
    %p35 = scmp.ne.s32.totalorder %s27, %s30
    %p36 = scmp.eq.s32.totalorder %s17, 0
    %p37 = por %p35, %p36
    %p38 = scmp.ne.s32.totalorder %s27, %s30
    %p39 = scmp.eq.s32.totalorder %s22, 1
    %p40 = por %p38, %p39
    %p41 = scmp.ne.s32.totalorder %s30, %s31
    %p42 = scmp.eq.s32.totalorder %s22, 0
    %p43 = por %p41, %p42
    %p44 = scmp.ne.s32.totalorder %s30, %s31
    %p45 = scmp.eq.s32.totalorder %s23, 1
    %p46 = por %p44, %p45
    %p48 = scmp.ne.s32.totalorder %s31, %s47
    %p49 = scmp.eq.s32.totalorder %s23, 0
    %p50 = por %p48, %p49
    %s51 = ssub.s32 %s17, %s24
    %p52 = scmp.eq.s32.totalorder %s51, 0
    %s54 = sadd.s32 %s53, 1
    %s55 = scalar_select %p52, %s53, %s54
    %p58 = pneg %p52
    %p59 = scmp.eq.s32.totalorder %s17, 1
    %p60 = por %p58, %p59
    %p61 = scmp.ne.s32.totalorder %s53, %s56
    %p62 = scmp.eq.s32.totalorder %s17, 0
    %p63 = por %p61, %p62
    %p64 = scmp.ne.s32.totalorder %s53, %s56
    %p65 = scmp.eq.s32.totalorder %s22, 1
    %p66 = por %p64, %p65
    %p67 = scmp.ne.s32.totalorder %s56, %s57
    %p68 = scmp.eq.s32.totalorder %s22, 0
    %p69 = por %p67, %p68
    %p70 = scmp.ne.s32.totalorder %s56, %s57
    %p71 = scmp.eq.s32.totalorder %s23, 1
    %p72 = por %p70, %p71
    %p74 = scmp.ne.s32.totalorder %s57, %s73
    %p75 = scmp.eq.s32.totalorder %s23, 0
    %p76 = por %p74, %p75
    %s77 = ssub.s32 %s17, %s24
    %p78 = scmp.eq.s32.totalorder %s77, 0
    %s80 = sadd.s32 %s79, 1
    %s81 = scalar_select %p78, %s79, %s80
    %p84 = pneg %p78
    %p85 = scmp.eq.s32.totalorder %s17, 1
    %p86 = por %p84, %p85
    %p87 = scmp.ne.s32.totalorder %s79, %s82
    %p88 = scmp.eq.s32.totalorder %s17, 0
    %p89 = por %p87, %p88
    %p90 = scmp.ne.s32.totalorder %s79, %s82
    %p91 = scmp.eq.s32.totalorder %s22, 1
    %p92 = por %p90, %p91
    %p93 = scmp.ne.s32.totalorder %s82, %s83
    %p94 = scmp.eq.s32.totalorder %s22, 0
    %p95 = por %p93, %p94
    %p96 = scmp.ne.s32.totalorder %s82, %s83
    %p97 = scmp.eq.s32.totalorder %s23, 1
    %p98 = por %p96, %p97
    %p100 = scmp.ne.s32.totalorder %s83, %s99
    %p101 = scmp.eq.s32.totalorder %s23, 0
    %p102 = por %p100, %p101
    %s104 = sadd.s32 %s103, 1
    %p107 = scmp.eq.s32.totalorder %s17, 1
    %p108 = scmp.ne.s32.totalorder %s103, %s105
    %p109 = scmp.eq.s32.totalorder %s17, 0
    %p110 = por %p108, %p109
    %p111 = scmp.ne.s32.totalorder %s103, %s105
    %p112 = scmp.eq.s32.totalorder %s22, 1
    %p113 = por %p111, %p112
    %p114 = scmp.ne.s32.totalorder %s105, %s106
    %p115 = scmp.eq.s32.totalorder %s22, 0
    %p116 = por %p114, %p115
    %p117 = scmp.ne.s32.totalorder %s105, %s106
    %p118 = scmp.eq.s32.totalorder %s23, 1
    %p119 = por %p117, %p118
    %p121 = scmp.ne.s32.totalorder %s106, %s120
    %p122 = scmp.eq.s32.totalorder %s23, 0
    %p123 = por %p121, %p122
    %s125 = sadd.s32 %s124, 1
    %p128 = scmp.eq.s32.totalorder %s17, 1
    %p129 = scmp.ne.s32.totalorder %s124, %s126
    %p130 = scmp.eq.s32.totalorder %s17, 0
    %p131 = por %p129, %p130
    %p132 = scmp.ne.s32.totalorder %s124, %s126
    %p133 = scmp.eq.s32.totalorder %s22, 1
    %p134 = por %p132, %p133
    %p135 = scmp.ne.s32.totalorder %s126, %s127
    %p136 = scmp.eq.s32.totalorder %s22, 0
    %p137 = por %p135, %p136
    %p138 = scmp.ne.s32.totalorder %s126, %s127
    %p139 = scmp.eq.s32.totalorder %s23, 1
    %p140 = por %p138, %p139
    %p142 = scmp.ne.s32.totalorder %s127, %s141
    %p143 = scmp.eq.s32.totalorder %s23, 0
    %p144 = por %p142, %p143
    %s146 = sadd.s32 %s145, 1
    %p149 = scmp.eq.s32.totalorder %s17, 1
    %p150 = scmp.ne.s32.totalorder %s145, %s147
    %p151 = scmp.eq.s32.totalorder %s17, 0
    %p152 = por %p150, %p151
    %p153 = scmp.ne.s32.totalorder %s145, %s147
    %p154 = scmp.eq.s32.totalorder %s22, 1
    %p155 = por %p153, %p154
    %p156 = scmp.ne.s32.totalorder %s147, %s148
    %p157 = scmp.eq.s32.totalorder %s22, 0
    %p158 = por %p156, %p157
    %p159 = scmp.ne.s32.totalorder %s147, %s148
    %p160 = scmp.eq.s32.totalorder %s23, 1
    %p161 = por %p159, %p160
    %p163 = scmp.ne.s32.totalorder %s148, %s162
    %p164 = scmp.eq.s32.totalorder %s23, 0
    %p165 = por %p163, %p164
    %s167 = sadd.s32 %s166, 1
    %p170 = scmp.eq.s32.totalorder %s17, 1
    %p171 = scmp.ne.s32.totalorder %s166, %s168
    %p172 = scmp.eq.s32.totalorder %s17, 0
    %p173 = por %p171, %p172
    %p174 = scmp.ne.s32.totalorder %s166, %s168
    %p175 = scmp.eq.s32.totalorder %s22, 1
    %p176 = por %p174, %p175
    %p177 = scmp.ne.s32.totalorder %s168, %s169
    %p178 = scmp.eq.s32.totalorder %s22, 0
    %p179 = por %p177, %p178
    %p180 = scmp.ne.s32.totalorder %s168, %s169
    %p181 = scmp.eq.s32.totalorder %s23, 1
    %p182 = por %p180, %p181
    %p184 = scmp.ne.s32.totalorder %s169, %s183
    %p185 = scmp.eq.s32.totalorder %s23, 0
    %p186 = por %p184, %p185
    %s188 = sadd.s32 %s187, 1
    %p191 = scmp.eq.s32.totalorder %s17, 1
    %p192 = scmp.ne.s32.totalorder %s187, %s189
    %p193 = scmp.eq.s32.totalorder %s17, 0
    %p194 = por %p192, %p193
    %p195 = scmp.ne.s32.totalorder %s187, %s189
    %p196 = scmp.eq.s32.totalorder %s22, 1
    %p197 = por %p195, %p196
    %p198 = scmp.ne.s32.totalorder %s189, %s190
    %p199 = scmp.eq.s32.totalorder %s22, 0
    %p200 = por %p198, %p199
    %p201 = scmp.ne.s32.totalorder %s189, %s190
    %p202 = scmp.eq.s32.totalorder %s23, 1
    %p203 = por %p201, %p202
    %p205 = scmp.ne.s32.totalorder %s190, %s204
    %p206 = scmp.eq.s32.totalorder %s23, 0
    %p207 = por %p205, %p206
    %s209 = sadd.s32 %s208, 1
    %p212 = scmp.eq.s32.totalorder %s17, 1
    %p213 = scmp.ne.s32.totalorder %s208, %s210
    %p214 = scmp.eq.s32.totalorder %s17, 0
    %p215 = por %p213, %p214
    %p216 = scmp.ne.s32.totalorder %s208, %s210
    %p217 = scmp.eq.s32.totalorder %s22, 1
    %p218 = por %p216, %p217
    %p219 = scmp.ne.s32.totalorder %s210, %s211
    %p220 = scmp.eq.s32.totalorder %s22, 0
    %p221 = por %p219, %p220
    %p222 = scmp.ne.s32.totalorder %s210, %s211
    %p223 = scmp.eq.s32.totalorder %s23, 1
    %p224 = por %p222, %p223
    %p226 = scmp.ne.s32.totalorder %s211, %s225
    %p227 = scmp.eq.s32.totalorder %s23, 0
    %p228 = por %p226, %p227
    %s230 = sadd.s32 %s229, 1
    %p233 = scmp.eq.s32.totalorder %s17, 1
    %p234 = scmp.ne.s32.totalorder %s229, %s231
    %p235 = scmp.eq.s32.totalorder %s17, 0
    %p236 = por %p234, %p235
    %p237 = scmp.ne.s32.totalorder %s229, %s231
    %p238 = scmp.eq.s32.totalorder %s22, 1
    %p239 = por %p237, %p238
    %p240 = scmp.ne.s32.totalorder %s231, %s232
    %p241 = scmp.eq.s32.totalorder %s22, 0
    %p242 = por %p240, %p241
    %p243 = scmp.ne.s32.totalorder %s231, %s232
    %p244 = scmp.eq.s32.totalorder %s23, 1
    %p245 = por %p243, %p244
    %p247 = scmp.ne.s32.totalorder %s232, %s246
    %p248 = scmp.eq.s32.totalorder %s23, 0
    %p249 = por %p247, %p248
    %s251 = sadd.s32 %s250, 1
    %p254 = scmp.eq.s32.totalorder %s17, 1
    %p255 = scmp.ne.s32.totalorder %s250, %s252
    %p256 = scmp.eq.s32.totalorder %s17, 0
    %p257 = por %p255, %p256
    %p258 = scmp.ne.s32.totalorder %s250, %s252
    %p259 = scmp.eq.s32.totalorder %s22, 1
    %p260 = por %p258, %p259
    %p261 = scmp.ne.s32.totalorder %s252, %s253
    %p262 = scmp.eq.s32.totalorder %s22, 0
    %p263 = por %p261, %p262
    %p264 = scmp.ne.s32.totalorder %s252, %s253
    %p265 = scmp.eq.s32.totalorder %s23, 1
    %p266 = por %p264, %p265
    %p268 = scmp.ne.s32.totalorder %s253, %s267
    %p269 = scmp.eq.s32.totalorder %s23, 0
    %p270 = por %p268, %p269
    %s271 = ssub.s32 %s17, %s24
    %p272 = scmp.eq.s32.totalorder %s271, 0
    %s274 = sadd.s32 %s273, 1
    %s275 = scalar_select %p272, %s273, %s274
    %p278 = pneg %p272
    %p279 = scmp.eq.s32.totalorder %s17, 1
    %p280 = por %p278, %p279
    %p281 = scmp.ne.s32.totalorder %s273, %s276
    %p282 = scmp.eq.s32.totalorder %s17, 0
    %p283 = por %p281, %p282
    %p284 = scmp.ne.s32.totalorder %s273, %s276
    %p285 = scmp.eq.s32.totalorder %s22, 1
    %p286 = por %p284, %p285
    %p287 = scmp.ne.s32.totalorder %s276, %s277
    %p288 = scmp.eq.s32.totalorder %s22, 0
    %p289 = por %p287, %p288
    %p290 = scmp.ne.s32.totalorder %s276, %s277
    %p291 = scmp.eq.s32.totalorder %s23, 1
    %p292 = por %p290, %p291
    %p294 = scmp.ne.s32.totalorder %s277, %s293
    %p295 = scmp.eq.s32.totalorder %s23, 0
    %p296 = por %p294, %p295
    %p297 = scmp.le.s32.totalorder 1, %s17
    %p298 = scmp.lt.s32.totalorder %s17, 3
    %p299 = pnand %p297, %p298
    %p300 = pneg %p299
    // Predicated region
    $region9: #{_lambda_.15} parent=5 // pred_check
      _
    $region10: #{_lambda_.15} parent=5 // pred_check_branch
      %302 = sbr.rel (%p299) target = $region12
    $region11: #{_lambda_.15} parent=5 // pred_region
      %s303 = ssub.s32 %s17, 1
      // Predicated region
      $region13: #{_lambda_.15} parent=11 // pred_check
        %p304 = pneg %p116
      $region14: #{_lambda_.15} parent=11 // pred_check_branch
        %306 = sbr.rel (%p304) target = $region16
      $region15: #{_lambda_.15} parent=11 // pred_region
        _
      $region16: #{_lambda_.15} parent=11 // pred_fallthru
        _
      // Predicated region
      $region17: #{_lambda_.15} parent=11 // pred_check
        %p307 = pneg %p137
      $region18: #{_lambda_.15} parent=11 // pred_check_branch
        %309 = sbr.rel (%p307) target = $region20
      $region19: #{_lambda_.15} parent=11 // pred_region
        _
      $region20: #{_lambda_.15} parent=11 // pred_fallthru
        _
      // Predicated region
      $region21: #{_lambda_.15} parent=11 // pred_check
        %p310 = pneg %p158
      $region22: #{_lambda_.15} parent=11 // pred_check_branch
        %312 = sbr.rel (%p310) target = $region24
      $region23: #{_lambda_.15} parent=11 // pred_region
        _
      $region24: #{_lambda_.15} parent=11 // pred_fallthru
        _
      // Predicated region
      $region25: #{_lambda_.15} parent=11 // pred_check
        %p313 = pneg %p179
      $region26: #{_lambda_.15} parent=11 // pred_check_branch
        %315 = sbr.rel (%p313) target = $region28
      $region27: #{_lambda_.15} parent=11 // pred_region
        _
      $region28: #{_lambda_.15} parent=11 // pred_fallthru
        _
      // Predicated region
      $region29: #{_lambda_.15} parent=11 // pred_check
        %p316 = pneg %p200
      $region30: #{_lambda_.15} parent=11 // pred_check_branch
        %318 = sbr.rel (%p316) target = $region32
      $region31: #{_lambda_.15} parent=11 // pred_region
        _
      $region32: #{_lambda_.15} parent=11 // pred_fallthru
        _
      // Predicated region
      $region33: #{_lambda_.15} parent=11 // pred_check
        %p319 = pneg %p221
      $region34: #{_lambda_.15} parent=11 // pred_check_branch
        %321 = sbr.rel (%p319) target = $region36
      $region35: #{_lambda_.15} parent=11 // pred_region
        _
      $region36: #{_lambda_.15} parent=11 // pred_fallthru
        _
      // Predicated region
      $region37: #{_lambda_.15} parent=11 // pred_check
        %p322 = pneg %p242
      $region38: #{_lambda_.15} parent=11 // pred_check_branch
        %324 = sbr.rel (%p322) target = $region40
      $region39: #{_lambda_.15} parent=11 // pred_region
        _
      $region40: #{_lambda_.15} parent=11 // pred_fallthru
        _
      // Predicated region
      $region41: #{_lambda_.15} parent=11 // pred_check
        %p325 = pneg %p263
      $region42: #{_lambda_.15} parent=11 // pred_check_branch
        %327 = sbr.rel (%p325) target = $region44
      $region43: #{_lambda_.15} parent=11 // pred_region
        _
      $region44: #{_lambda_.15} parent=11 // pred_fallthru
        _
    $region12: #{_lambda_.15} parent=5 // pred_fallthru
      _
    %p328 = scmp.lt.s32.totalorder %s17, 2
    // Predicated region
    $region45: #{_lambda_.15} parent=5 // pred_check
      %p329 = pneg %p328
    $region46: #{_lambda_.15} parent=5 // pred_check_branch
      %331 = sbr.rel (%p329) target = $region48
    $region47: #{_lambda_.15} parent=5 // pred_region
      // Predicated region
      $region49: #{_lambda_.15} parent=47 // pred_check
        %p332 = pneg %p37
      $region50: #{_lambda_.15} parent=47 // pred_check_branch
        %334 = sbr.rel (%p332) target = $region52
      $region51: #{_lambda_.15} parent=47 // pred_region
        %p335 = scmp.lt.s32.totalorder %s17, 1
        %s336 = scalar_select %p335, %s17, 1
        %s337 = smul.addr %s336, 8
        %s338 = scalar_lea.vmem %s0, %s337
      $region52: #{_lambda_.15} parent=47 // pred_fallthru
        _
      // Predicated region
      $region53: #{_lambda_.15} parent=47 // pred_check
        %p339 = pneg %p63
      $region54: #{_lambda_.15} parent=47 // pred_check_branch
        %341 = sbr.rel (%p339) target = $region56
      $region55: #{_lambda_.15} parent=47 // pred_region
        %p342 = scmp.lt.s32.totalorder %s17, 1
        %s343 = scalar_select %p342, %s17, 1
        %s344 = smul.addr %s343, 8
        %s345 = scalar_lea.vmem %s1, %s344
      $region56: #{_lambda_.15} parent=47 // pred_fallthru
        _
      // Predicated region
      $region57: #{_lambda_.15} parent=47 // pred_check
        %p346 = pneg %p89
      $region58: #{_lambda_.15} parent=47 // pred_check_branch
        %348 = sbr.rel (%p346) target = $region60
      $region59: #{_lambda_.15} parent=47 // pred_region
        %p349 = scmp.lt.s32.totalorder %s17, 1
        %s350 = scalar_select %p349, %s17, 1
        %s351 = smul.addr %s350, 8
        %s352 = scalar_lea.vmem %s2, %s351
      $region60: #{_lambda_.15} parent=47 // pred_fallthru
        _
    $region48: #{_lambda_.15} parent=5 // pred_fallthru
      _
    %p353 = scmp.le.s32.totalorder 1, %s17
    %p354 = scmp.lt.s32.totalorder %s17, 3
    %p355 = pnand %p353, %p354
    %p356 = pneg %p355
    // Predicated region
    $region61: #{_lambda_.15} parent=5 // pred_check
      _
    $region62: #{_lambda_.15} parent=5 // pred_check_branch
      %358 = sbr.rel (%p355) target = $region64
    $region63: #{_lambda_.15} parent=5 // pred_region
      %s359 = ssub.s32 %s17, 1
      %p360 = scmp.lt.s32.totalorder %s22, 1
      %s361 = scalar_select %p360, %s22, 1
      %s362 = smul.addr %s361, 8
      %s363 = scalar_lea.vmem %s0, %s362
      %p364 = pneg %p43
      %p365 = pneg %p40
      %p366 = scmp.lt.s32.totalorder %s22, 1
      %s367 = scalar_select %p366, %s22, 1
      %s368 = smul.addr %s367, 8
      %s369 = scalar_lea.vmem %s1, %s368
      %p370 = pneg %p69
      %p371 = pneg %p66
      %p372 = scmp.lt.s32.totalorder %s22, 1
      %s373 = scalar_select %p372, %s22, 1
      %s374 = smul.addr %s373, 8
      %s375 = scalar_lea.vmem %s2, %s374
      %p376 = pneg %p95
      %p377 = pneg %p92
      %p378 = pneg %p116
      %p379 = pneg %p113
      %p380 = pneg %p137
      %p381 = pneg %p134
      %p382 = pneg %p158
      %p383 = pneg %p155
      %p384 = pneg %p179
      %p385 = pneg %p176
      %p386 = pneg %p200
      %p387 = pneg %p197
      %p388 = pneg %p221
      %p389 = pneg %p218
      %p390 = pneg %p242
      %p391 = pneg %p239
      %p392 = pneg %p263
      %p393 = pneg %p260
      %p394 = pneg %p289
      %p395 = pneg %p286
      %p396 = scmp.lt.s32.totalorder %s22, 1
      %s397 = scalar_select %p396, %s22, 1
      %s398 = smul.addr %s397, 8
      %s399 = scalar_lea.vmem %s11, %s398
      %p400 = scmp.lt.s32.totalorder %s22, 1
      %s401 = scalar_select %p400, %s22, 1
      %s402 = smul.addr %s401, 8
      %s403 = scalar_lea.vmem %s0, %s402
      %p404 = scmp.lt.s32.totalorder %s22, 1
      %s405 = scalar_select %p404, %s22, 1
      %s406 = smul.addr %s405, 8
      %s407 = scalar_lea.vmem %s1, %s406
      %p408 = scmp.lt.s32.totalorder %s22, 1
      %s409 = scalar_select %p408, %s22, 1
      %s410 = smul.addr %s409, 8
      %s411 = scalar_lea.vmem %s2, %s410
      %p412 = scmp.lt.s32.totalorder %s22, 1
      %s413 = scalar_select %p412, %s22, 1
      %s414 = smul.addr %s413, 8
      %s415 = scalar_lea.vmem %s11, %s414
      %v417 = vld [vmem:[%s403] sm:$0xff]
      %v418 = vld [vmem:[%s407] sm:$0xff]
      %v419 = vld [vmem:[%s411] sm:$0xff]
      %v420 = vpack.c.bf16 %v417, %v417
      %v421 = vld [vmem:[%s3] sm:$0xff]
      %v422 = vld [vmem:[%s3 + $0x8] sm:$0xff]
      %v423 = vld [vmem:[%s3 + $0x10] sm:$0xff]
      %v424 = vld [vmem:[%s3 + $0x18] sm:$0xff]
      %v425 = vpack.c.bf16 %v422, %v421
      %v426 = vpack.c.bf16 %v424, %v423
      %v427 = vld [vmem:[%s4] sm:$0x1]
      %v429 = vperm.slane %v427, 0
      %vm431 = vcmask 261120
      %v433 = vsel %vm431, %v420, 0
      %435 = vmatpush.bf16.msra.mxu0 0
      %436 = vmatpush.bf16.msra.mxu0 0
      %437 = vmatpush.bf16.msra.mxu0 0
      %438 = vmatpush.bf16.msra.mxu0 0
      %439 = vmatpush.bf16.msra.mxu0 0
      %440 = vmatpush.bf16.msra.mxu0 0
      %441 = vmatpush.bf16.msra.mxu0 %v426
      %442 = vmatpush.bf16.msra.mxu0 %v425
      %443 = vmatmul.bf16.gmra.mxu0 %v433
      %v444 = vpop.f32.mrf.mxu0
      %v445 = vadd.f32 %v429, %v444
      %v446 = vpop.f32.mrf.mxu0
      %447 = vdwg.mxu0
      %v448 = vpack.c.bf16 %v418, %v418
      %v449 = vld [vmem:[%s5] sm:$0xff]
      %v450 = vld [vmem:[%s5 + $0x8] sm:$0xff]
      %v451 = vld [vmem:[%s5 + $0x10] sm:$0xff]
      %v452 = vld [vmem:[%s5 + $0x18] sm:$0xff]
      %v453 = vpack.c.bf16 %v450, %v449
      %v454 = vpack.c.bf16 %v452, %v451
      %v455 = vld [vmem:[%s6] sm:$0x1]
      %v457 = vperm.slane %v455, 0
      %v460 = vsel %vm431, %v448, 0
      %462 = vmatpush.bf16.msra.mxu0 0
      %463 = vmatpush.bf16.msra.mxu0 0
      %464 = vmatpush.bf16.msra.mxu0 0
      %465 = vmatpush.bf16.msra.mxu0 0
      %466 = vmatpush.bf16.msra.mxu0 0
      %467 = vmatpush.bf16.msra.mxu0 0
      %468 = vmatpush.bf16.msra.mxu0 %v454
      %469 = vmatpush.bf16.msra.mxu0 %v453
      %470 = vmatmul.bf16.gmra.mxu0 %v460
      %v471 = vpop.f32.mrf.mxu0
      %v472 = vadd.f32 %v457, %v471
      %v473 = vpop.f32.mrf.mxu0
      %474 = vdwg.mxu0
      %v475 = vld [vmem:[%s7] sm:$0xff]
      %v476 = vld [vmem:[%s7 + $0x8] sm:$0xff]
      %v477 = vld [vmem:[%s7 + $0x10] sm:$0xff]
      %v478 = vld [vmem:[%s7 + $0x18] sm:$0xff]
      %v479 = vpack.c.bf16 %v445, %v445
      %480 = vxpose.xlu0.b32.start [1/16] %v472, 128
      %481 = vxpose.xlu0.b32.cont [2/16] 0.0, 128
      %482 = vxpose.xlu0.b32.cont [3/16] 0.0, 128
      %483 = vxpose.xlu0.b32.cont [4/16] 0.0, 128
      %484 = vxpose.xlu0.b32.cont [5/16] 0.0, 128
      %485 = vxpose.xlu0.b32.cont [6/16] 0.0, 128
      %486 = vxpose.xlu0.b32.cont [7/16] 0.0, 128
      %487 = vxpose.xlu0.b32.cont [8/16] 0.0, 128
      %488 = vxpose.xlu0.b32.cont [9/16] 0.0, 128
      %489 = vxpose.xlu0.b32.cont [10/16] 0.0, 128
      %490 = vxpose.xlu0.b32.cont [11/16] 0.0, 128
      %491 = vxpose.xlu0.b32.cont [12/16] 0.0, 128
      %492 = vxpose.xlu0.b32.cont [13/16] 0.0, 128
      %493 = vxpose.xlu0.b32.cont [14/16] 0.0, 128
      %494 = vxpose.xlu0.b32.cont [15/16] 0.0, 128
      %495 = vxpose.xlu0.b32.end [16/16] 0.0, 128
      %v496 = vpop.trf.xlu0
      %v497 = vpop.trf.xlu0
      %v498 = vpop.trf.xlu0
      %v499 = vpop.trf.xlu0
      %v500 = vpop.trf.xlu0
      %v501 = vpop.trf.xlu0
      %v502 = vpop.trf.xlu0
      %v503 = vpop.trf.xlu0
      %v504 = vpop.trf.xlu0
      %v505 = vpop.trf.xlu0
      %v506 = vpop.trf.xlu0
      %v507 = vpop.trf.xlu0
      %v508 = vpop.trf.xlu0
      %v509 = vpop.trf.xlu0
      %v510 = vpop.trf.xlu0
      %v511 = vpop.trf.xlu0
      %v512 = vpack.c.bf16 %v496, %v496
      %vm513 = vcmask 64512
      %v515 = vsel %vm513, %v479, 0
      %vm517 = vcmask 1043456
      %v519 = vsel %vm517, %v512, 0
      %521 = vmatpush.bf16.msra.mxu0 0
      %522 = vmatpush.bf16.msra.mxu0 0
      %523 = vmatpush.bf16.msra.mxu0 0
      %524 = vmatpush.bf16.msra.mxu0 0
      %525 = vmatpush.bf16.msra.mxu0 0
      %526 = vmatpush.bf16.msra.mxu0 0
      %527 = vmatpush.bf16.msra.mxu0 0
      %528 = vmatpush.bf16.msra.mxu0 %v519
      %529 = vmatmul.bf16.gmra.mxu0 %v515
      %v530 = vpop.f32.mrf.mxu0
      %v531 = vadd.f32 0.0, %v530
      %v532 = vpop.f32.mrf.mxu0
      %533 = vdwg.mxu0
      %v534 = vmul.f32 %v531, 0.35355338
      %vm535 = vcmp.gt.f32.partialorder %v419, 0.0
      %v536 = vsel %vm535, %v534, -1e+09
      %v537 = vsel %vm513, %v536, -inf
      %538 = vmax.xlane.f32.xlu0 %v537
      %v539 = vpop.xlane.xlu0 %538
      %v540 = vsub.f32 %v536, %v539
      %v541 = vmul.f32 %v540, 1.442695
      %v542 = vpow.pop %v541
      %v543 = vsel %vm513, %v542, 0.0
      %544 = vadd.xlane.f32.xlu0 %v543
      %v545 = vpop.xlane.xlu0 %544
      %v546 = vrcp.pop %v545
      %v547 = vmul.f32 %v542, %v546
      %v548 = vpack.c.bf16 %v547, %v547
      %v549 = vpack.c.bf16 %v472, %v472
      %551 = vrot.lane.b32.xlu0 %v549, 96
      %v552 = vpop.permute.xlu0 %551
      %v554 = vsel %vm513, %v548, 0
      %v557 = vsel %vm517, %v552, 0
      %559 = vmatpush.bf16.msra.mxu0 0
      %560 = vmatpush.bf16.msra.mxu0 0
      %561 = vmatpush.bf16.msra.mxu0 0
      %562 = vmatpush.bf16.msra.mxu0 0
      %563 = vmatpush.bf16.msra.mxu0 0
      %564 = vmatpush.bf16.msra.mxu0 0
      %565 = vmatpush.bf16.msra.mxu0 0
      %566 = vmatpush.bf16.msra.mxu0 %v557
      %567 = vmatmul.bf16.gmra.mxu0 %v554
      %v568 = vpop.f32.mrf.mxu0
      %v569 = vadd.f32 0.0, %v568
      %v570 = vpop.f32.mrf.mxu0
      %571 = vdwg.mxu0
      %v572 = vpack.c.bf16 %v569, %v569
      %v573 = vpack.c.bf16 %v475, %v475
      %575 = vrot.lane.b32.xlu0 %v472, 120
      %v576 = vpop.permute.xlu0 %575
      %578 = vxpose.xlu0.b32.start [1/16] %v576, 128
      %579 = vxpose.xlu0.b32.cont [2/16] 0.0, 128
      %580 = vxpose.xlu0.b32.cont [3/16] 0.0, 128
      %581 = vxpose.xlu0.b32.cont [4/16] 0.0, 128
      %582 = vxpose.xlu0.b32.cont [5/16] 0.0, 128
      %583 = vxpose.xlu0.b32.cont [6/16] 0.0, 128
      %584 = vxpose.xlu0.b32.cont [7/16] 0.0, 128
      %585 = vxpose.xlu0.b32.cont [8/16] 0.0, 128
      %586 = vxpose.xlu0.b32.cont [9/16] 0.0, 128
      %587 = vxpose.xlu0.b32.cont [10/16] 0.0, 128
      %588 = vxpose.xlu0.b32.cont [11/16] 0.0, 128
      %589 = vxpose.xlu0.b32.cont [12/16] 0.0, 128
      %590 = vxpose.xlu0.b32.cont [13/16] 0.0, 128
      %591 = vxpose.xlu0.b32.cont [14/16] 0.0, 128
      %592 = vxpose.xlu0.b32.cont [15/16] 0.0, 128
      %593 = vxpose.xlu0.b32.end [16/16] 0.0, 128
      %v594 = vpop.trf.xlu0
      %v595 = vpop.trf.xlu0
      %v596 = vpop.trf.xlu0
      %v597 = vpop.trf.xlu0
      %v598 = vpop.trf.xlu0
      %v599 = vpop.trf.xlu0
      %v600 = vpop.trf.xlu0
      %v601 = vpop.trf.xlu0
      %v602 = vpop.trf.xlu0
      %v603 = vpop.trf.xlu0
      %v604 = vpop.trf.xlu0
      %v605 = vpop.trf.xlu0
      %v606 = vpop.trf.xlu0
      %v607 = vpop.trf.xlu0
      %v608 = vpop.trf.xlu0
      %v609 = vpop.trf.xlu0
      %v610 = vpack.c.bf16 %v594, %v594
      %612 = vrot.lane.b32.xlu0 %v479, 120
      %v613 = vpop.permute.xlu0 %612
      %v615 = vsel %vm513, %v613, 0
      %v618 = vsel %vm517, %v610, 0
      %620 = vmatpush.bf16.msra.mxu0 0
      %621 = vmatpush.bf16.msra.mxu0 0
      %622 = vmatpush.bf16.msra.mxu0 0
      %623 = vmatpush.bf16.msra.mxu0 0
      %624 = vmatpush.bf16.msra.mxu0 0
      %625 = vmatpush.bf16.msra.mxu0 0
      %626 = vmatpush.bf16.msra.mxu0 0
      %627 = vmatpush.bf16.msra.mxu0 %v618
      %628 = vmatmul.bf16.gmra.mxu0 %v615
      %v629 = vpop.f32.mrf.mxu0
      %v630 = vadd.f32 0.0, %v629
      %v631 = vpop.f32.mrf.mxu0
      %632 = vdwg.mxu0
      %v633 = vmul.f32 %v630, 0.35355338
      %v634 = vsel %vm535, %v633, -1e+09
      %v635 = vsel %vm513, %v634, -inf
      %636 = vmax.xlane.f32.xlu0 %v635
      %v637 = vpop.xlane.xlu0 %636
      %v638 = vsub.f32 %v634, %v637
      %v639 = vmul.f32 %v638, 1.442695
      %v640 = vpow.pop %v639
      %v641 = vsel %vm513, %v640, 0.0
      %642 = vadd.xlane.f32.xlu0 %v641
      %v643 = vpop.xlane.xlu0 %642
      %v644 = vrcp.pop %v643
      %v645 = vmul.f32 %v640, %v644
      %v646 = vpack.c.bf16 %v645, %v645
      %647 = vrot.lane.b32.xlu0 %v549, 88
      %v648 = vpop.permute.xlu0 %647
      %v650 = vsel %vm513, %v646, 0
      %v653 = vsel %vm517, %v648, 0
      %655 = vmatpush.bf16.msra.mxu0 0
      %656 = vmatpush.bf16.msra.mxu0 0
      %657 = vmatpush.bf16.msra.mxu0 0
      %658 = vmatpush.bf16.msra.mxu0 0
      %659 = vmatpush.bf16.msra.mxu0 0
      %660 = vmatpush.bf16.msra.mxu0 0
      %661 = vmatpush.bf16.msra.mxu0 0
      %662 = vmatpush.bf16.msra.mxu0 %v653
      %663 = vmatmul.bf16.gmra.mxu0 %v650
      %v664 = vpop.f32.mrf.mxu0
      %v665 = vadd.f32 0.0, %v664
      %v666 = vpop.f32.mrf.mxu0
      %667 = vdwg.mxu0
      %v668 = vpack.c.bf16 %v665, %v665
      %v669 = vpack.c.bf16 %v476, %v476
      %v671 = vsel %vm513, %v668, 0
      %v674 = vsel %vm517, %v669, 0
      %676 = vmatpush.bf16.msra.mxu0 0
      %677 = vmatpush.bf16.msra.mxu0 0
      %678 = vmatpush.bf16.msra.mxu0 0
      %679 = vmatpush.bf16.msra.mxu0 0
      %680 = vmatpush.bf16.msra.mxu0 0
      %681 = vmatpush.bf16.msra.mxu0 0
      %682 = vmatpush.bf16.msra.mxu0 0
      %683 = vmatpush.bf16.msra.mxu0 %v674
      %684 = vmatmul.bf16.gmra.mxu0 %v671
      %v685 = vpop.f32.mrf.mxu0
      %v686 = vadd.f32 0.0, %v685
      %v687 = vpop.f32.mrf.mxu0
      %688 = vdwg.mxu0
      %v690 = vsel %vm513, %v572, 0
      %v693 = vsel %vm517, %v573, 0
      %695 = vmatpush.bf16.msra.mxu0 0
      %696 = vmatpush.bf16.msra.mxu0 0
      %697 = vmatpush.bf16.msra.mxu0 0
      %698 = vmatpush.bf16.msra.mxu0 0
      %699 = vmatpush.bf16.msra.mxu0 0
      %700 = vmatpush.bf16.msra.mxu0 0
      %701 = vmatpush.bf16.msra.mxu0 0
      %702 = vmatpush.bf16.msra.mxu0 %v693
      %703 = vmatmul.bf16.gmra.mxu0 %v690
      %v704 = vpop.f32.mrf.mxu0
      %v705 = vadd.f32 %v686, %v704
      %v706 = vpop.f32.mrf.mxu0
      %707 = vdwg.mxu0
      %708 = vrot.lane.b32.xlu0 %v472, 112
      %v709 = vpop.permute.xlu0 %708
      %711 = vxpose.xlu0.b32.start [1/16] %v709, 128
      %712 = vxpose.xlu0.b32.cont [2/16] 0.0, 128
      %713 = vxpose.xlu0.b32.cont [3/16] 0.0, 128
      %714 = vxpose.xlu0.b32.cont [4/16] 0.0, 128
      %715 = vxpose.xlu0.b32.cont [5/16] 0.0, 128
      %716 = vxpose.xlu0.b32.cont [6/16] 0.0, 128
      %717 = vxpose.xlu0.b32.cont [7/16] 0.0, 128
      %718 = vxpose.xlu0.b32.cont [8/16] 0.0, 128
      %719 = vxpose.xlu0.b32.cont [9/16] 0.0, 128
      %720 = vxpose.xlu0.b32.cont [10/16] 0.0, 128
      %721 = vxpose.xlu0.b32.cont [11/16] 0.0, 128
      %722 = vxpose.xlu0.b32.cont [12/16] 0.0, 128
      %723 = vxpose.xlu0.b32.cont [13/16] 0.0, 128
      %724 = vxpose.xlu0.b32.cont [14/16] 0.0, 128
      %725 = vxpose.xlu0.b32.cont [15/16] 0.0, 128
      %726 = vxpose.xlu0.b32.end [16/16] 0.0, 128
      %v727 = vpop.trf.xlu0
      %v728 = vpop.trf.xlu0
      %v729 = vpop.trf.xlu0
      %v730 = vpop.trf.xlu0
      %v731 = vpop.trf.xlu0
      %v732 = vpop.trf.xlu0
      %v733 = vpop.trf.xlu0
      %v734 = vpop.trf.xlu0
      %v735 = vpop.trf.xlu0
      %v736 = vpop.trf.xlu0
      %v737 = vpop.trf.xlu0
      %v738 = vpop.trf.xlu0
      %v739 = vpop.trf.xlu0
      %v740 = vpop.trf.xlu0
      %v741 = vpop.trf.xlu0
      %v742 = vpop.trf.xlu0
      %v743 = vpack.c.bf16 %v727, %v727
      %744 = vrot.lane.b32.xlu0 %v479, 112
      %v745 = vpop.permute.xlu0 %744
      %v747 = vsel %vm513, %v745, 0
      %v750 = vsel %vm517, %v743, 0
      %752 = vmatpush.bf16.msra.mxu0 0
      %753 = vmatpush.bf16.msra.mxu0 0
      %754 = vmatpush.bf16.msra.mxu0 0
      %755 = vmatpush.bf16.msra.mxu0 0
      %756 = vmatpush.bf16.msra.mxu0 0
      %757 = vmatpush.bf16.msra.mxu0 0
      %758 = vmatpush.bf16.msra.mxu0 0
      %759 = vmatpush.bf16.msra.mxu0 %v750
      %760 = vmatmul.bf16.gmra.mxu0 %v747
      %v761 = vpop.f32.mrf.mxu0
      %v762 = vadd.f32 0.0, %v761
      %v763 = vpop.f32.mrf.mxu0
      %764 = vdwg.mxu0
      %v765 = vmul.f32 %v762, 0.35355338
      %v766 = vsel %vm535, %v765, -1e+09
      %v767 = vsel %vm513, %v766, -inf
      %768 = vmax.xlane.f32.xlu0 %v767
      %v769 = vpop.xlane.xlu0 %768
      %v770 = vsub.f32 %v766, %v769
      %v771 = vmul.f32 %v770, 1.442695
      %v772 = vpow.pop %v771
      %v773 = vsel %vm513, %v772, 0.0
      %774 = vadd.xlane.f32.xlu0 %v773
      %v775 = vpop.xlane.xlu0 %774
      %v776 = vrcp.pop %v775
      %v777 = vmul.f32 %v772, %v776
      %v778 = vpack.c.bf16 %v777, %v777
      %779 = vrot.lane.b32.xlu0 %v549, 80
      %v780 = vpop.permute.xlu0 %779
      %v782 = vsel %vm513, %v778, 0
      %v785 = vsel %vm517, %v780, 0
      %787 = vmatpush.bf16.msra.mxu0 0
      %788 = vmatpush.bf16.msra.mxu0 0
      %789 = vmatpush.bf16.msra.mxu0 0
      %790 = vmatpush.bf16.msra.mxu0 0
      %791 = vmatpush.bf16.msra.mxu0 0
      %792 = vmatpush.bf16.msra.mxu0 0
      %793 = vmatpush.bf16.msra.mxu0 0
      %794 = vmatpush.bf16.msra.mxu0 %v785
      %795 = vmatmul.bf16.gmra.mxu0 %v782
      %v796 = vpop.f32.mrf.mxu0
      %v797 = vadd.f32 0.0, %v796
      %v798 = vpop.f32.mrf.mxu0
      %799 = vdwg.mxu0
      %v800 = vpack.c.bf16 %v797, %v797
      %v801 = vpack.c.bf16 %v477, %v477
      %v803 = vsel %vm513, %v800, 0
      %v806 = vsel %vm517, %v801, 0
      %808 = vmatpush.bf16.msra.mxu0 0
      %809 = vmatpush.bf16.msra.mxu0 0
      %810 = vmatpush.bf16.msra.mxu0 0
      %811 = vmatpush.bf16.msra.mxu0 0
      %812 = vmatpush.bf16.msra.mxu0 0
      %813 = vmatpush.bf16.msra.mxu0 0
      %814 = vmatpush.bf16.msra.mxu0 0
      %815 = vmatpush.bf16.msra.mxu0 %v806
      %816 = vmatmul.bf16.gmra.mxu0 %v803
      %v817 = vpop.f32.mrf.mxu0
      %v818 = vadd.f32 0.0, %v817
      %v819 = vpop.f32.mrf.mxu0
      %820 = vdwg.mxu0
      %v821 = vadd.f32 %v705, %v818
      %822 = vrot.lane.b32.xlu0 %v472, 104
      %v823 = vpop.permute.xlu0 %822
      %825 = vxpose.xlu0.b32.start [1/16] %v823, 128
      %826 = vxpose.xlu0.b32.cont [2/16] 0.0, 128
      %827 = vxpose.xlu0.b32.cont [3/16] 0.0, 128
      %828 = vxpose.xlu0.b32.cont [4/16] 0.0, 128
      %829 = vxpose.xlu0.b32.cont [5/16] 0.0, 128
      %830 = vxpose.xlu0.b32.cont [6/16] 0.0, 128
      %831 = vxpose.xlu0.b32.cont [7/16] 0.0, 128
      %832 = vxpose.xlu0.b32.cont [8/16] 0.0, 128
      %833 = vxpose.xlu0.b32.cont [9/16] 0.0, 128
      %834 = vxpose.xlu0.b32.cont [10/16] 0.0, 128
      %835 = vxpose.xlu0.b32.cont [11/16] 0.0, 128
      %836 = vxpose.xlu0.b32.cont [12/16] 0.0, 128
      %837 = vxpose.xlu0.b32.cont [13/16] 0.0, 128
      %838 = vxpose.xlu0.b32.cont [14/16] 0.0, 128
      %839 = vxpose.xlu0.b32.cont [15/16] 0.0, 128
      %840 = vxpose.xlu0.b32.end [16/16] 0.0, 128
      %v841 = vpop.trf.xlu0
      %v842 = vpop.trf.xlu0
      %v843 = vpop.trf.xlu0
      %v844 = vpop.trf.xlu0
      %v845 = vpop.trf.xlu0
      %v846 = vpop.trf.xlu0
      %v847 = vpop.trf.xlu0
      %v848 = vpop.trf.xlu0
      %v849 = vpop.trf.xlu0
      %v850 = vpop.trf.xlu0
      %v851 = vpop.trf.xlu0
      %v852 = vpop.trf.xlu0
      %v853 = vpop.trf.xlu0
      %v854 = vpop.trf.xlu0
      %v855 = vpop.trf.xlu0
      %v856 = vpop.trf.xlu0
      %v857 = vpack.c.bf16 %v841, %v841
      %858 = vrot.lane.b32.xlu0 %v479, 104
      %v859 = vpop.permute.xlu0 %858
      %v861 = vsel %vm513, %v859, 0
      %v864 = vsel %vm517, %v857, 0
      %866 = vmatpush.bf16.msra.mxu0 0
      %867 = vmatpush.bf16.msra.mxu0 0
      %868 = vmatpush.bf16.msra.mxu0 0
      %869 = vmatpush.bf16.msra.mxu0 0
      %870 = vmatpush.bf16.msra.mxu0 0
      %871 = vmatpush.bf16.msra.mxu0 0
      %872 = vmatpush.bf16.msra.mxu0 0
      %873 = vmatpush.bf16.msra.mxu0 %v864
      %874 = vmatmul.bf16.gmra.mxu0 %v861
      %v875 = vpop.f32.mrf.mxu0
      %v876 = vadd.f32 0.0, %v875
      %v877 = vpop.f32.mrf.mxu0
      %878 = vdwg.mxu0
      %v879 = vmul.f32 %v876, 0.35355338
      %v880 = vsel %vm535, %v879, -1e+09
      %v881 = vsel %vm513, %v880, -inf
      %882 = vmax.xlane.f32.xlu0 %v881
      %v883 = vpop.xlane.xlu0 %882
      %v884 = vsub.f32 %v880, %v883
      %v885 = vmul.f32 %v884, 1.442695
      %v886 = vpow.pop %v885
      %v887 = vsel %vm513, %v886, 0.0
      %888 = vadd.xlane.f32.xlu0 %v887
      %v889 = vpop.xlane.xlu0 %888
      %v890 = vrcp.pop %v889
      %v891 = vmul.f32 %v886, %v890
      %v892 = vpack.c.bf16 %v891, %v891
      %893 = vrot.lane.b32.xlu0 %v549, 72
      %v894 = vpop.permute.xlu0 %893
      %v896 = vsel %vm513, %v892, 0
      %v899 = vsel %vm517, %v894, 0
      %901 = vmatpush.bf16.msra.mxu0 0
      %902 = vmatpush.bf16.msra.mxu0 0
      %903 = vmatpush.bf16.msra.mxu0 0
      %904 = vmatpush.bf16.msra.mxu0 0
      %905 = vmatpush.bf16.msra.mxu0 0
      %906 = vmatpush.bf16.msra.mxu0 0
      %907 = vmatpush.bf16.msra.mxu0 0
      %908 = vmatpush.bf16.msra.mxu0 %v899
      %909 = vmatmul.bf16.gmra.mxu0 %v896
      %v910 = vpop.f32.mrf.mxu0
      %v911 = vadd.f32 0.0, %v910
      %v912 = vpop.f32.mrf.mxu0
      %913 = vdwg.mxu0
      %v914 = vpack.c.bf16 %v911, %v911
      %v915 = vpack.c.bf16 %v478, %v478
      %v917 = vsel %vm513, %v914, 0
      %v920 = vsel %vm517, %v915, 0
      %922 = vmatpush.bf16.msra.mxu0 0
      %923 = vmatpush.bf16.msra.mxu0 0
      %924 = vmatpush.bf16.msra.mxu0 0
      %925 = vmatpush.bf16.msra.mxu0 0
      %926 = vmatpush.bf16.msra.mxu0 0
      %927 = vmatpush.bf16.msra.mxu0 0
      %928 = vmatpush.bf16.msra.mxu0 0
      %929 = vmatpush.bf16.msra.mxu0 %v920
      %930 = vmatmul.bf16.gmra.mxu0 %v917
      %v931 = vpop.f32.mrf.mxu0
      %v932 = vadd.f32 0.0, %v931
      %v933 = vpop.f32.mrf.mxu0
      %934 = vdwg.mxu0
      %v935 = vadd.f32 %v821, %v932
      %v936 = vld [vmem:[%s8] sm:$0x1]
      %v938 = vperm.slane %v936, 0
      %v940 = vadd.f32 %v935, %v938
      %v941 = vadd.f32 %v940, %v417
      %v942 = vsel %vm431, %v941, 0.0
      %943 = vadd.xlane.f32.xlu0 %v942
      %v944 = vpop.xlane.xlu0 %943
      %v945 = vrcp.pop 32.0
      %v946 = vmul.f32 32.0, %v945
      %v947 = vsub.f32 1.0, %v946
      %v948 = vmul.f32 %v945, %v947
      %v949 = vadd.f32 %v945, %v948
      %vm950 = vweird.f32 %v945
      %v951 = vsel %vm950, %v945, %v949
      %v952 = vmul.f32 %v944, %v951
      %v953 = vsub.f32 %v941, %v952
      %v954 = vmul.f32 %v953, %v953
      %v955 = vsel %vm431, %v954, 0.0
      %956 = vadd.xlane.f32.xlu0 %v955
      %v957 = vpop.xlane.xlu0 %956
      %v958 = vmul.f32 %v957, %v951
      %v959 = vadd.f32 %v958, 1e-05
      %v960 = vrsqrt.pop %v959
      %v961 = vmul.f32 %v960, %v959
      %v962 = vmul.f32 %v961, %v960
      %v963 = vmul.f32 0.5, %v962
      %v964 = vsub.f32 1.5, %v963
      %v965 = vmul.f32 %v960, %v964
      %vm966 = vweird.f32 %v959
      %vm967 = vweird.f32 %v960
      %vm968 = vmor %vm966, %vm967
      %v969 = vsel %vm968, %v960, %v965
      %v970 = vmul.f32 %v953, %v969
      %v971 = vld [vmem:[%s9] sm:$0x1]
      %v973 = vperm.slane %v971, 0
      %v975 = vmul.f32 %v970, %v973
      %v976 = vld [vmem:[%s10] sm:$0x1]
      %v978 = vperm.slane %v976, 0
      %v980 = vadd.f32 %v975, %v978
      %981 = vst.msk [vmem:[%s415] sm:$0xff] %vm431, %v980
      %p982 = scmp.lt.s32.totalorder %s22, 1
      %s983 = scalar_select %p982, %s22, 1
      %s984 = smul.addr %s983, 8
      %s985 = scalar_lea.vmem %s11, %s984
      // Predicated region
      $region65: #{_lambda_.15} parent=63 // pred_check
        %p986 = pneg %p286
      $region66: #{_lambda_.15} parent=63 // pred_check_branch
        %988 = sbr.rel (%p986) target = $region68
      $region67: #{_lambda_.15} parent=63 // pred_region
        _
      $region68: #{_lambda_.15} parent=63 // pred_fallthru
        _
    $region64: #{_lambda_.15} parent=5 // pred_fallthru
      _
    %p989 = scmp.le.s32.totalorder 2, %s17
    // Predicated region
    $region69: #{_lambda_.15} parent=5 // pred_check
      %p990 = pneg %p989
    $region70: #{_lambda_.15} parent=5 // pred_check_branch
      %992 = sbr.rel (%p990) target = $region72
    $region71: #{_lambda_.15} parent=5 // pred_region
      %s993 = ssub.s32 %s17, 2
      // Predicated region
      $region73: #{_lambda_.15} parent=71 // pred_check
        %p994 = pneg %p292
      $region74: #{_lambda_.15} parent=71 // pred_check_branch
        %996 = sbr.rel (%p994) target = $region76
      $region75: #{_lambda_.15} parent=71 // pred_region
        %p997 = scmp.lt.s32.totalorder %s23, 1
        %s998 = scalar_select %p997, %s23, 1
        %s999 = smul.addr %s998, 8
        %s1000 = scalar_lea.vmem %s11, %s999
      $region76: #{_lambda_.15} parent=71 // pred_fallthru
        _
    $region72: #{_lambda_.15} parent=5 // pred_fallthru
      _
  $region6: #{_lambda_.15} parent=0 // loop_footer
    %s21 = sadd.s32 1, %s17
  $region7: #{_lambda_.15} parent=0 // loop_footer_branch
    %16 = sbr.rel target = $region3
  $region8: #{_lambda_.15} parent=0 // loop_exit
    _

</llo_original>
